<compile_context>
chip_gen: v7x
topology: tpu7x:2x2x1
jax: 0.10.0
libtpu: 0.0.40
codegen_flags: <defaults>
</compile_context>

<pallas_src>
import jax
import jax.numpy as jnp
from jax.experimental import pallas as pl
from jax.experimental.pallas import tpu as pltpu


# ---------------------------------------------------------------------------
# Pallas kernel: fused 2-layer GCN forward, Bt graphs per grid step
# ---------------------------------------------------------------------------
def gcn_encoder_kernel(a_ref, x_ref, w1_ref, b1_ref, w2_ref, b2_ref, o_ref):
    bt, n_p, _ = a_ref.shape                  # (Bt, N_p, N_p) bf16
    c_hid_p = w1_ref.shape[1]
    c_out_p = w2_ref.shape[1]

    # Layer-1 feature transform fused across the Bt graphs in this block:
    # (Bt*N_p, C_in_p) @ (C_in_p, C_hid_p), bf16 MXU inputs, f32 accumulate.
    xw1 = jnp.dot(x_ref[...], w1_ref[...], preferred_element_type=jnp.float32)
    xw1 = xw1.astype(jnp.bfloat16).reshape(bt, n_p, c_hid_p)

    # Per-graph aggregation: H = relu(A @ (X W1) + b1)   (batched matmul)
    h1 = jnp.einsum('gnm,gmh->gnh', a_ref[...], xw1,
                    preferred_element_type=jnp.float32)
    h1 = jnp.maximum(h1.reshape(bt * n_p, c_hid_p) + b1_ref[...], 0.0)

    # Layer-2 feature transform fused across the Bt graphs.
    hw2 = jnp.dot(h1.astype(jnp.bfloat16), w2_ref[...],
                  preferred_element_type=jnp.float32)
    hw2 = hw2.astype(jnp.bfloat16).reshape(bt, n_p, c_out_p)

    # Per-graph aggregation: out = A @ (H W2) + b2, stored as bf16.
    out = jnp.einsum('gnm,gmo->gno', a_ref[...], hw2,
                     preferred_element_type=jnp.float32)
    out = out.reshape(bt * n_p, c_out_p) + b2_ref[...]
    o_ref[...] = out.astype(o_ref.dtype)


def _round_up(v, m):
    return ((v + m - 1) // m) * m


def _pad_to(arr, shape):
    pads = [(0, s - d) for d, s in zip(arr.shape, shape)]
    return jnp.pad(arr, pads)


def _pick_graphs_per_step(bsz, min_steps=2, max_bt=8):
    """Largest divisor of bsz that still leaves >= min_steps grid steps
    (keeps both v7x TensorCores busy) and caps the A block VMEM footprint."""
    if bsz <= min_steps:
        return 1
    best = 1
    for bt in range(1, min(max_bt, bsz // min_steps) + 1):
        if bsz % bt == 0:
            best = bt
    return best


def gcn_encoder_pallas(a_norm, x, w1, b1, w2, b2):
    """a_norm: (B, N, N), x: (B, N, C_in). Returns (B, N, C_out) float32."""
    bsz, n, c_in = x.shape
    c_hid = w1.shape[1]
    c_out = w2.shape[1]

    # Pad N and all channel dims to 128 lanes: lane-dense loads/stores and
    # full 128-deep MXU contractions.  Padding is exact (zero rows/cols).
    n_p = _round_up(n, 128)
    c_in_p = _round_up(c_in, 128)
    c_hid_p = _round_up(c_hid, 128)
    c_out_p = _round_up(c_out, 128)

    bt = _pick_graphs_per_step(bsz)
    n_steps = bsz // bt

    a_p = _pad_to(a_norm, (bsz, n_p, n_p)).astype(jnp.bfloat16)
    # X is flattened to (B*N_p, C_in_p) so each step's feature transform is a
    # single (Bt*N_p)-row matmul.
    x_p = _pad_to(x, (bsz, n_p, c_in_p)).astype(jnp.bfloat16)
    x_flat = x_p.reshape(bsz * n_p, c_in_p)
    w1_p = _pad_to(w1, (c_in_p, c_hid_p)).astype(jnp.bfloat16)
    b1_p = _pad_to(b1.reshape(1, c_hid), (1, c_hid_p)).astype(jnp.float32)
    w2_p = _pad_to(w2, (c_hid_p, c_out_p)).astype(jnp.bfloat16)
    b2_p = _pad_to(b2.reshape(1, c_out), (1, c_out_p)).astype(jnp.float32)

    flops = 2 * bsz * (n_p * c_in_p * c_hid_p + n_p * n_p * c_hid_p
                       + n_p * c_hid_p * c_out_p + n_p * n_p * c_out_p)
    bytes_accessed = (bsz * (n_p * n_p * 2 + n_p * c_in_p * 2 + n_p * c_out_p * 2)
                      + (c_in_p * c_hid_p + c_hid_p * c_out_p) * 2
                      + (c_hid_p + c_out_p) * 4)

    out_flat = pl.pallas_call(
        gcn_encoder_kernel,
        out_shape=jax.ShapeDtypeStruct((bsz * n_p, c_out_p), jnp.bfloat16),
        grid=(n_steps,),
        in_specs=[
            pl.BlockSpec((bt, n_p, n_p), lambda s: (s, 0, 0)),
            pl.BlockSpec((bt * n_p, c_in_p), lambda s: (s, 0)),
            pl.BlockSpec((c_in_p, c_hid_p), lambda s: (0, 0)),
            pl.BlockSpec((1, c_hid_p), lambda s: (0, 0)),
            pl.BlockSpec((c_hid_p, c_out_p), lambda s: (0, 0)),
            pl.BlockSpec((1, c_out_p), lambda s: (0, 0)),
        ],
        out_specs=pl.BlockSpec((bt * n_p, c_out_p), lambda s: (s, 0)),
        compiler_params=pltpu.CompilerParams(
            dimension_semantics=("parallel",),
        ),
        cost_estimate=pl.CostEstimate(
            flops=int(flops), transcendentals=0,
            bytes_accessed=int(bytes_accessed)),
    )(a_p, x_flat, w1_p, b1_p, w2_p, b2_p)

    # TODO(synk): for N in the thousands, switch to a row/column-tiled A path
    # (grid (B, N/TM, N/TK), reduction axis innermost + "arbitrary", f32 VMEM
    # accumulator with pl.when init/finalize, per-generation TM/TK sized to
    # ~32 MiB on v7x / larger on v5e-v6e, explicit vmem_limit_bytes) instead
    # of one dense (N_p, N_p) VMEM block per graph.
    out_p = out_flat.reshape(bsz, n_p, c_out_p)
    return out_p[:, :n, :c_out].astype(jnp.float32)


# ---------------------------------------------------------------------------
# Glue (plain JAX): knn graph + GCN normalization + parameter init
# ---------------------------------------------------------------------------
def knn_edge_index(pos, k=2):
    """torch_geometric.nn.knn_graph(pos, k, loop=False, flow='source_to_target')."""
    n = pos.shape[0]
    d2 = jnp.sum((pos[:, None, :] - pos[None, :, :]) ** 2, axis=-1)
    d2 = d2 + jnp.eye(n, dtype=d2.dtype) * 1e10  # exclude self (loop=False)
    nbrs = jnp.argsort(d2, axis=-1)[:, :k]       # (N, k) nearest neighbors
    sources = nbrs.reshape(-1)                   # neighbors are message sources
    targets = jnp.repeat(jnp.arange(n), k)       # node i is the target
    return jnp.stack([sources, targets]).astype(jnp.int32)


def gcn_norm_dense(edge_index, n):
    """Dense D^-1/2 (A + I) D^-1/2 matching PyG GCNConv gcn_norm defaults."""
    src, dst = edge_index
    a = jnp.zeros((n, n), jnp.float32).at[dst, src].add(1.0)
    a = a + jnp.eye(n, dtype=jnp.float32)        # add_self_loops=True
    deg = a.sum(axis=1)                          # in-degree incl. self loop
    dinv = jnp.where(deg > 0, 1.0 / jnp.sqrt(deg), 0.0)
    return dinv[:, None] * a * dinv[None, :]


def init_params(key, in_channels, out_channels):
    """Deterministic glorot-uniform weights / zero biases for both GCNConv layers."""
    hid = 2 * out_channels
    k1, k2 = jax.random.split(key)

    def glorot(k, fan_in, fan_out):
        lim = jnp.sqrt(6.0 / (fan_in + fan_out))
        return jax.random.uniform(k, (fan_in, fan_out), jnp.float32, -lim, lim)

    w1 = glorot(k1, in_channels, hid)
    b1 = jnp.zeros((hid,), jnp.float32)
    w2 = glorot(k2, hid, out_channels)
    b2 = jnp.zeros((out_channels,), jnp.float32)
    return w1, b1, w2, b2


def gcn_encoder_reference_f32(a, x, w1, b1, w2, b2):
    h = jnp.maximum(
        jnp.einsum('bnm,bmh->bnh', a, jnp.einsum('bnc,ch->bnh', x, w1))
        + b1[None, None, :], 0.0)
    return (jnp.einsum('bnm,bmo->bno', a, jnp.einsum('bnh,ho->bno', h, w2))
            + b2[None, None, :])


def gcn_encoder_reference_bf16(a, x, w1, b1, w2, b2):
    """Precision-matched reference (bf16 MXU inputs, f32 accumulation, bf16 store)."""
    bf, f32 = jnp.bfloat16, jnp.float32
    xw1 = jnp.einsum('bnc,ch->bnh', x.astype(bf), w1.astype(bf),
                     preferred_element_type=f32)
    h1 = jnp.einsum('bnm,bmh->bnh', a.astype(bf), xw1.astype(bf),
                    preferred_element_type=f32) + b1[None, None, :]
    h1 = jnp.maximum(h1, 0.0)
    hw2 = jnp.einsum('bnh,ho->bno', h1.astype(bf), w2.astype(bf),
                     preferred_element_type=f32)
    out = jnp.einsum('bnm,bmo->bno', a.astype(bf), hw2.astype(bf),
                     preferred_element_type=f32) + b2[None, None, :]
    return out.astype(bf).astype(f32)


# ---------------------------------------------------------------------------
if __name__ == "__main__":
    B = 8             # batch of independent graphs (Bt=4 per step -> 2 grid steps)
    N = 64            # nodes per graph (rows of the SCG expression matrix)
    IN_CHANNELS = 32  # genes / features per node
    OUT_CHANNELS = 16 # latent dim; hidden = 2 * OUT_CHANNELS = 32

    key = jax.random.PRNGKey(0)
    kx, kp = jax.random.split(key)

    # node features double as positions for knn_graph (as in the original script)
    x = jax.random.normal(kx, (B, N, IN_CHANNELS), jnp.float32)
    a_norm = jax.vmap(lambda p: gcn_norm_dense(knn_edge_index(p, k=2), N))(x)

    w1, b1, w2, b2 = init_params(kp, IN_CHANNELS, OUT_CHANNELS)

    out = gcn_encoder_pallas(a_norm, x, w1, b1, w2, b2)
    out = jax.block_until_ready(out)

    ref_bf16 = gcn_encoder_reference_bf16(a_norm, x, w1, b1, w2, b2)
    ref_f32 = gcn_encoder_reference_f32(a_norm, x, w1, b1, w2, b2)

    assert out.shape == (B, N, OUT_CHANNELS)
    assert jnp.allclose(out, ref_bf16, atol=1e-2, rtol=1e-2), \
        "mismatch vs precision-matched (bf16) JAX reference"
    assert jnp.allclose(out, ref_f32, atol=1e-1, rtol=1e-1), \
        "mismatch vs f32 JAX reference beyond bf16 tolerance"

    print("KERNEL_OK")
</pallas_src>

<mosaic_0001>
module attributes {stable_mosaic.version = 11 : i64} {
  func.func @gcn_encoder_kernel(%arg0: i32, %arg1: memref<4x128x128xbf16, #tpu.memory_space<vmem>>, %arg2: memref<512x128xbf16, #tpu.memory_space<vmem>>, %arg3: memref<128x128xbf16, #tpu.memory_space<vmem>>, %arg4: memref<1x128xf32, #tpu.memory_space<vmem>>, %arg5: memref<128x128xbf16, #tpu.memory_space<vmem>>, %arg6: memref<1x128xf32, #tpu.memory_space<vmem>>, %arg7: memref<512x128xbf16, #tpu.memory_space<vmem>>) attributes {dimension_semantics = [#tpu.dimension_semantics<parallel>], iteration_bounds = array<i64: 2>, scalar_prefetch = 0 : i64, scratch_operands = 0 : i64, tpu.core_type = #tpu.core_type<tc>, window_params = [{transform_indices = @transform_0, window_bounds = array<i64: 4, 128, 128>}, {transform_indices = @transform_1, window_bounds = array<i64: 512, 128>}, {pipeline_mode = #tpu.pipeline_mode<synchronous>, transform_indices = @transform_2, window_bounds = array<i64: 128, 128>}, {pipeline_mode = #tpu.pipeline_mode<synchronous>, transform_indices = @transform_3, window_bounds = array<i64: 1, 128>}, {pipeline_mode = #tpu.pipeline_mode<synchronous>, transform_indices = @transform_4, window_bounds = array<i64: 128, 128>}, {pipeline_mode = #tpu.pipeline_mode<synchronous>, transform_indices = @transform_5, window_bounds = array<i64: 1, 128>}, {transform_indices = @transform_6, window_bounds = array<i64: 512, 128>}]} {
    %c0 = arith.constant 0 : index
    %c0_0 = arith.constant 0 : index
    %0 = vector.load %arg2[%c0, %c0_0] : memref<512x128xbf16, #tpu.memory_space<vmem>>, vector<512x128xbf16>
    %c0_1 = arith.constant 0 : index
    %c0_2 = arith.constant 0 : index
    %1 = vector.load %arg3[%c0_1, %c0_2] : memref<128x128xbf16, #tpu.memory_space<vmem>>, vector<128x128xbf16>
    %cst = arith.constant dense<0.000000e+00> : vector<512x128xf32>
    %2 = tpu.matmul %0, %1, %cst {dimension_numbers = #tpu.dot_dimension_numbers<[1], [0], [0], [1], [0, 0, 1, 1], [], []>} : vector<512x128xbf16>, vector<128x128xbf16>, vector<512x128xf32> -> vector<512x128xf32>
    %3 = arith.truncf %2 : vector<512x128xf32> to vector<512x128xbf16>
    %4 = vector.shape_cast %3 : vector<512x128xbf16> to vector<4x128x128xbf16>
    %c0_3 = arith.constant 0 : index
    %c0_4 = arith.constant 0 : index
    %c0_5 = arith.constant 0 : index
    %5 = vector.load %arg1[%c0_3, %c0_4, %c0_5] : memref<4x128x128xbf16, #tpu.memory_space<vmem>>, vector<4x128x128xbf16>
    "tpu.trace_start"() <{level = 10 : i32, message = "gnm,gmh->gnh"}> : () -> ()
    %cst_6 = arith.constant dense<0.000000e+00> : vector<4x128x128xf32>
    %6 = tpu.matmul %5, %4, %cst_6 {dimension_numbers = #tpu.dot_dimension_numbers<[2], [1], [1], [2], [0, 0, 0, 1, 1, 2], [0], [0]>} : vector<4x128x128xbf16>, vector<4x128x128xbf16>, vector<4x128x128xf32> -> vector<4x128x128xf32>
    "tpu.trace_stop"() : () -> ()
    %7 = vector.shape_cast %6 : vector<4x128x128xf32> to vector<512x128xf32>
    %c0_7 = arith.constant 0 : index
    %c0_8 = arith.constant 0 : index
    %8 = vector.load %arg4[%c0_7, %c0_8] : memref<1x128xf32, #tpu.memory_space<vmem>>, vector<1x128xf32>
    %9 = vector.broadcast %8 : vector<1x128xf32> to vector<512x128xf32>
    %10 = arith.addf %7, %9 : vector<512x128xf32>
    %cst_9 = arith.constant 0.000000e+00 : f32
    %11 = vector.broadcast %cst_9 : f32 to vector<512x128xf32>
    %12 = arith.maximumf %10, %11 : vector<512x128xf32>
    %13 = arith.truncf %12 : vector<512x128xf32> to vector<512x128xbf16>
    %c0_10 = arith.constant 0 : index
    %c0_11 = arith.constant 0 : index
    %14 = vector.load %arg5[%c0_10, %c0_11] : memref<128x128xbf16, #tpu.memory_space<vmem>>, vector<128x128xbf16>
    %cst_12 = arith.constant dense<0.000000e+00> : vector<512x128xf32>
    %15 = tpu.matmul %13, %14, %cst_12 {dimension_numbers = #tpu.dot_dimension_numbers<[1], [0], [0], [1], [0, 0, 1, 1], [], []>} : vector<512x128xbf16>, vector<128x128xbf16>, vector<512x128xf32> -> vector<512x128xf32>
    %16 = arith.truncf %15 : vector<512x128xf32> to vector<512x128xbf16>
    %17 = vector.shape_cast %16 : vector<512x128xbf16> to vector<4x128x128xbf16>
    %c0_13 = arith.constant 0 : index
    %c0_14 = arith.constant 0 : index
    %c0_15 = arith.constant 0 : index
    %18 = vector.load %arg1[%c0_13, %c0_14, %c0_15] : memref<4x128x128xbf16, #tpu.memory_space<vmem>>, vector<4x128x128xbf16>
    "tpu.trace_start"() <{level = 10 : i32, message = "gnm,gmo->gno"}> : () -> ()
    %cst_16 = arith.constant dense<0.000000e+00> : vector<4x128x128xf32>
    %19 = tpu.matmul %18, %17, %cst_16 {dimension_numbers = #tpu.dot_dimension_numbers<[2], [1], [1], [2], [0, 0, 0, 1, 1, 2], [0], [0]>} : vector<4x128x128xbf16>, vector<4x128x128xbf16>, vector<4x128x128xf32> -> vector<4x128x128xf32>
    "tpu.trace_stop"() : () -> ()
    %20 = vector.shape_cast %19 : vector<4x128x128xf32> to vector<512x128xf32>
    %c0_17 = arith.constant 0 : index
    %c0_18 = arith.constant 0 : index
    %21 = vector.load %arg6[%c0_17, %c0_18] : memref<1x128xf32, #tpu.memory_space<vmem>>, vector<1x128xf32>
    %22 = vector.broadcast %21 : vector<1x128xf32> to vector<512x128xf32>
    %23 = arith.addf %20, %22 : vector<512x128xf32>
    %24 = arith.truncf %23 : vector<512x128xf32> to vector<512x128xbf16>
    %c0_19 = arith.constant 0 : index
    %c0_20 = arith.constant 0 : index
    %25 = vector.load %arg7[%c0_19, %c0_20] : memref<512x128xbf16, #tpu.memory_space<vmem>>, vector<512x128xbf16>
    tpu.vector_store %arg7[%c0_19, %c0_20], %24 {strides = array<i32>} : memref<512x128xbf16, #tpu.memory_space<vmem>>, vector<512x128xbf16>,
    return
  }
  func.func @transform_0(%arg0: i32) -> (i32, i32, i32) {
    %c0_i32 = arith.constant 0 : i32
    %c0_i32_0 = arith.constant 0 : i32
    %c0_i32_1 = arith.constant 0 : i32
    return %arg0, %c0_i32, %c0_i32_0 : i32, i32, i32
  }
  func.func @transform_1(%arg0: i32) -> (i32, i32) {
    %c0_i32 = arith.constant 0 : i32
    %c0_i32_0 = arith.constant 0 : i32
    return %arg0, %c0_i32 : i32, i32
  }
  func.func @transform_2(%arg0: i32) -> (i32, i32) {
    %c0_i32 = arith.constant 0 : i32
    %c0_i32_0 = arith.constant 0 : i32
    %c0_i32_1 = arith.constant 0 : i32
    return %c0_i32, %c0_i32_0 : i32, i32
  }
  func.func @transform_3(%arg0: i32) -> (i32, i32) {
    %c0_i32 = arith.constant 0 : i32
    %c0_i32_0 = arith.constant 0 : i32
    %c0_i32_1 = arith.constant 0 : i32
    return %c0_i32, %c0_i32_0 : i32, i32
  }
  func.func @transform_4(%arg0: i32) -> (i32, i32) {
    %c0_i32 = arith.constant 0 : i32
    %c0_i32_0 = arith.constant 0 : i32
    %c0_i32_1 = arith.constant 0 : i32
    return %c0_i32, %c0_i32_0 : i32, i32
  }
  func.func @transform_5(%arg0: i32) -> (i32, i32) {
    %c0_i32 = arith.constant 0 : i32
    %c0_i32_0 = arith.constant 0 : i32
    %c0_i32_1 = arith.constant 0 : i32
    return %c0_i32, %c0_i32_0 : i32, i32
  }
  func.func @transform_6(%arg0: i32) -> (i32, i32) {
    %c0_i32 = arith.constant 0 : i32
    %c0_i32_0 = arith.constant 0 : i32
    return %arg0, %c0_i32 : i32, i32
  }
}

</mosaic_0001>

<llo_original>
// kernel: tpu_custom_call.1
$region0: #{tpu_custom_call.1}
  #allocation0 [shape = 'u32[]', space=smem, size = 0x4, offset = 0x4, fixed_abs, tag = 'smem constant byte address 0x4 - core index']
  #allocation1 [shape = 'u32[144,128]{1,0:T(1,128)}', space=vmem, size = 0x12000, scoped, tag = 'internal scratch']
  %s0 = inlined_call_operand.hbm [shape: bf16[8,128,128], index: 0, kind: input, shape index: {}]
  %s1 = inlined_call_operand.hbm [shape: bf16[1024,128], index: 1, kind: input, shape index: {}]
  %s2 = inlined_call_operand.hbm [shape: bf16[128,128], index: 2, kind: input, shape index: {}]
  %s3 = inlined_call_operand.vmem [shape: f32[1,128], index: 3, kind: input, shape index: {}]
  %s4 = inlined_call_operand.hbm [shape: bf16[128,128], index: 4, kind: input, shape index: {}]
  %s5 = inlined_call_operand.vmem [shape: f32[1,128], index: 5, kind: input, shape index: {}]
  %s6 = inlined_call_operand.hbm [shape: bf16[1024,128], index: 6, kind: output, shape index: {}]
  %s7 = sld [smem:[#allocation0]]
  $region73: #{tpu_custom_call.1} parent=0
    _
  %s9 = ssub.s32 1, %s7
  %s10 = scalar_select 0, %s9, %s7
  $region1: #{tpu_custom_call.1} parent=0
    #allocation2 [shape = 'u8[262144]{0}', space=vmem, size = 0x40000, scoped, tag = 'input window, operand 0']
    #allocation3 [shape = 's32[2]{0}', space=sflag, size = 0x8, scoped, tag = 'scoped memory for tpu_custom_call.1']
    #allocation4 [shape = 's32[2]{0}', space=sflag, size = 0x8, scoped, tag = 'scoped memory for tpu_custom_call.1']
    #allocation5 [shape = 'u8[262144]{0}', space=vmem, size = 0x40000, scoped, tag = 'input window, operand 1']
    #allocation6 [shape = 's32[2]{0}', space=sflag, size = 0x8, scoped, tag = 'scoped memory for tpu_custom_call.1']
    #allocation7 [shape = 'u8[32768]{0}', space=vmem, size = 0x8000, scoped, tag = 'input window, operand 2, single buffered']
    #allocation8 [shape = 'u8[32768]{0}', space=vmem, size = 0x8000, scoped, tag = 'input window, operand 4, single buffered']
    #allocation9 [shape = 's32[1]{0}', space=sflag, size = 0x4, scoped, tag = 'scoped memory for tpu_custom_call.1']
    #allocation10 [shape = 'u8[262144]{0}', space=vmem, size = 0x40000, scoped, tag = 'output window, operand 0']
    %11 = vsyncpa [#allocation3], 0
    %s12 = scalar_lea.sflag [#allocation3], 1
    %13 = vsyncpa %s12, 0
    %14 = vsyncpa [#allocation6], 0
    %s15 = scalar_lea.sflag [#allocation6], 1
    %16 = vsyncpa %s15, 0
    %17 = vsyncpa [#allocation9], 0
    %18 = vsyncpa [#allocation4], 0
    %s19 = scalar_lea.sflag [#allocation4], 1
    %20 = vsyncpa %s19, 0
    loop: start=0, step=1, limit=4
    $region2: #{tpu_custom_call.1} parent=1 // loop_pre_header
      _
    $region3: #{tpu_custom_call.1} parent=1 // loop_header
      %s22 = sphi 0, %s26
      %p23 = scmp.ge.s32.totalorder %s22, 4
      %s32 = sphi 0, %s34
      %s35 = sphi 0, %s32
      %s36 = sphi 0, %s35
      %s52 = sphi 0, %s36
      %s58 = sphi 0, %s60
      %s61 = sphi 0, %s58
      %s62 = sphi 0, %s61
      %s78 = sphi 0, %s62
      %s82 = sphi 0, %s82
      %s84 = sphi 0, %s82
      %s85 = sphi 0, %s84
      %s99 = sphi 0, %s85
      %s103 = sphi 0, %s103
      %s105 = sphi 0, %s103
      %s106 = sphi 0, %s105
      %s120 = sphi 0, %s106
      %s124 = sphi 0, %s124
      %s126 = sphi 0, %s124
      %s127 = sphi 0, %s126
      %s141 = sphi 0, %s127
      %s145 = sphi 0, %s145
      %s147 = sphi 0, %s145
      %s148 = sphi 0, %s147
      %s162 = sphi 0, %s148
      %s168 = sphi 0, %s170
      %s171 = sphi 0, %s168
      %s172 = sphi 0, %s171
      %s188 = sphi 0, %s172
    $region4: #{tpu_custom_call.1} parent=1 // loop_header_branch
      %25 = sbr.rel (%p23) target = $region8
    $region5: #{tpu_custom_call.1} parent=1 // loop_body
      %s27 = ssub.s32 %s22, 1
      %s28 = ssub.s32 %s22, 2
      %s29 = sadd.s32 %s22, 1
      %s30 = ssub.s32 %s22, %s29
      %p31 = scmp.eq.s32.totalorder %s30, 0
      %s33 = sadd.s32 %s32, 1
      %s34 = scalar_select %p31, %s32, %s33
      %p37 = pneg %p31
      %p38 = scmp.eq.s32.totalorder %s22, 1
      %p39 = por %p37, %p38
      %p40 = scmp.ne.s32.totalorder %s32, %s35
      %p41 = scmp.eq.s32.totalorder %s22, 0
      %p42 = por %p40, %p41
      %p43 = scmp.ne.s32.totalorder %s32, %s35
      %p44 = scmp.eq.s32.totalorder %s27, 1
      %p45 = por %p43, %p44
      %p46 = scmp.ne.s32.totalorder %s35, %s36
      %p47 = scmp.eq.s32.totalorder %s27, 0
      %p48 = por %p46, %p47
      %p49 = scmp.ne.s32.totalorder %s35, %s36
      %p50 = scmp.eq.s32.totalorder %s28, 1
      %p51 = por %p49, %p50
      %p53 = scmp.ne.s32.totalorder %s36, %s52
      %p54 = scmp.eq.s32.totalorder %s28, 0
      %p55 = por %p53, %p54
      %s56 = ssub.s32 %s22, %s29
      %p57 = scmp.eq.s32.totalorder %s56, 0
      %s59 = sadd.s32 %s58, 1
      %s60 = scalar_select %p57, %s58, %s59
      %p63 = pneg %p57
      %p64 = scmp.eq.s32.totalorder %s22, 1
      %p65 = por %p63, %p64
      %p66 = scmp.ne.s32.totalorder %s58, %s61
      %p67 = scmp.eq.s32.totalorder %s22, 0
      %p68 = por %p66, %p67
      %p69 = scmp.ne.s32.totalorder %s58, %s61
      %p70 = scmp.eq.s32.totalorder %s27, 1
      %p71 = por %p69, %p70
      %p72 = scmp.ne.s32.totalorder %s61, %s62
      %p73 = scmp.eq.s32.totalorder %s27, 0
      %p74 = por %p72, %p73
      %p75 = scmp.ne.s32.totalorder %s61, %s62
      %p76 = scmp.eq.s32.totalorder %s28, 1
      %p77 = por %p75, %p76
      %p79 = scmp.ne.s32.totalorder %s62, %s78
      %p80 = scmp.eq.s32.totalorder %s28, 0
      %p81 = por %p79, %p80
      %s83 = sadd.s32 %s82, 1
      %p86 = scmp.eq.s32.totalorder %s22, 1
      %p87 = scmp.ne.s32.totalorder %s82, %s84
      %p88 = scmp.eq.s32.totalorder %s22, 0
      %p89 = por %p87, %p88
      %p90 = scmp.ne.s32.totalorder %s82, %s84
      %p91 = scmp.eq.s32.totalorder %s27, 1
      %p92 = por %p90, %p91
      %p93 = scmp.ne.s32.totalorder %s84, %s85
      %p94 = scmp.eq.s32.totalorder %s27, 0
      %p95 = por %p93, %p94
      %p96 = scmp.ne.s32.totalorder %s84, %s85
      %p97 = scmp.eq.s32.totalorder %s28, 1
      %p98 = por %p96, %p97
      %p100 = scmp.ne.s32.totalorder %s85, %s99
      %p101 = scmp.eq.s32.totalorder %s28, 0
      %p102 = por %p100, %p101
      %s104 = sadd.s32 %s103, 1
      %p107 = scmp.eq.s32.totalorder %s22, 1
      %p108 = scmp.ne.s32.totalorder %s103, %s105
      %p109 = scmp.eq.s32.totalorder %s22, 0
      %p110 = por %p108, %p109
      %p111 = scmp.ne.s32.totalorder %s103, %s105
      %p112 = scmp.eq.s32.totalorder %s27, 1
      %p113 = por %p111, %p112
      %p114 = scmp.ne.s32.totalorder %s105, %s106
      %p115 = scmp.eq.s32.totalorder %s27, 0
      %p116 = por %p114, %p115
      %p117 = scmp.ne.s32.totalorder %s105, %s106
      %p118 = scmp.eq.s32.totalorder %s28, 1
      %p119 = por %p117, %p118
      %p121 = scmp.ne.s32.totalorder %s106, %s120
      %p122 = scmp.eq.s32.totalorder %s28, 0
      %p123 = por %p121, %p122
      %s125 = sadd.s32 %s124, 1
      %p128 = scmp.eq.s32.totalorder %s22, 1
      %p129 = scmp.ne.s32.totalorder %s124, %s126
      %p130 = scmp.eq.s32.totalorder %s22, 0
      %p131 = por %p129, %p130
      %p132 = scmp.ne.s32.totalorder %s124, %s126
      %p133 = scmp.eq.s32.totalorder %s27, 1
      %p134 = por %p132, %p133
      %p135 = scmp.ne.s32.totalorder %s126, %s127
      %p136 = scmp.eq.s32.totalorder %s27, 0
      %p137 = por %p135, %p136
      %p138 = scmp.ne.s32.totalorder %s126, %s127
      %p139 = scmp.eq.s32.totalorder %s28, 1
      %p140 = por %p138, %p139
      %p142 = scmp.ne.s32.totalorder %s127, %s141
      %p143 = scmp.eq.s32.totalorder %s28, 0
      %p144 = por %p142, %p143
      %s146 = sadd.s32 %s145, 1
      %p149 = scmp.eq.s32.totalorder %s22, 1
      %p150 = scmp.ne.s32.totalorder %s145, %s147
      %p151 = scmp.eq.s32.totalorder %s22, 0
      %p152 = por %p150, %p151
      %p153 = scmp.ne.s32.totalorder %s145, %s147
      %p154 = scmp.eq.s32.totalorder %s27, 1
      %p155 = por %p153, %p154
      %p156 = scmp.ne.s32.totalorder %s147, %s148
      %p157 = scmp.eq.s32.totalorder %s27, 0
      %p158 = por %p156, %p157
      %p159 = scmp.ne.s32.totalorder %s147, %s148
      %p160 = scmp.eq.s32.totalorder %s28, 1
      %p161 = por %p159, %p160
      %p163 = scmp.ne.s32.totalorder %s148, %s162
      %p164 = scmp.eq.s32.totalorder %s28, 0
      %p165 = por %p163, %p164
      %s166 = ssub.s32 %s22, %s29
      %p167 = scmp.eq.s32.totalorder %s166, 0
      %s169 = sadd.s32 %s168, 1
      %s170 = scalar_select %p167, %s168, %s169
      %p173 = pneg %p167
      %p174 = scmp.eq.s32.totalorder %s22, 1
      %p175 = por %p173, %p174
      %p176 = scmp.ne.s32.totalorder %s168, %s171
      %p177 = scmp.eq.s32.totalorder %s22, 0
      %p178 = por %p176, %p177
      %p179 = scmp.ne.s32.totalorder %s168, %s171
      %p180 = scmp.eq.s32.totalorder %s27, 1
      %p181 = por %p179, %p180
      %p182 = scmp.ne.s32.totalorder %s171, %s172
      %p183 = scmp.eq.s32.totalorder %s27, 0
      %p184 = por %p182, %p183
      %p185 = scmp.ne.s32.totalorder %s171, %s172
      %p186 = scmp.eq.s32.totalorder %s28, 1
      %p187 = por %p185, %p186
      %p189 = scmp.ne.s32.totalorder %s172, %s188
      %p190 = scmp.eq.s32.totalorder %s28, 0
      %p191 = por %p189, %p190
      %p192 = scmp.le.s32.totalorder 1, %s22
      %p193 = scmp.lt.s32.totalorder %s22, 3
      %p194 = pnand %p192, %p193
      %p195 = pneg %p194
      // Predicated region
      $region9: #{tpu_custom_call.1} parent=5 // pred_check
        _
      $region10: #{tpu_custom_call.1} parent=5 // pred_check_branch
        %197 = sbr.rel (%p194) target = $region12
      $region11: #{tpu_custom_call.1} parent=5 // pred_region
        %s198 = ssub.s32 %s22, 1
        // Predicated region
        $region13: #{tpu_custom_call.1} parent=11 // pred_check
          %p199 = pneg %p95
        $region14: #{tpu_custom_call.1} parent=11 // pred_check_branch
          %201 = sbr.rel (%p199) target = $region16
        $region15: #{tpu_custom_call.1} parent=11 // pred_region
          %s203 = ssub.s32 1024, 1024
          %204 = vsyncadd [#allocation6], %s203
          %s205 = sshll.u32 [#allocation7], 4
          %s206 = int_to_ptr.vmem [resolvable:$true] %s205
          %211 = dma.hbm_to_vmem [thread:$0]  %s2, 1024, %s206, [#allocation6], 64, 64, 4
        $region16: #{tpu_custom_call.1} parent=11 // pred_fallthru
          _
        // Predicated region
        $region17: #{tpu_custom_call.1} parent=11 // pred_check
          %p212 = pneg %p116
        $region18: #{tpu_custom_call.1} parent=11 // pred_check_branch
          %214 = sbr.rel (%p212) target = $region20
        $region19: #{tpu_custom_call.1} parent=11 // pred_region
          _
        $region20: #{tpu_custom_call.1} parent=11 // pred_fallthru
          _
        // Predicated region
        $region21: #{tpu_custom_call.1} parent=11 // pred_check
          %p215 = pneg %p137
        $region22: #{tpu_custom_call.1} parent=11 // pred_check_branch
          %217 = sbr.rel (%p215) target = $region24
        $region23: #{tpu_custom_call.1} parent=11 // pred_region
          %s219 = ssub.s32 1024, 1024
          %220 = vsyncadd [#allocation9], %s219
          %s221 = sshll.u32 [#allocation8], 4
          %s222 = int_to_ptr.vmem [resolvable:$true] %s221
          %227 = dma.hbm_to_vmem [thread:$0]  %s4, 1024, %s222, [#allocation9], 64, 64, 4
        $region24: #{tpu_custom_call.1} parent=11 // pred_fallthru
          _
        // Predicated region
        $region25: #{tpu_custom_call.1} parent=11 // pred_check
          %p228 = pneg %p158
        $region26: #{tpu_custom_call.1} parent=11 // pred_check_branch
          %230 = sbr.rel (%p228) target = $region28
        $region27: #{tpu_custom_call.1} parent=11 // pred_region
          _
        $region28: #{tpu_custom_call.1} parent=11 // pred_fallthru
          _
      $region12: #{tpu_custom_call.1} parent=5 // pred_fallthru
        _
      %p231 = scmp.lt.s32.totalorder %s22, 2
      // Predicated region
      $region29: #{tpu_custom_call.1} parent=5 // pred_check
        %p232 = pneg %p231
      $region30: #{tpu_custom_call.1} parent=5 // pred_check_branch
        %234 = sbr.rel (%p232) target = $region32
      $region31: #{tpu_custom_call.1} parent=5 // pred_region
        // Predicated region
        $region33: #{tpu_custom_call.1} parent=31 // pred_check
          %p235 = pneg %p42
        $region34: #{tpu_custom_call.1} parent=31 // pred_check_branch
          %237 = sbr.rel (%p235) target = $region36
        $region35: #{tpu_custom_call.1} parent=31 // pred_region
          %s238 = sand.u32 %s32, 1
          %s239 = scalar_lea.sflag [#allocation3], %s238
          %s240 = sand.u32 %s32, 1
          %s241 = smul.addr %s240, 256
          %s242 = scalar_lea.vmem [#allocation2], %s241
          %s243 = smul.u32 4, %s22
          %s245 = ssub.s32 4096, 4096
          %246 = vsyncadd %s239, %s245
          %s247 = smul.addr %s243, 16
          %s248 = smul.addr %s247, 64
          %s249 = scalar_lea.hbm %s0, %s248
          %s250 = sshll.u32 %s242, 4
          %s251 = int_to_ptr.vmem [resolvable:$true] %s250
          %256 = dma.hbm_to_vmem [thread:$0]  %s249, 4096, %s251, %s239, 64, 64, 4
        $region36: #{tpu_custom_call.1} parent=31 // pred_fallthru
          _
        // Predicated region
        $region37: #{tpu_custom_call.1} parent=31 // pred_check
          %p257 = pneg %p68
        $region38: #{tpu_custom_call.1} parent=31 // pred_check_branch
          %259 = sbr.rel (%p257) target = $region40
        $region39: #{tpu_custom_call.1} parent=31 // pred_region
          %s260 = sand.u32 %s22, 1
          %s261 = scalar_lea.sflag [#allocation6], %s260
          %s262 = sand.u32 %s58, 1
          %s263 = smul.addr %s262, 256
          %s264 = scalar_lea.vmem [#allocation5], %s263
          %s265 = smul.u32 64, %s22
          %s267 = ssub.s32 4096, 4096
          %268 = vsyncadd %s261, %s267
          %s269 = smul.addr %s265, 64
          %s270 = scalar_lea.hbm %s1, %s269
          %s271 = sshll.u32 %s264, 4
          %s272 = int_to_ptr.vmem [resolvable:$true] %s271
          %277 = dma.hbm_to_vmem [thread:$0]  %s270, 4096, %s272, %s261, 64, 64, 4
        $region40: #{tpu_custom_call.1} parent=31 // pred_fallthru
          _
      $region32: #{tpu_custom_call.1} parent=5 // pred_fallthru
        _
      %p278 = scmp.le.s32.totalorder 1, %s22
      %p279 = scmp.lt.s32.totalorder %s22, 3
      %p280 = pnand %p278, %p279
      %p281 = pneg %p280
      // Predicated region
      $region41: #{tpu_custom_call.1} parent=5 // pred_check
        _
      $region42: #{tpu_custom_call.1} parent=5 // pred_check_branch
        %283 = sbr.rel (%p280) target = $region44
      $region43: #{tpu_custom_call.1} parent=5 // pred_region
        %s284 = ssub.s32 %s22, 1
        %s285 = sand.u32 %s35, 1
        %s286 = scalar_lea.sflag [#allocation3], %s285
        %s287 = sand.u32 %s35, 1
        %s288 = smul.addr %s287, 256
        %s289 = scalar_lea.vmem [#allocation2], %s288
        // Predicated region
        $region45: #{tpu_custom_call.1} parent=43 // pred_check
          %p290 = pneg %p48
        $region46: #{tpu_custom_call.1} parent=43 // pred_check_branch
          %292 = sbr.rel (%p290) target = $region48
        $region47: #{tpu_custom_call.1} parent=43 // pred_region
          %293 = dma.done %s286, 4096
        $region48: #{tpu_custom_call.1} parent=43 // pred_fallthru
          _
        %s294 = sand.u32 %s27, 1
        %s295 = scalar_lea.sflag [#allocation6], %s294
        %s296 = sand.u32 %s61, 1
        %s297 = smul.addr %s296, 256
        %s298 = scalar_lea.vmem [#allocation5], %s297
        // Predicated region
        $region49: #{tpu_custom_call.1} parent=43 // pred_check
          %p299 = pneg %p74
        $region50: #{tpu_custom_call.1} parent=43 // pred_check_branch
          %301 = sbr.rel (%p299) target = $region52
        $region51: #{tpu_custom_call.1} parent=43 // pred_region
          %302 = dma.done %s295, 4096
        $region52: #{tpu_custom_call.1} parent=43 // pred_fallthru
          _
        // Predicated region
        $region53: #{tpu_custom_call.1} parent=43 // pred_check
          %p303 = pneg %p95
        $region54: #{tpu_custom_call.1} parent=43 // pred_check_branch
          %305 = sbr.rel (%p303) target = $region56
        $region55: #{tpu_custom_call.1} parent=43 // pred_region
          %306 = dma.done [#allocation6], 1024
        $region56: #{tpu_custom_call.1} parent=43 // pred_fallthru
          _
        // Predicated region
        $region57: #{tpu_custom_call.1} parent=43 // pred_check
          %p307 = pneg %p137
        $region58: #{tpu_custom_call.1} parent=43 // pred_check_branch
          %309 = sbr.rel (%p307) target = $region60
        $region59: #{tpu_custom_call.1} parent=43 // pred_region
          %310 = dma.done [#allocation9], 1024
        $region60: #{tpu_custom_call.1} parent=43 // pred_fallthru
          _
        %s311 = sand.u32 %s35, 1
        %s312 = scalar_lea.sflag [#allocation3], %s311
        %s313 = sand.u32 %s35, 1
        %s314 = smul.addr %s313, 256
        %s315 = scalar_lea.vmem [#allocation2], %s314
        %p316 = pneg %p48
        %p317 = pneg %p45
        %s318 = sand.u32 %s27, 1
        %s319 = scalar_lea.sflag [#allocation6], %s318
        %s320 = sand.u32 %s61, 1
        %s321 = smul.addr %s320, 256
        %s322 = scalar_lea.vmem [#allocation5], %s321
        %p323 = pneg %p74
        %p324 = pneg %p71
        %p325 = pneg %p95
        %p326 = pneg %p92
        %p327 = pneg %p116
        %p328 = pneg %p113
        %p329 = pneg %p137
        %p330 = pneg %p134
        %p331 = pneg %p158
        %p332 = pneg %p155
        %p333 = pneg %p184
        %p334 = pneg %p181
        %s335 = sand.u32 %s171, 1
        %s336 = scalar_lea.sflag [#allocation4], %s335
        %s337 = sand.u32 %s171, 1
        %s338 = smul.addr %s337, 256
        %s339 = scalar_lea.vmem [#allocation10], %s338
        %s340 = smul.u32 4, %s27
        %s341 = smul.u32 64, %s27
        %s342 = smul.u32 64, %s27
        %v344 = vld [vmem:[%s298] sm:$0xf]
        %v345 = vld [vmem:[%s298 + $0x4] sm:$0xf]
        %v346 = vld [vmem:[%s298 + $0x8] sm:$0xf]
        %v347 = vld [vmem:[%s298 + $0xc] sm:$0xf]
        %v348 = vld [vmem:[%s298 + $0x10] sm:$0xf]
        %v349 = vld [vmem:[%s298 + $0x14] sm:$0xf]
        %v350 = vld [vmem:[%s298 + $0x18] sm:$0xf]
        %v351 = vld [vmem:[%s298 + $0x1c] sm:$0xf]
        %v352 = vld [vmem:[%s298 + $0x20] sm:$0xf]
        %v353 = vld [vmem:[%s298 + $0x24] sm:$0xf]
        %v354 = vld [vmem:[%s298 + $0x28] sm:$0xf]
        %v355 = vld [vmem:[%s298 + $0x2c] sm:$0xf]
        %v356 = vld [vmem:[%s298 + $0x30] sm:$0xf]
        %v357 = vld [vmem:[%s298 + $0x34] sm:$0xf]
        %v358 = vld [vmem:[%s298 + $0x38] sm:$0xf]
        %v359 = vld [vmem:[%s298 + $0x3c] sm:$0xf]
        %v360 = vld [vmem:[%s298 + $0x40] sm:$0xf]
        %v361 = vld [vmem:[%s298 + $0x44] sm:$0xf]
        %v362 = vld [vmem:[%s298 + $0x48] sm:$0xf]
        %v363 = vld [vmem:[%s298 + $0x4c] sm:$0xf]
        %v364 = vld [vmem:[%s298 + $0x50] sm:$0xf]
        %v365 = vld [vmem:[%s298 + $0x54] sm:$0xf]
        %v366 = vld [vmem:[%s298 + $0x58] sm:$0xf]
        %v367 = vld [vmem:[%s298 + $0x5c] sm:$0xf]
        %v368 = vld [vmem:[%s298 + $0x60] sm:$0xf]
        %v369 = vld [vmem:[%s298 + $0x64] sm:$0xf]
        %v370 = vld [vmem:[%s298 + $0x68] sm:$0xf]
        %v371 = vld [vmem:[%s298 + $0x6c] sm:$0xf]
        %v372 = vld [vmem:[%s298 + $0x70] sm:$0xf]
        %v373 = vld [vmem:[%s298 + $0x74] sm:$0xf]
        %v374 = vld [vmem:[%s298 + $0x78] sm:$0xf]
        %v375 = vld [vmem:[%s298 + $0x7c] sm:$0xf]
        %v376 = vld [vmem:[%s298 + $0x80] sm:$0xf]
        %v377 = vld [vmem:[%s298 + $0x84] sm:$0xf]
        %v378 = vld [vmem:[%s298 + $0x88] sm:$0xf]
        %v379 = vld [vmem:[%s298 + $0x8c] sm:$0xf]
        %v380 = vld [vmem:[%s298 + $0x90] sm:$0xf]
        %v381 = vld [vmem:[%s298 + $0x94] sm:$0xf]
        %v382 = vld [vmem:[%s298 + $0x98] sm:$0xf]
        %v383 = vld [vmem:[%s298 + $0x9c] sm:$0xf]
        %v384 = vld [vmem:[%s298 + $0xa0] sm:$0xf]
        %v385 = vld [vmem:[%s298 + $0xa4] sm:$0xf]
        %v386 = vld [vmem:[%s298 + $0xa8] sm:$0xf]
        %v387 = vld [vmem:[%s298 + $0xac] sm:$0xf]
        %v388 = vld [vmem:[%s298 + $0xb0] sm:$0xf]
        %v389 = vld [vmem:[%s298 + $0xb4] sm:$0xf]
        %v390 = vld [vmem:[%s298 + $0xb8] sm:$0xf]
        %v391 = vld [vmem:[%s298 + $0xbc] sm:$0xf]
        %v392 = vld [vmem:[%s298 + $0xc0] sm:$0xf]
        %v393 = vld [vmem:[%s298 + $0xc4] sm:$0xf]
        %v394 = vld [vmem:[%s298 + $0xc8] sm:$0xf]
        %v395 = vld [vmem:[%s298 + $0xcc] sm:$0xf]
        %v396 = vld [vmem:[%s298 + $0xd0] sm:$0xf]
        %v397 = vld [vmem:[%s298 + $0xd4] sm:$0xf]
        %v398 = vld [vmem:[%s298 + $0xd8] sm:$0xf]
        %v399 = vld [vmem:[%s298 + $0xdc] sm:$0xf]
        %v400 = vld [vmem:[%s298 + $0xe0] sm:$0xf]
        %v401 = vld [vmem:[%s298 + $0xe4] sm:$0xf]
        %v402 = vld [vmem:[%s298 + $0xe8] sm:$0xf]
        %v403 = vld [vmem:[%s298 + $0xec] sm:$0xf]
        %v404 = vld [vmem:[%s298 + $0xf0] sm:$0xf]
        %v405 = vld [vmem:[%s298 + $0xf4] sm:$0xf]
        %v406 = vld [vmem:[%s298 + $0xf8] sm:$0xf]
        %v407 = vld [vmem:[%s298 + $0xfc] sm:$0xf]
        %v408 = vld [vmem:[#allocation7] sm:$0xf]
        %v409 = vld [vmem:[#allocation7 + $0x4] sm:$0xf]
        %v410 = vld [vmem:[#allocation7 + $0x8] sm:$0xf]
        %v411 = vld [vmem:[#allocation7 + $0xc] sm:$0xf]
        %v412 = vld [vmem:[#allocation7 + $0x10] sm:$0xf]
        %v413 = vld [vmem:[#allocation7 + $0x14] sm:$0xf]
        %v414 = vld [vmem:[#allocation7 + $0x18] sm:$0xf]
        %v415 = vld [vmem:[#allocation7 + $0x1c] sm:$0xf]
        %v416 = vld [vmem:[#allocation7 + $0x20] sm:$0xf]
        %v417 = vld [vmem:[#allocation7 + $0x24] sm:$0xf]
        %v418 = vld [vmem:[#allocation7 + $0x28] sm:$0xf]
        %v419 = vld [vmem:[#allocation7 + $0x2c] sm:$0xf]
        %v420 = vld [vmem:[#allocation7 + $0x30] sm:$0xf]
        %v421 = vld [vmem:[#allocation7 + $0x34] sm:$0xf]
        %v422 = vld [vmem:[#allocation7 + $0x38] sm:$0xf]
        %v423 = vld [vmem:[#allocation7 + $0x3c] sm:$0xf]
        %v488 = vunpack.c.l.b16 %v344
        %v489 = vunpack.c.l.b16 %v345
        %v490 = vunpack.c.l.b16 %v346
        %v491 = vunpack.c.l.b16 %v347
        %v492 = vunpack.c.l.b16 %v348
        %v493 = vunpack.c.l.b16 %v349
        %v494 = vunpack.c.l.b16 %v350
        %v495 = vunpack.c.l.b16 %v351
        %v496 = vunpack.c.l.b16 %v352
        %v497 = vunpack.c.l.b16 %v353
        %v498 = vunpack.c.l.b16 %v354
        %v499 = vunpack.c.l.b16 %v355
        %v500 = vunpack.c.l.b16 %v356
        %v501 = vunpack.c.l.b16 %v357
        %v502 = vunpack.c.l.b16 %v358
        %v503 = vunpack.c.l.b16 %v359
        %v504 = vunpack.c.l.b16 %v360
        %v505 = vunpack.c.l.b16 %v361
        %v506 = vunpack.c.l.b16 %v362
        %v507 = vunpack.c.l.b16 %v363
        %v508 = vunpack.c.l.b16 %v364
        %v509 = vunpack.c.l.b16 %v365
        %v510 = vunpack.c.l.b16 %v366
        %v511 = vunpack.c.l.b16 %v367
        %v512 = vunpack.c.l.b16 %v368
        %v513 = vunpack.c.l.b16 %v369
        %v514 = vunpack.c.l.b16 %v370
        %v515 = vunpack.c.l.b16 %v371
        %v516 = vunpack.c.l.b16 %v372
        %v517 = vunpack.c.l.b16 %v373
        %v518 = vunpack.c.l.b16 %v374
        %v519 = vunpack.c.l.b16 %v375
        %v520 = vunpack.c.l.b16 %v376
        %v521 = vunpack.c.l.b16 %v377
        %v522 = vunpack.c.l.b16 %v378
        %v523 = vunpack.c.l.b16 %v379
        %v524 = vunpack.c.l.b16 %v380
        %v525 = vunpack.c.l.b16 %v381
        %v526 = vunpack.c.l.b16 %v382
        %v527 = vunpack.c.l.b16 %v383
        %v528 = vunpack.c.l.b16 %v384
        %v529 = vunpack.c.l.b16 %v385
        %v530 = vunpack.c.l.b16 %v386
        %v531 = vunpack.c.l.b16 %v387
        %v532 = vunpack.c.l.b16 %v388
        %v533 = vunpack.c.l.b16 %v389
        %v534 = vunpack.c.l.b16 %v390
        %v535 = vunpack.c.l.b16 %v391
        %v536 = vunpack.c.l.b16 %v392
        %v537 = vunpack.c.l.b16 %v393
        %v538 = vunpack.c.l.b16 %v394
        %v539 = vunpack.c.l.b16 %v395
        %v540 = vunpack.c.l.b16 %v396
        %v541 = vunpack.c.l.b16 %v397
        %v542 = vunpack.c.l.b16 %v398
        %v543 = vunpack.c.l.b16 %v399
        %v544 = vunpack.c.l.b16 %v400
        %v545 = vunpack.c.l.b16 %v401
        %v546 = vunpack.c.l.b16 %v402
        %v547 = vunpack.c.l.b16 %v403
        %v548 = vunpack.c.l.b16 %v404
        %v549 = vunpack.c.l.b16 %v405
        %v550 = vunpack.c.l.b16 %v406
        %v551 = vunpack.c.l.b16 %v407
        %v552 = vpack.c.b16 %v489, %v488
        %v553 = vpack.c.b16 %v491, %v490
        %v554 = vpack.c.b16 %v493, %v492
        %v555 = vpack.c.b16 %v495, %v494
        %v556 = vpack.c.b16 %v497, %v496
        %v557 = vpack.c.b16 %v499, %v498
        %v558 = vpack.c.b16 %v501, %v500
        %v559 = vpack.c.b16 %v503, %v502
        %v560 = vpack.c.b16 %v505, %v504
        %v561 = vpack.c.b16 %v507, %v506
        %v562 = vpack.c.b16 %v509, %v508
        %v563 = vpack.c.b16 %v511, %v510
        %v564 = vpack.c.b16 %v513, %v512
        %v565 = vpack.c.b16 %v515, %v514
        %v566 = vpack.c.b16 %v517, %v516
        %v567 = vpack.c.b16 %v519, %v518
        %v568 = vpack.c.b16 %v521, %v520
        %v569 = vpack.c.b16 %v523, %v522
        %v570 = vpack.c.b16 %v525, %v524
        %v571 = vpack.c.b16 %v527, %v526
        %v572 = vpack.c.b16 %v529, %v528
        %v573 = vpack.c.b16 %v531, %v530
        %v574 = vpack.c.b16 %v533, %v532
        %v575 = vpack.c.b16 %v535, %v534
        %v576 = vpack.c.b16 %v537, %v536
        %v577 = vpack.c.b16 %v539, %v538
        %v578 = vpack.c.b16 %v541, %v540
        %v579 = vpack.c.b16 %v543, %v542
        %v580 = vpack.c.b16 %v545, %v544
        %v581 = vpack.c.b16 %v547, %v546
        %v582 = vpack.c.b16 %v549, %v548
        %v583 = vpack.c.b16 %v551, %v550
        %v632 = vunpack.c.l.b16 %v408
        %v633 = vunpack.c.l.b16 %v409
        %v634 = vunpack.c.l.b16 %v410
        %v635 = vunpack.c.l.b16 %v411
        %v636 = vunpack.c.l.b16 %v412
        %v637 = vunpack.c.l.b16 %v413
        %v638 = vunpack.c.l.b16 %v414
        %v639 = vunpack.c.l.b16 %v415
        %v640 = vunpack.c.l.b16 %v416
        %v641 = vunpack.c.l.b16 %v417
        %v642 = vunpack.c.l.b16 %v418
        %v643 = vunpack.c.l.b16 %v419
        %v644 = vunpack.c.l.b16 %v420
        %v645 = vunpack.c.l.b16 %v421
        %v646 = vunpack.c.l.b16 %v422
        %v647 = vunpack.c.l.b16 %v423
        %v648 = vpack.c.b16 %v633, %v632
        %v649 = vpack.c.b16 %v635, %v634
        %v650 = vpack.c.b16 %v637, %v636
        %v651 = vpack.c.b16 %v639, %v638
        %v652 = vpack.c.b16 %v641, %v640
        %v653 = vpack.c.b16 %v643, %v642
        %v654 = vpack.c.b16 %v645, %v644
        %v655 = vpack.c.b16 %v647, %v646
        %664 = vmatprep.subr.bf16.mxu0 0
        %665 = vmatpush1.bf16.msra.mxu0 %v648
        %666 = vmatprep.subr.bf16.mxu0 0
        %667 = vmatpush1.bf16.msra.mxu0 %v649
        %668 = vmatprep.subr.bf16.mxu0 0
        %669 = vmatpush1.bf16.msra.mxu0 %v650
        %670 = vmatprep.subr.bf16.mxu0 0
        %671 = vmatpush1.bf16.msra.mxu0 %v651
        %672 = vmatprep.subr.bf16.mxu0 0
        %673 = vmatpush1.bf16.msra.mxu0 %v652
        %674 = vmatprep.subr.bf16.mxu0 0
        %675 = vmatpush1.bf16.msra.mxu0 %v653
        %676 = vmatprep.subr.bf16.mxu0 0
        %677 = vmatpush1.bf16.msra.mxu0 %v654
        %678 = vmatprep.subr.bf16.mxu0 0
        %679 = vmatpush1.bf16.msra.mxu0 %v655
        %680 = vmatprep.subr.bf16.mxu0 0
        %681 = vmatpush1.bf16.msra.mxu0 0
        %682 = vmatprep.subr.bf16.mxu0 0
        %683 = vmatpush1.bf16.msra.mxu0 0
        %684 = vmatprep.subr.bf16.mxu0 0
        %685 = vmatpush1.bf16.msra.mxu0 0
        %686 = vmatprep.subr.bf16.mxu0 0
        %687 = vmatpush1.bf16.msra.mxu0 0
        %688 = vmatprep.subr.bf16.mxu0 0
        %689 = vmatpush1.bf16.msra.mxu0 0
        %690 = vmatprep.subr.bf16.mxu0 0
        %691 = vmatpush1.bf16.msra.mxu0 0
        %692 = vmatprep.subr.bf16.mxu0 0
        %693 = vmatpush1.bf16.msra.mxu0 0
        %694 = vmatprep.subr.bf16.mxu0 0
        %695 = vmatpush1.bf16.msra.mxu0 0
        %696 = vmatprep.mubr.bf16.mxu0 0
        %697 = vmatmul.mubr.bf16.gmra.mrb[0].mxu0 %v552
        %v698 = vpop.f32.mrb[0].mxu0
        %v699 = vadd.f32 0.0, %v698
        %v700 = vpop.f32.mrb[0].mxu0
        %v701 = vpop.f32.mrb[0].mxu0
        %v702 = vadd.f32 0.0, %v701
        %v703 = vpop.f32.mrb[0].mxu0
        %704 = vmatprep.mubr.bf16.mxu0 0
        %705 = vmatmul.mubr.bf16.gmra.mrb[0].mxu0 %v553
        %v706 = vpop.f32.mrb[0].mxu0
        %v707 = vadd.f32 0.0, %v706
        %v708 = vpop.f32.mrb[0].mxu0
        %v709 = vpop.f32.mrb[0].mxu0
        %v710 = vadd.f32 0.0, %v709
        %v711 = vpop.f32.mrb[0].mxu0
        %712 = vmatprep.mubr.bf16.mxu0 0
        %713 = vmatmul.mubr.bf16.gmra.mrb[0].mxu0 %v554
        %v714 = vpop.f32.mrb[0].mxu0
        %v715 = vadd.f32 0.0, %v714
        %v716 = vpop.f32.mrb[0].mxu0
        %v717 = vpop.f32.mrb[0].mxu0
        %v718 = vadd.f32 0.0, %v717
        %v719 = vpop.f32.mrb[0].mxu0
        %720 = vmatprep.mubr.bf16.mxu0 0
        %721 = vmatmul.mubr.bf16.gmra.mrb[0].mxu0 %v555
        %v722 = vpop.f32.mrb[0].mxu0
        %v723 = vadd.f32 0.0, %v722
        %v724 = vpop.f32.mrb[0].mxu0
        %v725 = vpop.f32.mrb[0].mxu0
        %v726 = vadd.f32 0.0, %v725
        %v727 = vpop.f32.mrb[0].mxu0
        %728 = vmatprep.mubr.bf16.mxu0 0
        %729 = vmatmul.mubr.bf16.gmra.mrb[0].mxu0 %v556
        %v730 = vpop.f32.mrb[0].mxu0
        %v731 = vadd.f32 0.0, %v730
        %v732 = vpop.f32.mrb[0].mxu0
        %v733 = vpop.f32.mrb[0].mxu0
        %v734 = vadd.f32 0.0, %v733
        %v735 = vpop.f32.mrb[0].mxu0
        %736 = vmatprep.mubr.bf16.mxu0 0
        %737 = vmatmul.mubr.bf16.gmra.mrb[0].mxu0 %v557
        %v738 = vpop.f32.mrb[0].mxu0
        %v739 = vadd.f32 0.0, %v738
        %v740 = vpop.f32.mrb[0].mxu0
        %v741 = vpop.f32.mrb[0].mxu0
        %v742 = vadd.f32 0.0, %v741
        %v743 = vpop.f32.mrb[0].mxu0
        %744 = vmatprep.mubr.bf16.mxu0 0
        %745 = vmatmul.mubr.bf16.gmra.mrb[0].mxu0 %v558
        %v746 = vpop.f32.mrb[0].mxu0
        %v747 = vadd.f32 0.0, %v746
        %v748 = vpop.f32.mrb[0].mxu0
        %v749 = vpop.f32.mrb[0].mxu0
        %v750 = vadd.f32 0.0, %v749
        %v751 = vpop.f32.mrb[0].mxu0
        %752 = vmatprep.mubr.bf16.mxu0 0
        %753 = vmatmul.mubr.bf16.gmra.mrb[0].mxu0 %v559
        %v754 = vpop.f32.mrb[0].mxu0
        %v755 = vadd.f32 0.0, %v754
        %v756 = vpop.f32.mrb[0].mxu0
        %v757 = vpop.f32.mrb[0].mxu0
        %v758 = vadd.f32 0.0, %v757
        %v759 = vpop.f32.mrb[0].mxu0
        %760 = vmatprep.mubr.bf16.mxu0 0
        %761 = vmatmul.mubr.bf16.gmra.mrb[0].mxu0 %v560
        %v762 = vpop.f32.mrb[0].mxu0
        %v763 = vadd.f32 0.0, %v762
        %v764 = vpop.f32.mrb[0].mxu0
        %v765 = vpop.f32.mrb[0].mxu0
        %v766 = vadd.f32 0.0, %v765
        %v767 = vpop.f32.mrb[0].mxu0
        %768 = vmatprep.mubr.bf16.mxu0 0
        %769 = vmatmul.mubr.bf16.gmra.mrb[0].mxu0 %v561
        %v770 = vpop.f32.mrb[0].mxu0
        %v771 = vadd.f32 0.0, %v770
        %v772 = vpop.f32.mrb[0].mxu0
        %v773 = vpop.f32.mrb[0].mxu0
        %v774 = vadd.f32 0.0, %v773
        %v775 = vpop.f32.mrb[0].mxu0
        %776 = vmatprep.mubr.bf16.mxu0 0
        %777 = vmatmul.mubr.bf16.gmra.mrb[0].mxu0 %v562
        %v778 = vpop.f32.mrb[0].mxu0
        %v779 = vadd.f32 0.0, %v778
        %v780 = vpop.f32.mrb[0].mxu0
        %v781 = vpop.f32.mrb[0].mxu0
        %v782 = vadd.f32 0.0, %v781
        %v783 = vpop.f32.mrb[0].mxu0
        %784 = vmatprep.mubr.bf16.mxu0 0
        %785 = vmatmul.mubr.bf16.gmra.mrb[0].mxu0 %v563
        %v786 = vpop.f32.mrb[0].mxu0
        %v787 = vadd.f32 0.0, %v786
        %v788 = vpop.f32.mrb[0].mxu0
        %v789 = vpop.f32.mrb[0].mxu0
        %v790 = vadd.f32 0.0, %v789
        %v791 = vpop.f32.mrb[0].mxu0
        %792 = vmatprep.mubr.bf16.mxu0 0
        %793 = vmatmul.mubr.bf16.gmra.mrb[0].mxu0 %v564
        %v794 = vpop.f32.mrb[0].mxu0
        %v795 = vadd.f32 0.0, %v794
        %v796 = vpop.f32.mrb[0].mxu0
        %v797 = vpop.f32.mrb[0].mxu0
        %v798 = vadd.f32 0.0, %v797
        %v799 = vpop.f32.mrb[0].mxu0
        %800 = vmatprep.mubr.bf16.mxu0 0
        %801 = vmatmul.mubr.bf16.gmra.mrb[0].mxu0 %v565
        %v802 = vpop.f32.mrb[0].mxu0
        %v803 = vadd.f32 0.0, %v802
        %v804 = vpop.f32.mrb[0].mxu0
        %v805 = vpop.f32.mrb[0].mxu0
        %v806 = vadd.f32 0.0, %v805
        %v807 = vpop.f32.mrb[0].mxu0
        %808 = vmatprep.mubr.bf16.mxu0 0
        %809 = vmatmul.mubr.bf16.gmra.mrb[0].mxu0 %v566
        %v810 = vpop.f32.mrb[0].mxu0
        %v811 = vadd.f32 0.0, %v810
        %v812 = vpop.f32.mrb[0].mxu0
        %v813 = vpop.f32.mrb[0].mxu0
        %v814 = vadd.f32 0.0, %v813
        %v815 = vpop.f32.mrb[0].mxu0
        %816 = vmatprep.mubr.bf16.mxu0 0
        %817 = vmatmul.mubr.bf16.gmra.mrb[0].mxu0 %v567
        %v818 = vpop.f32.mrb[0].mxu0
        %v819 = vadd.f32 0.0, %v818
        %v820 = vpop.f32.mrb[0].mxu0
        %v821 = vpop.f32.mrb[0].mxu0
        %v822 = vadd.f32 0.0, %v821
        %v823 = vpop.f32.mrb[0].mxu0
        %824 = vmatprep.mubr.bf16.mxu0 0
        %825 = vmatmul.mubr.bf16.gmra.mrb[0].mxu0 %v568
        %v826 = vpop.f32.mrb[0].mxu0
        %v827 = vadd.f32 0.0, %v826
        %v828 = vpop.f32.mrb[0].mxu0
        %v829 = vpop.f32.mrb[0].mxu0
        %v830 = vadd.f32 0.0, %v829
        %v831 = vpop.f32.mrb[0].mxu0
        %832 = vmatprep.mubr.bf16.mxu0 0
        %833 = vmatmul.mubr.bf16.gmra.mrb[0].mxu0 %v569
        %v834 = vpop.f32.mrb[0].mxu0
        %v835 = vadd.f32 0.0, %v834
        %v836 = vpop.f32.mrb[0].mxu0
        %v837 = vpop.f32.mrb[0].mxu0
        %v838 = vadd.f32 0.0, %v837
        %v839 = vpop.f32.mrb[0].mxu0
        %840 = vmatprep.mubr.bf16.mxu0 0
        %841 = vmatmul.mubr.bf16.gmra.mrb[0].mxu0 %v570
        %v842 = vpop.f32.mrb[0].mxu0
        %v843 = vadd.f32 0.0, %v842
        %v844 = vpop.f32.mrb[0].mxu0
        %v845 = vpop.f32.mrb[0].mxu0
        %v846 = vadd.f32 0.0, %v845
        %v847 = vpop.f32.mrb[0].mxu0
        %848 = vmatprep.mubr.bf16.mxu0 0
        %849 = vmatmul.mubr.bf16.gmra.mrb[0].mxu0 %v571
        %v850 = vpop.f32.mrb[0].mxu0
        %v851 = vadd.f32 0.0, %v850
        %v852 = vpop.f32.mrb[0].mxu0
        %v853 = vpop.f32.mrb[0].mxu0
        %v854 = vadd.f32 0.0, %v853
        %v855 = vpop.f32.mrb[0].mxu0
        %856 = vmatprep.mubr.bf16.mxu0 0
        %857 = vmatmul.mubr.bf16.gmra.mrb[0].mxu0 %v572
        %v858 = vpop.f32.mrb[0].mxu0
        %v859 = vadd.f32 0.0, %v858
        %v860 = vpop.f32.mrb[0].mxu0
        %v861 = vpop.f32.mrb[0].mxu0
        %v862 = vadd.f32 0.0, %v861
        %v863 = vpop.f32.mrb[0].mxu0
        %864 = vmatprep.mubr.bf16.mxu0 0
        %865 = vmatmul.mubr.bf16.gmra.mrb[0].mxu0 %v573
        %v866 = vpop.f32.mrb[0].mxu0
        %v867 = vadd.f32 0.0, %v866
        %v868 = vpop.f32.mrb[0].mxu0
        %v869 = vpop.f32.mrb[0].mxu0
        %v870 = vadd.f32 0.0, %v869
        %v871 = vpop.f32.mrb[0].mxu0
        %872 = vmatprep.mubr.bf16.mxu0 0
        %873 = vmatmul.mubr.bf16.gmra.mrb[0].mxu0 %v574
        %v874 = vpop.f32.mrb[0].mxu0
        %v875 = vadd.f32 0.0, %v874
        %v876 = vpop.f32.mrb[0].mxu0
        %v877 = vpop.f32.mrb[0].mxu0
        %v878 = vadd.f32 0.0, %v877
        %v879 = vpop.f32.mrb[0].mxu0
        %880 = vmatprep.mubr.bf16.mxu0 0
        %881 = vmatmul.mubr.bf16.gmra.mrb[0].mxu0 %v575
        %v882 = vpop.f32.mrb[0].mxu0
        %v883 = vadd.f32 0.0, %v882
        %v884 = vpop.f32.mrb[0].mxu0
        %v885 = vpop.f32.mrb[0].mxu0
        %v886 = vadd.f32 0.0, %v885
        %v887 = vpop.f32.mrb[0].mxu0
        %888 = vmatprep.mubr.bf16.mxu0 0
        %889 = vmatmul.mubr.bf16.gmra.mrb[0].mxu0 %v576
        %v890 = vpop.f32.mrb[0].mxu0
        %v891 = vadd.f32 0.0, %v890
        %v892 = vpop.f32.mrb[0].mxu0
        %v893 = vpop.f32.mrb[0].mxu0
        %v894 = vadd.f32 0.0, %v893
        %v895 = vpop.f32.mrb[0].mxu0
        %896 = vmatprep.mubr.bf16.mxu0 0
        %897 = vmatmul.mubr.bf16.gmra.mrb[0].mxu0 %v577
        %v898 = vpop.f32.mrb[0].mxu0
        %v899 = vadd.f32 0.0, %v898
        %v900 = vpop.f32.mrb[0].mxu0
        %v901 = vpop.f32.mrb[0].mxu0
        %v902 = vadd.f32 0.0, %v901
        %v903 = vpop.f32.mrb[0].mxu0
        %904 = vmatprep.mubr.bf16.mxu0 0
        %905 = vmatmul.mubr.bf16.gmra.mrb[0].mxu0 %v578
        %v906 = vpop.f32.mrb[0].mxu0
        %v907 = vadd.f32 0.0, %v906
        %v908 = vpop.f32.mrb[0].mxu0
        %v909 = vpop.f32.mrb[0].mxu0
        %v910 = vadd.f32 0.0, %v909
        %v911 = vpop.f32.mrb[0].mxu0
        %912 = vmatprep.mubr.bf16.mxu0 0
        %913 = vmatmul.mubr.bf16.gmra.mrb[0].mxu0 %v579
        %v914 = vpop.f32.mrb[0].mxu0
        %v915 = vadd.f32 0.0, %v914
        %v916 = vpop.f32.mrb[0].mxu0
        %v917 = vpop.f32.mrb[0].mxu0
        %v918 = vadd.f32 0.0, %v917
        %v919 = vpop.f32.mrb[0].mxu0
        %920 = vmatprep.mubr.bf16.mxu0 0
        %921 = vmatmul.mubr.bf16.gmra.mrb[0].mxu0 %v580
        %v922 = vpop.f32.mrb[0].mxu0
        %v923 = vadd.f32 0.0, %v922
        %v924 = vpop.f32.mrb[0].mxu0
        %v925 = vpop.f32.mrb[0].mxu0
        %v926 = vadd.f32 0.0, %v925
        %v927 = vpop.f32.mrb[0].mxu0
        %928 = vmatprep.mubr.bf16.mxu0 0
        %929 = vmatmul.mubr.bf16.gmra.mrb[0].mxu0 %v581
        %v930 = vpop.f32.mrb[0].mxu0
        %v931 = vadd.f32 0.0, %v930
        %v932 = vpop.f32.mrb[0].mxu0
        %v933 = vpop.f32.mrb[0].mxu0
        %v934 = vadd.f32 0.0, %v933
        %v935 = vpop.f32.mrb[0].mxu0
        %936 = vmatprep.mubr.bf16.mxu0 0
        %937 = vmatmul.mubr.bf16.gmra.mrb[0].mxu0 %v582
        %v938 = vpop.f32.mrb[0].mxu0
        %v939 = vadd.f32 0.0, %v938
        %v940 = vpop.f32.mrb[0].mxu0
        %v941 = vpop.f32.mrb[0].mxu0
        %v942 = vadd.f32 0.0, %v941
        %v943 = vpop.f32.mrb[0].mxu0
        %944 = vmatprep.mubr.bf16.mxu0 0
        %945 = vmatmul.mubr.bf16.gmra.mrb[0].mxu0 %v583
        %v946 = vpop.f32.mrb[0].mxu0
        %v947 = vadd.f32 0.0, %v946
        %v948 = vpop.f32.mrb[0].mxu0
        %v949 = vpop.f32.mrb[0].mxu0
        %v950 = vadd.f32 0.0, %v949
        %v951 = vpop.f32.mrb[0].mxu0
        %952 = vdwg.mxu0
        %v953 = vpack.c.bf16 %v702, %v699
        %v954 = vpack.c.bf16 %v710, %v707
        %v955 = vpack.c.bf16 %v718, %v715
        %v956 = vpack.c.bf16 %v726, %v723
        %v957 = vpack.c.bf16 %v734, %v731
        %v958 = vpack.c.bf16 %v742, %v739
        %v959 = vpack.c.bf16 %v750, %v747
        %v960 = vpack.c.bf16 %v758, %v755
        %v961 = vpack.c.bf16 %v766, %v763
        %v962 = vpack.c.bf16 %v774, %v771
        %v963 = vpack.c.bf16 %v782, %v779
        %v964 = vpack.c.bf16 %v790, %v787
        %v965 = vpack.c.bf16 %v798, %v795
        %v966 = vpack.c.bf16 %v806, %v803
        %v967 = vpack.c.bf16 %v814, %v811
        %v968 = vpack.c.bf16 %v822, %v819
        %v969 = vpack.c.bf16 %v830, %v827
        %v970 = vpack.c.bf16 %v838, %v835
        %v971 = vpack.c.bf16 %v846, %v843
        %v972 = vpack.c.bf16 %v854, %v851
        %v973 = vpack.c.bf16 %v862, %v859
        %v974 = vpack.c.bf16 %v870, %v867
        %v975 = vpack.c.bf16 %v878, %v875
        %v976 = vpack.c.bf16 %v886, %v883
        %v977 = vpack.c.bf16 %v894, %v891
        %v978 = vpack.c.bf16 %v902, %v899
        %v979 = vpack.c.bf16 %v910, %v907
        %v980 = vpack.c.bf16 %v918, %v915
        %v981 = vpack.c.bf16 %v926, %v923
        %v982 = vpack.c.bf16 %v934, %v931
        %v983 = vpack.c.bf16 %v942, %v939
        %v984 = vpack.c.bf16 %v950, %v947
        %v985 = vld [vmem:[%s289] sm:$0xf]
        %v986 = vld [vmem:[%s289 + $0x4] sm:$0xf]
        %v987 = vld [vmem:[%s289 + $0x8] sm:$0xf]
        %v988 = vld [vmem:[%s289 + $0xc] sm:$0xf]
        %v989 = vld [vmem:[%s289 + $0x10] sm:$0xf]
        %v990 = vld [vmem:[%s289 + $0x14] sm:$0xf]
        %v991 = vld [vmem:[%s289 + $0x18] sm:$0xf]
        %v992 = vld [vmem:[%s289 + $0x1c] sm:$0xf]
        %v993 = vld [vmem:[%s289 + $0x20] sm:$0xf]
        %v994 = vld [vmem:[%s289 + $0x24] sm:$0xf]
        %v995 = vld [vmem:[%s289 + $0x28] sm:$0xf]
        %v996 = vld [vmem:[%s289 + $0x2c] sm:$0xf]
        %v997 = vld [vmem:[%s289 + $0x30] sm:$0xf]
        %v998 = vld [vmem:[%s289 + $0x34] sm:$0xf]
        %v999 = vld [vmem:[%s289 + $0x38] sm:$0xf]
        %v1000 = vld [vmem:[%s289 + $0x3c] sm:$0xf]
        %v1001 = vld [vmem:[%s289 + $0x40] sm:$0xf]
        %v1002 = vld [vmem:[%s289 + $0x44] sm:$0xf]
        %v1003 = vld [vmem:[%s289 + $0x48] sm:$0xf]
        %v1004 = vld [vmem:[%s289 + $0x4c] sm:$0xf]
        %v1005 = vld [vmem:[%s289 + $0x50] sm:$0xf]
        %v1006 = vld [vmem:[%s289 + $0x54] sm:$0xf]
        %v1007 = vld [vmem:[%s289 + $0x58] sm:$0xf]
        %v1008 = vld [vmem:[%s289 + $0x5c] sm:$0xf]
        %v1009 = vld [vmem:[%s289 + $0x60] sm:$0xf]
        %v1010 = vld [vmem:[%s289 + $0x64] sm:$0xf]
        %v1011 = vld [vmem:[%s289 + $0x68] sm:$0xf]
        %v1012 = vld [vmem:[%s289 + $0x6c] sm:$0xf]
        %v1013 = vld [vmem:[%s289 + $0x70] sm:$0xf]
        %v1014 = vld [vmem:[%s289 + $0x74] sm:$0xf]
        %v1015 = vld [vmem:[%s289 + $0x78] sm:$0xf]
        %v1016 = vld [vmem:[%s289 + $0x7c] sm:$0xf]
        %v1017 = vld [vmem:[%s289 + $0x80] sm:$0xf]
        %v1018 = vld [vmem:[%s289 + $0x84] sm:$0xf]
        %v1019 = vld [vmem:[%s289 + $0x88] sm:$0xf]
        %v1020 = vld [vmem:[%s289 + $0x8c] sm:$0xf]
        %v1021 = vld [vmem:[%s289 + $0x90] sm:$0xf]
        %v1022 = vld [vmem:[%s289 + $0x94] sm:$0xf]
        %v1023 = vld [vmem:[%s289 + $0x98] sm:$0xf]
        %v1024 = vld [vmem:[%s289 + $0x9c] sm:$0xf]
        %v1025 = vld [vmem:[%s289 + $0xa0] sm:$0xf]
        %v1026 = vld [vmem:[%s289 + $0xa4] sm:$0xf]
        %v1027 = vld [vmem:[%s289 + $0xa8] sm:$0xf]
        %v1028 = vld [vmem:[%s289 + $0xac] sm:$0xf]
        %v1029 = vld [vmem:[%s289 + $0xb0] sm:$0xf]
        %v1030 = vld [vmem:[%s289 + $0xb4] sm:$0xf]
        %v1031 = vld [vmem:[%s289 + $0xb8] sm:$0xf]
        %v1032 = vld [vmem:[%s289 + $0xbc] sm:$0xf]
        %v1033 = vld [vmem:[%s289 + $0xc0] sm:$0xf]
        %v1034 = vld [vmem:[%s289 + $0xc4] sm:$0xf]
        %v1035 = vld [vmem:[%s289 + $0xc8] sm:$0xf]
        %v1036 = vld [vmem:[%s289 + $0xcc] sm:$0xf]
        %v1037 = vld [vmem:[%s289 + $0xd0] sm:$0xf]
        %v1038 = vld [vmem:[%s289 + $0xd4] sm:$0xf]
        %v1039 = vld [vmem:[%s289 + $0xd8] sm:$0xf]
        %v1040 = vld [vmem:[%s289 + $0xdc] sm:$0xf]
        %v1041 = vld [vmem:[%s289 + $0xe0] sm:$0xf]
        %v1042 = vld [vmem:[%s289 + $0xe4] sm:$0xf]
        %v1043 = vld [vmem:[%s289 + $0xe8] sm:$0xf]
        %v1044 = vld [vmem:[%s289 + $0xec] sm:$0xf]
        %v1045 = vld [vmem:[%s289 + $0xf0] sm:$0xf]
        %v1046 = vld [vmem:[%s289 + $0xf4] sm:$0xf]
        %v1047 = vld [vmem:[%s289 + $0xf8] sm:$0xf]
        %v1048 = vld [vmem:[%s289 + $0xfc] sm:$0xf]
        %v1065 = vunpack.c.l.b16 %v985
        %v1066 = vunpack.c.l.b16 %v986
        %v1067 = vunpack.c.l.b16 %v987
        %v1068 = vunpack.c.l.b16 %v988
        %v1069 = vunpack.c.l.b16 %v989
        %v1070 = vunpack.c.l.b16 %v990
        %v1071 = vunpack.c.l.b16 %v991
        %v1072 = vunpack.c.l.b16 %v992
        %v1073 = vunpack.c.l.b16 %v993
        %v1074 = vunpack.c.l.b16 %v994
        %v1075 = vunpack.c.l.b16 %v995
        %v1076 = vunpack.c.l.b16 %v996
        %v1077 = vunpack.c.l.b16 %v997
        %v1078 = vunpack.c.l.b16 %v998
        %v1079 = vunpack.c.l.b16 %v999
        %v1080 = vunpack.c.l.b16 %v1000
        %v1081 = vpack.c.b16 %v1066, %v1065
        %v1082 = vpack.c.b16 %v1068, %v1067
        %v1083 = vpack.c.b16 %v1070, %v1069
        %v1084 = vpack.c.b16 %v1072, %v1071
        %v1085 = vpack.c.b16 %v1074, %v1073
        %v1086 = vpack.c.b16 %v1076, %v1075
        %v1087 = vpack.c.b16 %v1078, %v1077
        %v1088 = vpack.c.b16 %v1080, %v1079
        %1097 = vmatprep.subr.bf16.mxu0 0
        %1098 = vmatpush1.bf16.msra.mxu0 %v953
        %1099 = vmatprep.subr.bf16.mxu0 0
        %1100 = vmatpush1.bf16.msra.mxu0 %v954
        %1101 = vmatprep.subr.bf16.mxu0 0
        %1102 = vmatpush1.bf16.msra.mxu0 %v955
        %1103 = vmatprep.subr.bf16.mxu0 0
        %1104 = vmatpush1.bf16.msra.mxu0 %v956
        %1105 = vmatprep.subr.bf16.mxu0 0
        %1106 = vmatpush1.bf16.msra.mxu0 %v957
        %1107 = vmatprep.subr.bf16.mxu0 0
        %1108 = vmatpush1.bf16.msra.mxu0 %v958
        %1109 = vmatprep.subr.bf16.mxu0 0
        %1110 = vmatpush1.bf16.msra.mxu0 %v959
        %1111 = vmatprep.subr.bf16.mxu0 0
        %1112 = vmatpush1.bf16.msra.mxu0 %v960
        %1113 = vmatprep.subr.bf16.mxu0 0
        %1114 = vmatpush1.bf16.msra.mxu0 0
        %1115 = vmatprep.subr.bf16.mxu0 0
        %1116 = vmatpush1.bf16.msra.mxu0 0
        %1117 = vmatprep.subr.bf16.mxu0 0
        %1118 = vmatpush1.bf16.msra.mxu0 0
        %1119 = vmatprep.subr.bf16.mxu0 0
        %1120 = vmatpush1.bf16.msra.mxu0 0
        %1121 = vmatprep.subr.bf16.mxu0 0
        %1122 = vmatpush1.bf16.msra.mxu0 0
        %1123 = vmatprep.subr.bf16.mxu0 0
        %1124 = vmatpush1.bf16.msra.mxu0 0
        %1125 = vmatprep.subr.bf16.mxu0 0
        %1126 = vmatpush1.bf16.msra.mxu0 0
        %1127 = vmatprep.subr.bf16.mxu0 0
        %1128 = vmatpush1.bf16.msra.mxu0 0
        %1129 = vmatprep.mubr.bf16.mxu0 0
        %1130 = vmatmul.mubr.bf16.gmra.mrb[0].mxu0 %v1081
        %v1131 = vpop.f32.mrb[0].mxu0
        %v1132 = vadd.f32 0.0, %v1131
        %v1133 = vpop.f32.mrb[0].mxu0
        %v1134 = vpop.f32.mrb[0].mxu0
        %v1135 = vadd.f32 0.0, %v1134
        %v1136 = vpop.f32.mrb[0].mxu0
        %1137 = vmatprep.mubr.bf16.mxu0 0
        %1138 = vmatmul.mubr.bf16.gmra.mrb[0].mxu0 %v1082
        %v1139 = vpop.f32.mrb[0].mxu0
        %v1140 = vadd.f32 0.0, %v1139
        %v1141 = vpop.f32.mrb[0].mxu0
        %v1142 = vpop.f32.mrb[0].mxu0
        %v1143 = vadd.f32 0.0, %v1142
        %v1144 = vpop.f32.mrb[0].mxu0
        %1145 = vmatprep.mubr.bf16.mxu0 0
        %1146 = vmatmul.mubr.bf16.gmra.mrb[0].mxu0 %v1083
        %v1147 = vpop.f32.mrb[0].mxu0
        %v1148 = vadd.f32 0.0, %v1147
        %v1149 = vpop.f32.mrb[0].mxu0
        %v1150 = vpop.f32.mrb[0].mxu0
        %v1151 = vadd.f32 0.0, %v1150
        %v1152 = vpop.f32.mrb[0].mxu0
        %1153 = vmatprep.mubr.bf16.mxu0 0
        %1154 = vmatmul.mubr.bf16.gmra.mrb[0].mxu0 %v1084
        %v1155 = vpop.f32.mrb[0].mxu0
        %v1156 = vadd.f32 0.0, %v1155
        %v1157 = vpop.f32.mrb[0].mxu0
        %v1158 = vpop.f32.mrb[0].mxu0
        %v1159 = vadd.f32 0.0, %v1158
        %v1160 = vpop.f32.mrb[0].mxu0
        %1161 = vmatprep.mubr.bf16.mxu0 0
        %1162 = vmatmul.mubr.bf16.gmra.mrb[0].mxu0 %v1085
        %v1163 = vpop.f32.mrb[0].mxu0
        %v1164 = vadd.f32 0.0, %v1163
        %v1165 = vpop.f32.mrb[0].mxu0
        %v1166 = vpop.f32.mrb[0].mxu0
        %v1167 = vadd.f32 0.0, %v1166
        %v1168 = vpop.f32.mrb[0].mxu0
        %1169 = vmatprep.mubr.bf16.mxu0 0
        %1170 = vmatmul.mubr.bf16.gmra.mrb[0].mxu0 %v1086
        %v1171 = vpop.f32.mrb[0].mxu0
        %v1172 = vadd.f32 0.0, %v1171
        %v1173 = vpop.f32.mrb[0].mxu0
        %v1174 = vpop.f32.mrb[0].mxu0
        %v1175 = vadd.f32 0.0, %v1174
        %v1176 = vpop.f32.mrb[0].mxu0
        %1177 = vmatprep.mubr.bf16.mxu0 0
        %1178 = vmatmul.mubr.bf16.gmra.mrb[0].mxu0 %v1087
        %v1179 = vpop.f32.mrb[0].mxu0
        %v1180 = vadd.f32 0.0, %v1179
        %v1181 = vpop.f32.mrb[0].mxu0
        %v1182 = vpop.f32.mrb[0].mxu0
        %v1183 = vadd.f32 0.0, %v1182
        %v1184 = vpop.f32.mrb[0].mxu0
        %1185 = vmatprep.mubr.bf16.mxu0 0
        %1186 = vmatmul.mubr.bf16.gmra.mrb[0].mxu0 %v1088
        %v1187 = vpop.f32.mrb[0].mxu0
        %v1188 = vadd.f32 0.0, %v1187
        %v1189 = vpop.f32.mrb[0].mxu0
        %v1190 = vpop.f32.mrb[0].mxu0
        %v1191 = vadd.f32 0.0, %v1190
        %v1192 = vpop.f32.mrb[0].mxu0
        %1193 = vdwg.mxu0
        %v1210 = vunpack.c.l.b16 %v1001
        %v1211 = vunpack.c.l.b16 %v1002
        %v1212 = vunpack.c.l.b16 %v1003
        %v1213 = vunpack.c.l.b16 %v1004
        %v1214 = vunpack.c.l.b16 %v1005
        %v1215 = vunpack.c.l.b16 %v1006
        %v1216 = vunpack.c.l.b16 %v1007
        %v1217 = vunpack.c.l.b16 %v1008
        %v1218 = vunpack.c.l.b16 %v1009
        %v1219 = vunpack.c.l.b16 %v1010
        %v1220 = vunpack.c.l.b16 %v1011
        %v1221 = vunpack.c.l.b16 %v1012
        %v1222 = vunpack.c.l.b16 %v1013
        %v1223 = vunpack.c.l.b16 %v1014
        %v1224 = vunpack.c.l.b16 %v1015
        %v1225 = vunpack.c.l.b16 %v1016
        %v1226 = vpack.c.b16 %v1211, %v1210
        %v1227 = vpack.c.b16 %v1213, %v1212
        %v1228 = vpack.c.b16 %v1215, %v1214
        %v1229 = vpack.c.b16 %v1217, %v1216
        %v1230 = vpack.c.b16 %v1219, %v1218
        %v1231 = vpack.c.b16 %v1221, %v1220
        %v1232 = vpack.c.b16 %v1223, %v1222
        %v1233 = vpack.c.b16 %v1225, %v1224
        %1242 = vmatprep.subr.bf16.mxu0 0
        %1243 = vmatpush1.bf16.msra.mxu0 %v961
        %1244 = vmatprep.subr.bf16.mxu0 0
        %1245 = vmatpush1.bf16.msra.mxu0 %v962
        %1246 = vmatprep.subr.bf16.mxu0 0
        %1247 = vmatpush1.bf16.msra.mxu0 %v963
        %1248 = vmatprep.subr.bf16.mxu0 0
        %1249 = vmatpush1.bf16.msra.mxu0 %v964
        %1250 = vmatprep.subr.bf16.mxu0 0
        %1251 = vmatpush1.bf16.msra.mxu0 %v965
        %1252 = vmatprep.subr.bf16.mxu0 0
        %1253 = vmatpush1.bf16.msra.mxu0 %v966
        %1254 = vmatprep.subr.bf16.mxu0 0
        %1255 = vmatpush1.bf16.msra.mxu0 %v967
        %1256 = vmatprep.subr.bf16.mxu0 0
        %1257 = vmatpush1.bf16.msra.mxu0 %v968
        %1258 = vmatprep.subr.bf16.mxu0 0
        %1259 = vmatpush1.bf16.msra.mxu0 0
        %1260 = vmatprep.subr.bf16.mxu0 0
        %1261 = vmatpush1.bf16.msra.mxu0 0
        %1262 = vmatprep.subr.bf16.mxu0 0
        %1263 = vmatpush1.bf16.msra.mxu0 0
        %1264 = vmatprep.subr.bf16.mxu0 0
        %1265 = vmatpush1.bf16.msra.mxu0 0
        %1266 = vmatprep.subr.bf16.mxu0 0
        %1267 = vmatpush1.bf16.msra.mxu0 0
        %1268 = vmatprep.subr.bf16.mxu0 0
        %1269 = vmatpush1.bf16.msra.mxu0 0
        %1270 = vmatprep.subr.bf16.mxu0 0
        %1271 = vmatpush1.bf16.msra.mxu0 0
        %1272 = vmatprep.subr.bf16.mxu0 0
        %1273 = vmatpush1.bf16.msra.mxu0 0
        %1274 = vmatprep.mubr.bf16.mxu0 0
        %1275 = vmatmul.mubr.bf16.gmra.mrb[0].mxu0 %v1226
        %v1276 = vpop.f32.mrb[0].mxu0
        %v1277 = vadd.f32 0.0, %v1276
        %v1278 = vpop.f32.mrb[0].mxu0
        %v1279 = vpop.f32.mrb[0].mxu0
        %v1280 = vadd.f32 0.0, %v1279
        %v1281 = vpop.f32.mrb[0].mxu0
        %1282 = vmatprep.mubr.bf16.mxu0 0
        %1283 = vmatmul.mubr.bf16.gmra.mrb[0].mxu0 %v1227
        %v1284 = vpop.f32.mrb[0].mxu0
        %v1285 = vadd.f32 0.0, %v1284
        %v1286 = vpop.f32.mrb[0].mxu0
        %v1287 = vpop.f32.mrb[0].mxu0
        %v1288 = vadd.f32 0.0, %v1287
        %v1289 = vpop.f32.mrb[0].mxu0
        %1290 = vmatprep.mubr.bf16.mxu0 0
        %1291 = vmatmul.mubr.bf16.gmra.mrb[0].mxu0 %v1228
        %v1292 = vpop.f32.mrb[0].mxu0
        %v1293 = vadd.f32 0.0, %v1292
        %v1294 = vpop.f32.mrb[0].mxu0
        %v1295 = vpop.f32.mrb[0].mxu0
        %v1296 = vadd.f32 0.0, %v1295
        %v1297 = vpop.f32.mrb[0].mxu0
        %1298 = vmatprep.mubr.bf16.mxu0 0
        %1299 = vmatmul.mubr.bf16.gmra.mrb[0].mxu0 %v1229
        %v1300 = vpop.f32.mrb[0].mxu0
        %v1301 = vadd.f32 0.0, %v1300
        %v1302 = vpop.f32.mrb[0].mxu0
        %v1303 = vpop.f32.mrb[0].mxu0
        %v1304 = vadd.f32 0.0, %v1303
        %v1305 = vpop.f32.mrb[0].mxu0
        %1306 = vmatprep.mubr.bf16.mxu0 0
        %1307 = vmatmul.mubr.bf16.gmra.mrb[0].mxu0 %v1230
        %v1308 = vpop.f32.mrb[0].mxu0
        %v1309 = vadd.f32 0.0, %v1308
        %v1310 = vpop.f32.mrb[0].mxu0
        %v1311 = vpop.f32.mrb[0].mxu0
        %v1312 = vadd.f32 0.0, %v1311
        %v1313 = vpop.f32.mrb[0].mxu0
        %1314 = vmatprep.mubr.bf16.mxu0 0
        %1315 = vmatmul.mubr.bf16.gmra.mrb[0].mxu0 %v1231
        %v1316 = vpop.f32.mrb[0].mxu0
        %v1317 = vadd.f32 0.0, %v1316
        %v1318 = vpop.f32.mrb[0].mxu0
        %v1319 = vpop.f32.mrb[0].mxu0
        %v1320 = vadd.f32 0.0, %v1319
        %v1321 = vpop.f32.mrb[0].mxu0
        %1322 = vmatprep.mubr.bf16.mxu0 0
        %1323 = vmatmul.mubr.bf16.gmra.mrb[0].mxu0 %v1232
        %v1324 = vpop.f32.mrb[0].mxu0
        %v1325 = vadd.f32 0.0, %v1324
        %v1326 = vpop.f32.mrb[0].mxu0
        %v1327 = vpop.f32.mrb[0].mxu0
        %v1328 = vadd.f32 0.0, %v1327
        %v1329 = vpop.f32.mrb[0].mxu0
        %1330 = vmatprep.mubr.bf16.mxu0 0
        %1331 = vmatmul.mubr.bf16.gmra.mrb[0].mxu0 %v1233
        %v1332 = vpop.f32.mrb[0].mxu0
        %v1333 = vadd.f32 0.0, %v1332
        %v1334 = vpop.f32.mrb[0].mxu0
        %v1335 = vpop.f32.mrb[0].mxu0
        %v1336 = vadd.f32 0.0, %v1335
        %v1337 = vpop.f32.mrb[0].mxu0
        %1338 = vdwg.mxu0
        %v1355 = vunpack.c.l.b16 %v1017
        %v1356 = vunpack.c.l.b16 %v1018
        %v1357 = vunpack.c.l.b16 %v1019
        %v1358 = vunpack.c.l.b16 %v1020
        %v1359 = vunpack.c.l.b16 %v1021
        %v1360 = vunpack.c.l.b16 %v1022
        %v1361 = vunpack.c.l.b16 %v1023
        %v1362 = vunpack.c.l.b16 %v1024
        %v1363 = vunpack.c.l.b16 %v1025
        %v1364 = vunpack.c.l.b16 %v1026
        %v1365 = vunpack.c.l.b16 %v1027
        %v1366 = vunpack.c.l.b16 %v1028
        %v1367 = vunpack.c.l.b16 %v1029
        %v1368 = vunpack.c.l.b16 %v1030
        %v1369 = vunpack.c.l.b16 %v1031
        %v1370 = vunpack.c.l.b16 %v1032
        %v1371 = vpack.c.b16 %v1356, %v1355
        %v1372 = vpack.c.b16 %v1358, %v1357
        %v1373 = vpack.c.b16 %v1360, %v1359
        %v1374 = vpack.c.b16 %v1362, %v1361
        %v1375 = vpack.c.b16 %v1364, %v1363
        %v1376 = vpack.c.b16 %v1366, %v1365
        %v1377 = vpack.c.b16 %v1368, %v1367
        %v1378 = vpack.c.b16 %v1370, %v1369
        %1387 = vmatprep.subr.bf16.mxu0 0
        %1388 = vmatpush1.bf16.msra.mxu0 %v969
        %1389 = vmatprep.subr.bf16.mxu0 0
        %1390 = vmatpush1.bf16.msra.mxu0 %v970
        %1391 = vmatprep.subr.bf16.mxu0 0
        %1392 = vmatpush1.bf16.msra.mxu0 %v971
        %1393 = vmatprep.subr.bf16.mxu0 0
        %1394 = vmatpush1.bf16.msra.mxu0 %v972
        %1395 = vmatprep.subr.bf16.mxu0 0
        %1396 = vmatpush1.bf16.msra.mxu0 %v973
        %1397 = vmatprep.subr.bf16.mxu0 0
        %1398 = vmatpush1.bf16.msra.mxu0 %v974
        %1399 = vmatprep.subr.bf16.mxu0 0
        %1400 = vmatpush1.bf16.msra.mxu0 %v975
        %1401 = vmatprep.subr.bf16.mxu0 0
        %1402 = vmatpush1.bf16.msra.mxu0 %v976
        %1403 = vmatprep.subr.bf16.mxu0 0
        %1404 = vmatpush1.bf16.msra.mxu0 0
        %1405 = vmatprep.subr.bf16.mxu0 0
        %1406 = vmatpush1.bf16.msra.mxu0 0
        %1407 = vmatprep.subr.bf16.mxu0 0
        %1408 = vmatpush1.bf16.msra.mxu0 0
        %1409 = vmatprep.subr.bf16.mxu0 0
        %1410 = vmatpush1.bf16.msra.mxu0 0
        %1411 = vmatprep.subr.bf16.mxu0 0
        %1412 = vmatpush1.bf16.msra.mxu0 0
        %1413 = vmatprep.subr.bf16.mxu0 0
        %1414 = vmatpush1.bf16.msra.mxu0 0
        %1415 = vmatprep.subr.bf16.mxu0 0
        %1416 = vmatpush1.bf16.msra.mxu0 0
        %1417 = vmatprep.subr.bf16.mxu0 0
        %1418 = vmatpush1.bf16.msra.mxu0 0
        %1419 = vmatprep.mubr.bf16.mxu0 0
        %1420 = vmatmul.mubr.bf16.gmra.mrb[0].mxu0 %v1371
        %v1421 = vpop.f32.mrb[0].mxu0
        %v1422 = vadd.f32 0.0, %v1421
        %v1423 = vpop.f32.mrb[0].mxu0
        %v1424 = vpop.f32.mrb[0].mxu0
        %v1425 = vadd.f32 0.0, %v1424
        %v1426 = vpop.f32.mrb[0].mxu0
        %1427 = vmatprep.mubr.bf16.mxu0 0
        %1428 = vmatmul.mubr.bf16.gmra.mrb[0].mxu0 %v1372
        %v1429 = vpop.f32.mrb[0].mxu0
        %v1430 = vadd.f32 0.0, %v1429
        %v1431 = vpop.f32.mrb[0].mxu0
        %v1432 = vpop.f32.mrb[0].mxu0
        %v1433 = vadd.f32 0.0, %v1432
        %v1434 = vpop.f32.mrb[0].mxu0
        %1435 = vmatprep.mubr.bf16.mxu0 0
        %1436 = vmatmul.mubr.bf16.gmra.mrb[0].mxu0 %v1373
        %v1437 = vpop.f32.mrb[0].mxu0
        %v1438 = vadd.f32 0.0, %v1437
        %v1439 = vpop.f32.mrb[0].mxu0
        %v1440 = vpop.f32.mrb[0].mxu0
        %v1441 = vadd.f32 0.0, %v1440
        %v1442 = vpop.f32.mrb[0].mxu0
        %1443 = vmatprep.mubr.bf16.mxu0 0
        %1444 = vmatmul.mubr.bf16.gmra.mrb[0].mxu0 %v1374
        %v1445 = vpop.f32.mrb[0].mxu0
        %v1446 = vadd.f32 0.0, %v1445
        %v1447 = vpop.f32.mrb[0].mxu0
        %v1448 = vpop.f32.mrb[0].mxu0
        %v1449 = vadd.f32 0.0, %v1448
        %v1450 = vpop.f32.mrb[0].mxu0
        %1451 = vmatprep.mubr.bf16.mxu0 0
        %1452 = vmatmul.mubr.bf16.gmra.mrb[0].mxu0 %v1375
        %v1453 = vpop.f32.mrb[0].mxu0
        %v1454 = vadd.f32 0.0, %v1453
        %v1455 = vpop.f32.mrb[0].mxu0
        %v1456 = vpop.f32.mrb[0].mxu0
        %v1457 = vadd.f32 0.0, %v1456
        %v1458 = vpop.f32.mrb[0].mxu0
        %1459 = vmatprep.mubr.bf16.mxu0 0
        %1460 = vmatmul.mubr.bf16.gmra.mrb[0].mxu0 %v1376
        %v1461 = vpop.f32.mrb[0].mxu0
        %v1462 = vadd.f32 0.0, %v1461
        %v1463 = vpop.f32.mrb[0].mxu0
        %v1464 = vpop.f32.mrb[0].mxu0
        %v1465 = vadd.f32 0.0, %v1464
        %v1466 = vpop.f32.mrb[0].mxu0
        %1467 = vmatprep.mubr.bf16.mxu0 0
        %1468 = vmatmul.mubr.bf16.gmra.mrb[0].mxu0 %v1377
        %v1469 = vpop.f32.mrb[0].mxu0
        %v1470 = vadd.f32 0.0, %v1469
        %v1471 = vpop.f32.mrb[0].mxu0
        %v1472 = vpop.f32.mrb[0].mxu0
        %v1473 = vadd.f32 0.0, %v1472
        %v1474 = vpop.f32.mrb[0].mxu0
        %1475 = vmatprep.mubr.bf16.mxu0 0
        %1476 = vmatmul.mubr.bf16.gmra.mrb[0].mxu0 %v1378
        %v1477 = vpop.f32.mrb[0].mxu0
        %v1478 = vadd.f32 0.0, %v1477
        %v1479 = vpop.f32.mrb[0].mxu0
        %v1480 = vpop.f32.mrb[0].mxu0
        %v1481 = vadd.f32 0.0, %v1480
        %v1482 = vpop.f32.mrb[0].mxu0
        %1483 = vdwg.mxu0
        %v1500 = vunpack.c.l.b16 %v1033
        %v1501 = vunpack.c.l.b16 %v1034
        %v1502 = vunpack.c.l.b16 %v1035
        %v1503 = vunpack.c.l.b16 %v1036
        %v1504 = vunpack.c.l.b16 %v1037
        %v1505 = vunpack.c.l.b16 %v1038
        %v1506 = vunpack.c.l.b16 %v1039
        %v1507 = vunpack.c.l.b16 %v1040
        %v1508 = vunpack.c.l.b16 %v1041
        %v1509 = vunpack.c.l.b16 %v1042
        %v1510 = vunpack.c.l.b16 %v1043
        %v1511 = vunpack.c.l.b16 %v1044
        %v1512 = vunpack.c.l.b16 %v1045
        %v1513 = vunpack.c.l.b16 %v1046
        %v1514 = vunpack.c.l.b16 %v1047
        %v1515 = vunpack.c.l.b16 %v1048
        %v1516 = vpack.c.b16 %v1501, %v1500
        %v1517 = vpack.c.b16 %v1503, %v1502
        %v1518 = vpack.c.b16 %v1505, %v1504
        %v1519 = vpack.c.b16 %v1507, %v1506
        %v1520 = vpack.c.b16 %v1509, %v1508
        %v1521 = vpack.c.b16 %v1511, %v1510
        %v1522 = vpack.c.b16 %v1513, %v1512
        %v1523 = vpack.c.b16 %v1515, %v1514
        %1532 = vmatprep.subr.bf16.mxu0 0
        %1533 = vmatpush1.bf16.msra.mxu0 %v977
        %1534 = vmatprep.subr.bf16.mxu0 0
        %1535 = vmatpush1.bf16.msra.mxu0 %v978
        %1536 = vmatprep.subr.bf16.mxu0 0
        %1537 = vmatpush1.bf16.msra.mxu0 %v979
        %1538 = vmatprep.subr.bf16.mxu0 0
        %1539 = vmatpush1.bf16.msra.mxu0 %v980
        %1540 = vmatprep.subr.bf16.mxu0 0
        %1541 = vmatpush1.bf16.msra.mxu0 %v981
        %1542 = vmatprep.subr.bf16.mxu0 0
        %1543 = vmatpush1.bf16.msra.mxu0 %v982
        %1544 = vmatprep.subr.bf16.mxu0 0
        %1545 = vmatpush1.bf16.msra.mxu0 %v983
        %1546 = vmatprep.subr.bf16.mxu0 0
        %1547 = vmatpush1.bf16.msra.mxu0 %v984
        %1548 = vmatprep.subr.bf16.mxu0 0
        %1549 = vmatpush1.bf16.msra.mxu0 0
        %1550 = vmatprep.subr.bf16.mxu0 0
        %1551 = vmatpush1.bf16.msra.mxu0 0
        %1552 = vmatprep.subr.bf16.mxu0 0
        %1553 = vmatpush1.bf16.msra.mxu0 0
        %1554 = vmatprep.subr.bf16.mxu0 0
        %1555 = vmatpush1.bf16.msra.mxu0 0
        %1556 = vmatprep.subr.bf16.mxu0 0
        %1557 = vmatpush1.bf16.msra.mxu0 0
        %1558 = vmatprep.subr.bf16.mxu0 0
        %1559 = vmatpush1.bf16.msra.mxu0 0
        %1560 = vmatprep.subr.bf16.mxu0 0
        %1561 = vmatpush1.bf16.msra.mxu0 0
        %1562 = vmatprep.subr.bf16.mxu0 0
        %1563 = vmatpush1.bf16.msra.mxu0 0
        %1564 = vmatprep.mubr.bf16.mxu0 0
        %1565 = vmatmul.mubr.bf16.gmra.mrb[0].mxu0 %v1516
        %v1566 = vpop.f32.mrb[0].mxu0
        %v1567 = vadd.f32 0.0, %v1566
        %v1568 = vpop.f32.mrb[0].mxu0
        %v1569 = vpop.f32.mrb[0].mxu0
        %v1570 = vadd.f32 0.0, %v1569
        %v1571 = vpop.f32.mrb[0].mxu0
        %1572 = vmatprep.mubr.bf16.mxu0 0
        %1573 = vmatmul.mubr.bf16.gmra.mrb[0].mxu0 %v1517
        %v1574 = vpop.f32.mrb[0].mxu0
        %v1575 = vadd.f32 0.0, %v1574
        %v1576 = vpop.f32.mrb[0].mxu0
        %v1577 = vpop.f32.mrb[0].mxu0
        %v1578 = vadd.f32 0.0, %v1577
        %v1579 = vpop.f32.mrb[0].mxu0
        %1580 = vmatprep.mubr.bf16.mxu0 0
        %1581 = vmatmul.mubr.bf16.gmra.mrb[0].mxu0 %v1518
        %v1582 = vpop.f32.mrb[0].mxu0
        %v1583 = vadd.f32 0.0, %v1582
        %v1584 = vpop.f32.mrb[0].mxu0
        %v1585 = vpop.f32.mrb[0].mxu0
        %v1586 = vadd.f32 0.0, %v1585
        %v1587 = vpop.f32.mrb[0].mxu0
        %1588 = vmatprep.mubr.bf16.mxu0 0
        %1589 = vmatmul.mubr.bf16.gmra.mrb[0].mxu0 %v1519
        %v1590 = vpop.f32.mrb[0].mxu0
        %v1591 = vadd.f32 0.0, %v1590
        %v1592 = vpop.f32.mrb[0].mxu0
        %v1593 = vpop.f32.mrb[0].mxu0
        %v1594 = vadd.f32 0.0, %v1593
        %v1595 = vpop.f32.mrb[0].mxu0
        %1596 = vmatprep.mubr.bf16.mxu0 0
        %1597 = vmatmul.mubr.bf16.gmra.mrb[0].mxu0 %v1520
        %v1598 = vpop.f32.mrb[0].mxu0
        %v1599 = vadd.f32 0.0, %v1598
        %v1600 = vpop.f32.mrb[0].mxu0
        %v1601 = vpop.f32.mrb[0].mxu0
        %v1602 = vadd.f32 0.0, %v1601
        %v1603 = vpop.f32.mrb[0].mxu0
        %1604 = vmatprep.mubr.bf16.mxu0 0
        %1605 = vmatmul.mubr.bf16.gmra.mrb[0].mxu0 %v1521
        %v1606 = vpop.f32.mrb[0].mxu0
        %v1607 = vadd.f32 0.0, %v1606
        %v1608 = vpop.f32.mrb[0].mxu0
        %v1609 = vpop.f32.mrb[0].mxu0
        %v1610 = vadd.f32 0.0, %v1609
        %v1611 = vpop.f32.mrb[0].mxu0
        %1612 = vmatprep.mubr.bf16.mxu0 0
        %1613 = vmatmul.mubr.bf16.gmra.mrb[0].mxu0 %v1522
        %v1614 = vpop.f32.mrb[0].mxu0
        %v1615 = vadd.f32 0.0, %v1614
        %v1616 = vpop.f32.mrb[0].mxu0
        %v1617 = vpop.f32.mrb[0].mxu0
        %v1618 = vadd.f32 0.0, %v1617
        %v1619 = vpop.f32.mrb[0].mxu0
        %1620 = vmatprep.mubr.bf16.mxu0 0
        %1621 = vmatmul.mubr.bf16.gmra.mrb[0].mxu0 %v1523
        %v1622 = vpop.f32.mrb[0].mxu0
        %v1623 = vadd.f32 0.0, %v1622
        %v1624 = vpop.f32.mrb[0].mxu0
        %v1625 = vpop.f32.mrb[0].mxu0
        %v1626 = vadd.f32 0.0, %v1625
        %v1627 = vpop.f32.mrb[0].mxu0
        %1628 = vdwg.mxu0
        %v1629 = vld [vmem:[%s3] sm:$0x1]
        %v1631 = vlaneseq
        %v1632 = vshrl.u32 %v1631, 7
        %v1633 = vsub.s32 0, %v1632
        %v1634 = vrot.slane %v1629, %v1633
        %v1636 = vadd.f32 %v1132, %v1634
        %v1637 = vadd.f32 %v1135, %v1634
        %v1638 = vadd.f32 %v1140, %v1634
        %v1639 = vadd.f32 %v1143, %v1634
        %v1640 = vadd.f32 %v1148, %v1634
        %v1641 = vadd.f32 %v1151, %v1634
        %v1642 = vadd.f32 %v1156, %v1634
        %v1643 = vadd.f32 %v1159, %v1634
        %v1644 = vadd.f32 %v1164, %v1634
        %v1645 = vadd.f32 %v1167, %v1634
        %v1646 = vadd.f32 %v1172, %v1634
        %v1647 = vadd.f32 %v1175, %v1634
        %v1648 = vadd.f32 %v1180, %v1634
        %v1649 = vadd.f32 %v1183, %v1634
        %v1650 = vadd.f32 %v1188, %v1634
        %v1651 = vadd.f32 %v1191, %v1634
        %v1652 = vadd.f32 %v1277, %v1634
        %v1653 = vadd.f32 %v1280, %v1634
        %v1654 = vadd.f32 %v1285, %v1634
        %v1655 = vadd.f32 %v1288, %v1634
        %v1656 = vadd.f32 %v1293, %v1634
        %v1657 = vadd.f32 %v1296, %v1634
        %v1658 = vadd.f32 %v1301, %v1634
        %v1659 = vadd.f32 %v1304, %v1634
        %v1660 = vadd.f32 %v1309, %v1634
        %v1661 = vadd.f32 %v1312, %v1634
        %v1662 = vadd.f32 %v1317, %v1634
        %v1663 = vadd.f32 %v1320, %v1634
        %v1664 = vadd.f32 %v1325, %v1634
        %v1665 = vadd.f32 %v1328, %v1634
        %v1666 = vadd.f32 %v1333, %v1634
        %v1667 = vadd.f32 %v1336, %v1634
        %v1668 = vadd.f32 %v1422, %v1634
        %v1669 = vadd.f32 %v1425, %v1634
        %v1670 = vadd.f32 %v1430, %v1634
        %v1671 = vadd.f32 %v1433, %v1634
        %v1672 = vadd.f32 %v1438, %v1634
        %v1673 = vadd.f32 %v1441, %v1634
        %v1674 = vadd.f32 %v1446, %v1634
        %v1675 = vadd.f32 %v1449, %v1634
        %v1676 = vadd.f32 %v1454, %v1634
        %v1677 = vadd.f32 %v1457, %v1634
        %v1678 = vadd.f32 %v1462, %v1634
        %v1679 = vadd.f32 %v1465, %v1634
        %v1680 = vadd.f32 %v1470, %v1634
        %v1681 = vadd.f32 %v1473, %v1634
        %v1682 = vadd.f32 %v1478, %v1634
        %v1683 = vadd.f32 %v1481, %v1634
        %v1684 = vadd.f32 %v1567, %v1634
        %v1685 = vadd.f32 %v1570, %v1634
        %v1686 = vadd.f32 %v1575, %v1634
        %v1687 = vadd.f32 %v1578, %v1634
        %v1688 = vadd.f32 %v1583, %v1634
        %v1689 = vadd.f32 %v1586, %v1634
        %v1690 = vadd.f32 %v1591, %v1634
        %v1691 = vadd.f32 %v1594, %v1634
        %v1692 = vadd.f32 %v1599, %v1634
        %v1693 = vadd.f32 %v1602, %v1634
        %v1694 = vadd.f32 %v1607, %v1634
        %v1695 = vadd.f32 %v1610, %v1634
        %v1696 = vadd.f32 %v1615, %v1634
        %v1697 = vadd.f32 %v1618, %v1634
        %v1698 = vadd.f32 %v1623, %v1634
        %v1699 = vadd.f32 %v1626, %v1634
        %v1700 = vmax.f32 %v1636, 0.0
        %v1701 = vmax.f32 %v1637, 0.0
        %v1702 = vmax.f32 %v1638, 0.0
        %v1703 = vmax.f32 %v1639, 0.0
        %v1704 = vmax.f32 %v1640, 0.0
        %v1705 = vmax.f32 %v1641, 0.0
        %v1706 = vmax.f32 %v1642, 0.0
        %v1707 = vmax.f32 %v1643, 0.0
        %v1708 = vmax.f32 %v1644, 0.0
        %v1709 = vmax.f32 %v1645, 0.0
        %v1710 = vmax.f32 %v1646, 0.0
        %v1711 = vmax.f32 %v1647, 0.0
        %v1712 = vmax.f32 %v1648, 0.0
        %v1713 = vmax.f32 %v1649, 0.0
        %v1714 = vmax.f32 %v1650, 0.0
        %v1715 = vmax.f32 %v1651, 0.0
        %v1716 = vmax.f32 %v1652, 0.0
        %v1717 = vmax.f32 %v1653, 0.0
        %v1718 = vmax.f32 %v1654, 0.0
        %v1719 = vmax.f32 %v1655, 0.0
        %v1720 = vmax.f32 %v1656, 0.0
        %v1721 = vmax.f32 %v1657, 0.0
        %v1722 = vmax.f32 %v1658, 0.0
        %v1723 = vmax.f32 %v1659, 0.0
        %v1724 = vmax.f32 %v1660, 0.0
        %v1725 = vmax.f32 %v1661, 0.0
        %v1726 = vmax.f32 %v1662, 0.0
        %v1727 = vmax.f32 %v1663, 0.0
        %v1728 = vmax.f32 %v1664, 0.0
        %v1729 = vmax.f32 %v1665, 0.0
        %v1730 = vmax.f32 %v1666, 0.0
        %v1731 = vmax.f32 %v1667, 0.0
        %v1732 = vmax.f32 %v1668, 0.0
        %v1733 = vmax.f32 %v1669, 0.0
        %v1734 = vmax.f32 %v1670, 0.0
        %v1735 = vmax.f32 %v1671, 0.0
        %v1736 = vmax.f32 %v1672, 0.0
        %v1737 = vmax.f32 %v1673, 0.0
        %v1738 = vmax.f32 %v1674, 0.0
        %v1739 = vmax.f32 %v1675, 0.0
        %v1740 = vmax.f32 %v1676, 0.0
        %v1741 = vmax.f32 %v1677, 0.0
        %v1742 = vmax.f32 %v1678, 0.0
        %v1743 = vmax.f32 %v1679, 0.0
        %v1744 = vmax.f32 %v1680, 0.0
        %v1745 = vmax.f32 %v1681, 0.0
        %v1746 = vmax.f32 %v1682, 0.0
        %v1747 = vmax.f32 %v1683, 0.0
        %v1748 = vmax.f32 %v1684, 0.0
        %v1749 = vmax.f32 %v1685, 0.0
        %v1750 = vmax.f32 %v1686, 0.0
        %v1751 = vmax.f32 %v1687, 0.0
        %v1752 = vmax.f32 %v1688, 0.0
        %v1753 = vmax.f32 %v1689, 0.0
        %v1754 = vmax.f32 %v1690, 0.0
        %v1755 = vmax.f32 %v1691, 0.0
        %v1756 = vmax.f32 %v1692, 0.0
        %v1757 = vmax.f32 %v1693, 0.0
        %v1758 = vmax.f32 %v1694, 0.0
        %v1759 = vmax.f32 %v1695, 0.0
        %v1760 = vmax.f32 %v1696, 0.0
        %v1761 = vmax.f32 %v1697, 0.0
        %v1762 = vmax.f32 %v1698, 0.0
        %v1763 = vmax.f32 %v1699, 0.0
        %v1764 = vpack.c.bf16 %v1701, %v1700
        %v1765 = vpack.c.bf16 %v1703, %v1702
        %v1766 = vpack.c.bf16 %v1705, %v1704
        %v1767 = vpack.c.bf16 %v1707, %v1706
        %v1768 = vpack.c.bf16 %v1709, %v1708
        %v1769 = vpack.c.bf16 %v1711, %v1710
        %v1770 = vpack.c.bf16 %v1713, %v1712
        %v1771 = vpack.c.bf16 %v1715, %v1714
        %v1772 = vpack.c.bf16 %v1717, %v1716
        %v1773 = vpack.c.bf16 %v1719, %v1718
        %v1774 = vpack.c.bf16 %v1721, %v1720
        %v1775 = vpack.c.bf16 %v1723, %v1722
        %v1776 = vpack.c.bf16 %v1725, %v1724
        %v1777 = vpack.c.bf16 %v1727, %v1726
        %v1778 = vpack.c.bf16 %v1729, %v1728
        %v1779 = vpack.c.bf16 %v1731, %v1730
        %v1780 = vpack.c.bf16 %v1733, %v1732
        %v1781 = vpack.c.bf16 %v1735, %v1734
        %v1782 = vpack.c.bf16 %v1737, %v1736
        %v1783 = vpack.c.bf16 %v1739, %v1738
        %v1784 = vpack.c.bf16 %v1741, %v1740
        %v1785 = vpack.c.bf16 %v1743, %v1742
        %v1786 = vpack.c.bf16 %v1745, %v1744
        %v1787 = vpack.c.bf16 %v1747, %v1746
        %v1788 = vpack.c.bf16 %v1749, %v1748
        %v1789 = vpack.c.bf16 %v1751, %v1750
        %v1790 = vpack.c.bf16 %v1753, %v1752
        %v1791 = vpack.c.bf16 %v1755, %v1754
        %v1792 = vpack.c.bf16 %v1757, %v1756
        %v1793 = vpack.c.bf16 %v1759, %v1758
        %v1794 = vpack.c.bf16 %v1761, %v1760
        %v1795 = vpack.c.bf16 %v1763, %v1762
        %v1796 = vld [vmem:[#allocation8] sm:$0xf]
        %v1797 = vld [vmem:[#allocation8 + $0x4] sm:$0xf]
        %v1798 = vld [vmem:[#allocation8 + $0x8] sm:$0xf]
        %v1799 = vld [vmem:[#allocation8 + $0xc] sm:$0xf]
        %v1800 = vld [vmem:[#allocation8 + $0x10] sm:$0xf]
        %v1801 = vld [vmem:[#allocation8 + $0x14] sm:$0xf]
        %v1802 = vld [vmem:[#allocation8 + $0x18] sm:$0xf]
        %v1803 = vld [vmem:[#allocation8 + $0x1c] sm:$0xf]
        %v1804 = vld [vmem:[#allocation8 + $0x20] sm:$0xf]
        %v1805 = vld [vmem:[#allocation8 + $0x24] sm:$0xf]
        %v1806 = vld [vmem:[#allocation8 + $0x28] sm:$0xf]
        %v1807 = vld [vmem:[#allocation8 + $0x2c] sm:$0xf]
        %v1808 = vld [vmem:[#allocation8 + $0x30] sm:$0xf]
        %v1809 = vld [vmem:[#allocation8 + $0x34] sm:$0xf]
        %v1810 = vld [vmem:[#allocation8 + $0x38] sm:$0xf]
        %v1811 = vld [vmem:[#allocation8 + $0x3c] sm:$0xf]
        %v1828 = vunpack.c.l.b16 %v1796
        %v1829 = vunpack.c.l.b16 %v1797
        %v1830 = vunpack.c.l.b16 %v1798
        %v1831 = vunpack.c.l.b16 %v1799
        %v1832 = vunpack.c.l.b16 %v1800
        %v1833 = vunpack.c.l.b16 %v1801
        %v1834 = vunpack.c.l.b16 %v1802
        %v1835 = vunpack.c.l.b16 %v1803
        %v1836 = vunpack.c.l.b16 %v1804
        %v1837 = vunpack.c.l.b16 %v1805
        %v1838 = vunpack.c.l.b16 %v1806
        %v1839 = vunpack.c.l.b16 %v1807
        %v1840 = vunpack.c.l.b16 %v1808
        %v1841 = vunpack.c.l.b16 %v1809
        %v1842 = vunpack.c.l.b16 %v1810
        %v1843 = vunpack.c.l.b16 %v1811
        %v1844 = vpack.c.b16 %v1829, %v1828
        %v1845 = vpack.c.b16 %v1831, %v1830
        %v1846 = vpack.c.b16 %v1833, %v1832
        %v1847 = vpack.c.b16 %v1835, %v1834
        %v1848 = vpack.c.b16 %v1837, %v1836
        %v1849 = vpack.c.b16 %v1839, %v1838
        %v1850 = vpack.c.b16 %v1841, %v1840
        %v1851 = vpack.c.b16 %v1843, %v1842
        %1860 = vmatprep.subr.bf16.mxu0 0
        %1861 = vmatpush1.bf16.msra.mxu0 %v1844
        %1862 = vmatprep.subr.bf16.mxu0 0
        %1863 = vmatpush1.bf16.msra.mxu0 %v1845
        %1864 = vmatprep.subr.bf16.mxu0 0
        %1865 = vmatpush1.bf16.msra.mxu0 %v1846
        %1866 = vmatprep.subr.bf16.mxu0 0
        %1867 = vmatpush1.bf16.msra.mxu0 %v1847
        %1868 = vmatprep.subr.bf16.mxu0 0
        %1869 = vmatpush1.bf16.msra.mxu0 %v1848
        %1870 = vmatprep.subr.bf16.mxu0 0
        %1871 = vmatpush1.bf16.msra.mxu0 %v1849
        %1872 = vmatprep.subr.bf16.mxu0 0
        %1873 = vmatpush1.bf16.msra.mxu0 %v1850
        %1874 = vmatprep.subr.bf16.mxu0 0
        %1875 = vmatpush1.bf16.msra.mxu0 %v1851
        %1876 = vmatprep.subr.bf16.mxu0 0
        %1877 = vmatpush1.bf16.msra.mxu0 0
        %1878 = vmatprep.subr.bf16.mxu0 0
        %1879 = vmatpush1.bf16.msra.mxu0 0
        %1880 = vmatprep.subr.bf16.mxu0 0
        %1881 = vmatpush1.bf16.msra.mxu0 0
        %1882 = vmatprep.subr.bf16.mxu0 0
        %1883 = vmatpush1.bf16.msra.mxu0 0
        %1884 = vmatprep.subr.bf16.mxu0 0
        %1885 = vmatpush1.bf16.msra.mxu0 0
        %1886 = vmatprep.subr.bf16.mxu0 0
        %1887 = vmatpush1.bf16.msra.mxu0 0
        %1888 = vmatprep.subr.bf16.mxu0 0
        %1889 = vmatpush1.bf16.msra.mxu0 0
        %1890 = vmatprep.subr.bf16.mxu0 0
        %1891 = vmatpush1.bf16.msra.mxu0 0
        %1892 = vmatprep.mubr.bf16.mxu0 0
        %1893 = vmatmul.mubr.bf16.gmra.mrb[0].mxu0 %v1764
        %v1894 = vpop.f32.mrb[0].mxu0
        %v1895 = vadd.f32 0.0, %v1894
        %v1896 = vpop.f32.mrb[0].mxu0
        %v1897 = vpop.f32.mrb[0].mxu0
        %v1898 = vadd.f32 0.0, %v1897
        %v1899 = vpop.f32.mrb[0].mxu0
        %1900 = vmatprep.mubr.bf16.mxu0 0
        %1901 = vmatmul.mubr.bf16.gmra.mrb[0].mxu0 %v1765
        %v1902 = vpop.f32.mrb[0].mxu0
        %v1903 = vadd.f32 0.0, %v1902
        %v1904 = vpop.f32.mrb[0].mxu0
        %v1905 = vpop.f32.mrb[0].mxu0
        %v1906 = vadd.f32 0.0, %v1905
        %v1907 = vpop.f32.mrb[0].mxu0
        %1908 = vmatprep.mubr.bf16.mxu0 0
        %1909 = vmatmul.mubr.bf16.gmra.mrb[0].mxu0 %v1766
        %v1910 = vpop.f32.mrb[0].mxu0
        %v1911 = vadd.f32 0.0, %v1910
        %v1912 = vpop.f32.mrb[0].mxu0
        %v1913 = vpop.f32.mrb[0].mxu0
        %v1914 = vadd.f32 0.0, %v1913
        %v1915 = vpop.f32.mrb[0].mxu0
        %1916 = vmatprep.mubr.bf16.mxu0 0
        %1917 = vmatmul.mubr.bf16.gmra.mrb[0].mxu0 %v1767
        %v1918 = vpop.f32.mrb[0].mxu0
        %v1919 = vadd.f32 0.0, %v1918
        %v1920 = vpop.f32.mrb[0].mxu0
        %v1921 = vpop.f32.mrb[0].mxu0
        %v1922 = vadd.f32 0.0, %v1921
        %v1923 = vpop.f32.mrb[0].mxu0
        %1924 = vmatprep.mubr.bf16.mxu0 0
        %1925 = vmatmul.mubr.bf16.gmra.mrb[0].mxu0 %v1768
        %v1926 = vpop.f32.mrb[0].mxu0
        %v1927 = vadd.f32 0.0, %v1926
        %v1928 = vpop.f32.mrb[0].mxu0
        %v1929 = vpop.f32.mrb[0].mxu0
        %v1930 = vadd.f32 0.0, %v1929
        %v1931 = vpop.f32.mrb[0].mxu0
        %1932 = vmatprep.mubr.bf16.mxu0 0
        %1933 = vmatmul.mubr.bf16.gmra.mrb[0].mxu0 %v1769
        %v1934 = vpop.f32.mrb[0].mxu0
        %v1935 = vadd.f32 0.0, %v1934
        %v1936 = vpop.f32.mrb[0].mxu0
        %v1937 = vpop.f32.mrb[0].mxu0
        %v1938 = vadd.f32 0.0, %v1937
        %v1939 = vpop.f32.mrb[0].mxu0
        %1940 = vmatprep.mubr.bf16.mxu0 0
        %1941 = vmatmul.mubr.bf16.gmra.mrb[0].mxu0 %v1770
        %v1942 = vpop.f32.mrb[0].mxu0
        %v1943 = vadd.f32 0.0, %v1942
        %v1944 = vpop.f32.mrb[0].mxu0
        %v1945 = vpop.f32.mrb[0].mxu0
        %v1946 = vadd.f32 0.0, %v1945
        %v1947 = vpop.f32.mrb[0].mxu0
        %1948 = vmatprep.mubr.bf16.mxu0 0
        %1949 = vmatmul.mubr.bf16.gmra.mrb[0].mxu0 %v1771
        %v1950 = vpop.f32.mrb[0].mxu0
        %v1951 = vadd.f32 0.0, %v1950
        %v1952 = vpop.f32.mrb[0].mxu0
        %v1953 = vpop.f32.mrb[0].mxu0
        %v1954 = vadd.f32 0.0, %v1953
        %v1955 = vpop.f32.mrb[0].mxu0
        %1956 = vmatprep.mubr.bf16.mxu0 0
        %1957 = vmatmul.mubr.bf16.gmra.mrb[0].mxu0 %v1772
        %v1958 = vpop.f32.mrb[0].mxu0
        %v1959 = vadd.f32 0.0, %v1958
        %v1960 = vpop.f32.mrb[0].mxu0
        %v1961 = vpop.f32.mrb[0].mxu0
        %v1962 = vadd.f32 0.0, %v1961
        %v1963 = vpop.f32.mrb[0].mxu0
        %1964 = vmatprep.mubr.bf16.mxu0 0
        %1965 = vmatmul.mubr.bf16.gmra.mrb[0].mxu0 %v1773
        %v1966 = vpop.f32.mrb[0].mxu0
        %v1967 = vadd.f32 0.0, %v1966
        %v1968 = vpop.f32.mrb[0].mxu0
        %v1969 = vpop.f32.mrb[0].mxu0
        %v1970 = vadd.f32 0.0, %v1969
        %v1971 = vpop.f32.mrb[0].mxu0
        %1972 = vmatprep.mubr.bf16.mxu0 0
        %1973 = vmatmul.mubr.bf16.gmra.mrb[0].mxu0 %v1774
        %v1974 = vpop.f32.mrb[0].mxu0
        %v1975 = vadd.f32 0.0, %v1974
        %v1976 = vpop.f32.mrb[0].mxu0
        %v1977 = vpop.f32.mrb[0].mxu0
        %v1978 = vadd.f32 0.0, %v1977
        %v1979 = vpop.f32.mrb[0].mxu0
        %1980 = vmatprep.mubr.bf16.mxu0 0
        %1981 = vmatmul.mubr.bf16.gmra.mrb[0].mxu0 %v1775
        %v1982 = vpop.f32.mrb[0].mxu0
        %v1983 = vadd.f32 0.0, %v1982
        %v1984 = vpop.f32.mrb[0].mxu0
        %v1985 = vpop.f32.mrb[0].mxu0
        %v1986 = vadd.f32 0.0, %v1985
        %v1987 = vpop.f32.mrb[0].mxu0
        %1988 = vmatprep.mubr.bf16.mxu0 0
        %1989 = vmatmul.mubr.bf16.gmra.mrb[0].mxu0 %v1776
        %v1990 = vpop.f32.mrb[0].mxu0
        %v1991 = vadd.f32 0.0, %v1990
        %v1992 = vpop.f32.mrb[0].mxu0
        %v1993 = vpop.f32.mrb[0].mxu0
        %v1994 = vadd.f32 0.0, %v1993
        %v1995 = vpop.f32.mrb[0].mxu0
        %1996 = vmatprep.mubr.bf16.mxu0 0
        %1997 = vmatmul.mubr.bf16.gmra.mrb[0].mxu0 %v1777
        %v1998 = vpop.f32.mrb[0].mxu0
        %v1999 = vadd.f32 0.0, %v1998
        %v2000 = vpop.f32.mrb[0].mxu0
        %v2001 = vpop.f32.mrb[0].mxu0
        %v2002 = vadd.f32 0.0, %v2001
        %v2003 = vpop.f32.mrb[0].mxu0
        %2004 = vmatprep.mubr.bf16.mxu0 0
        %2005 = vmatmul.mubr.bf16.gmra.mrb[0].mxu0 %v1778
        %v2006 = vpop.f32.mrb[0].mxu0
        %v2007 = vadd.f32 0.0, %v2006
        %v2008 = vpop.f32.mrb[0].mxu0
        %v2009 = vpop.f32.mrb[0].mxu0
        %v2010 = vadd.f32 0.0, %v2009
        %v2011 = vpop.f32.mrb[0].mxu0
        %2012 = vmatprep.mubr.bf16.mxu0 0
        %2013 = vmatmul.mubr.bf16.gmra.mrb[0].mxu0 %v1779
        %v2014 = vpop.f32.mrb[0].mxu0
        %v2015 = vadd.f32 0.0, %v2014
        %v2016 = vpop.f32.mrb[0].mxu0
        %v2017 = vpop.f32.mrb[0].mxu0
        %v2018 = vadd.f32 0.0, %v2017
        %v2019 = vpop.f32.mrb[0].mxu0
        %2020 = vmatprep.mubr.bf16.mxu0 0
        %2021 = vmatmul.mubr.bf16.gmra.mrb[0].mxu0 %v1780
        %v2022 = vpop.f32.mrb[0].mxu0
        %v2023 = vadd.f32 0.0, %v2022
        %v2024 = vpop.f32.mrb[0].mxu0
        %v2025 = vpop.f32.mrb[0].mxu0
        %v2026 = vadd.f32 0.0, %v2025
        %v2027 = vpop.f32.mrb[0].mxu0
        %2028 = vmatprep.mubr.bf16.mxu0 0
        %2029 = vmatmul.mubr.bf16.gmra.mrb[0].mxu0 %v1781
        %v2030 = vpop.f32.mrb[0].mxu0
        %v2031 = vadd.f32 0.0, %v2030
        %v2032 = vpop.f32.mrb[0].mxu0
        %v2033 = vpop.f32.mrb[0].mxu0
        %v2034 = vadd.f32 0.0, %v2033
        %v2035 = vpop.f32.mrb[0].mxu0
        %2036 = vmatprep.mubr.bf16.mxu0 0
        %2037 = vmatmul.mubr.bf16.gmra.mrb[0].mxu0 %v1782
        %v2038 = vpop.f32.mrb[0].mxu0
        %v2039 = vadd.f32 0.0, %v2038
        %v2040 = vpop.f32.mrb[0].mxu0
        %v2041 = vpop.f32.mrb[0].mxu0
        %v2042 = vadd.f32 0.0, %v2041
        %v2043 = vpop.f32.mrb[0].mxu0
        %2044 = vmatprep.mubr.bf16.mxu0 0
        %2045 = vmatmul.mubr.bf16.gmra.mrb[0].mxu0 %v1783
        %v2046 = vpop.f32.mrb[0].mxu0
        %v2047 = vadd.f32 0.0, %v2046
        %v2048 = vpop.f32.mrb[0].mxu0
        %v2049 = vpop.f32.mrb[0].mxu0
        %v2050 = vadd.f32 0.0, %v2049
        %v2051 = vpop.f32.mrb[0].mxu0
        %2052 = vmatprep.mubr.bf16.mxu0 0
        %2053 = vmatmul.mubr.bf16.gmra.mrb[0].mxu0 %v1784
        %v2054 = vpop.f32.mrb[0].mxu0
        %v2055 = vadd.f32 0.0, %v2054
        %v2056 = vpop.f32.mrb[0].mxu0
        %v2057 = vpop.f32.mrb[0].mxu0
        %v2058 = vadd.f32 0.0, %v2057
        %v2059 = vpop.f32.mrb[0].mxu0
        %2060 = vmatprep.mubr.bf16.mxu0 0
        %2061 = vmatmul.mubr.bf16.gmra.mrb[0].mxu0 %v1785
        %v2062 = vpop.f32.mrb[0].mxu0
        %v2063 = vadd.f32 0.0, %v2062
        %v2064 = vpop.f32.mrb[0].mxu0
        %v2065 = vpop.f32.mrb[0].mxu0
        %v2066 = vadd.f32 0.0, %v2065
        %v2067 = vpop.f32.mrb[0].mxu0
        %2068 = vmatprep.mubr.bf16.mxu0 0
        %2069 = vmatmul.mubr.bf16.gmra.mrb[0].mxu0 %v1786
        %v2070 = vpop.f32.mrb[0].mxu0
        %v2071 = vadd.f32 0.0, %v2070
        %v2072 = vpop.f32.mrb[0].mxu0
        %v2073 = vpop.f32.mrb[0].mxu0
        %v2074 = vadd.f32 0.0, %v2073
        %v2075 = vpop.f32.mrb[0].mxu0
        %2076 = vmatprep.mubr.bf16.mxu0 0
        %2077 = vmatmul.mubr.bf16.gmra.mrb[0].mxu0 %v1787
        %v2078 = vpop.f32.mrb[0].mxu0
        %v2079 = vadd.f32 0.0, %v2078
        %v2080 = vpop.f32.mrb[0].mxu0
        %v2081 = vpop.f32.mrb[0].mxu0
        %v2082 = vadd.f32 0.0, %v2081
        %v2083 = vpop.f32.mrb[0].mxu0
        %2084 = vmatprep.mubr.bf16.mxu0 0
        %2085 = vmatmul.mubr.bf16.gmra.mrb[0].mxu0 %v1788
        %v2086 = vpop.f32.mrb[0].mxu0
        %v2087 = vadd.f32 0.0, %v2086
        %v2088 = vpop.f32.mrb[0].mxu0
        %v2089 = vpop.f32.mrb[0].mxu0
        %v2090 = vadd.f32 0.0, %v2089
        %v2091 = vpop.f32.mrb[0].mxu0
        %2092 = vmatprep.mubr.bf16.mxu0 0
        %2093 = vmatmul.mubr.bf16.gmra.mrb[0].mxu0 %v1789
        %v2094 = vpop.f32.mrb[0].mxu0
        %v2095 = vadd.f32 0.0, %v2094
        %v2096 = vpop.f32.mrb[0].mxu0
        %v2097 = vpop.f32.mrb[0].mxu0
        %v2098 = vadd.f32 0.0, %v2097
        %v2099 = vpop.f32.mrb[0].mxu0
        %2100 = vmatprep.mubr.bf16.mxu0 0
        %2101 = vmatmul.mubr.bf16.gmra.mrb[0].mxu0 %v1790
        %v2102 = vpop.f32.mrb[0].mxu0
        %v2103 = vadd.f32 0.0, %v2102
        %v2104 = vpop.f32.mrb[0].mxu0
        %v2105 = vpop.f32.mrb[0].mxu0
        %v2106 = vadd.f32 0.0, %v2105
        %v2107 = vpop.f32.mrb[0].mxu0
        %2108 = vmatprep.mubr.bf16.mxu0 0
        %2109 = vmatmul.mubr.bf16.gmra.mrb[0].mxu0 %v1791
        %v2110 = vpop.f32.mrb[0].mxu0
        %v2111 = vadd.f32 0.0, %v2110
        %v2112 = vpop.f32.mrb[0].mxu0
        %v2113 = vpop.f32.mrb[0].mxu0
        %v2114 = vadd.f32 0.0, %v2113
        %v2115 = vpop.f32.mrb[0].mxu0
        %2116 = vmatprep.mubr.bf16.mxu0 0
        %2117 = vmatmul.mubr.bf16.gmra.mrb[0].mxu0 %v1792
        %v2118 = vpop.f32.mrb[0].mxu0
        %v2119 = vadd.f32 0.0, %v2118
        %v2120 = vpop.f32.mrb[0].mxu0
        %v2121 = vpop.f32.mrb[0].mxu0
        %v2122 = vadd.f32 0.0, %v2121
        %v2123 = vpop.f32.mrb[0].mxu0
        %2124 = vmatprep.mubr.bf16.mxu0 0
        %2125 = vmatmul.mubr.bf16.gmra.mrb[0].mxu0 %v1793
        %v2126 = vpop.f32.mrb[0].mxu0
        %v2127 = vadd.f32 0.0, %v2126
        %v2128 = vpop.f32.mrb[0].mxu0
        %v2129 = vpop.f32.mrb[0].mxu0
        %v2130 = vadd.f32 0.0, %v2129
        %v2131 = vpop.f32.mrb[0].mxu0
        %2132 = vmatprep.mubr.bf16.mxu0 0
        %2133 = vmatmul.mubr.bf16.gmra.mrb[0].mxu0 %v1794
        %v2134 = vpop.f32.mrb[0].mxu0
        %v2135 = vadd.f32 0.0, %v2134
        %v2136 = vpop.f32.mrb[0].mxu0
        %v2137 = vpop.f32.mrb[0].mxu0
        %v2138 = vadd.f32 0.0, %v2137
        %v2139 = vpop.f32.mrb[0].mxu0
        %2140 = vmatprep.mubr.bf16.mxu0 0
        %2141 = vmatmul.mubr.bf16.gmra.mrb[0].mxu0 %v1795
        %v2142 = vpop.f32.mrb[0].mxu0
        %v2143 = vadd.f32 0.0, %v2142
        %v2144 = vpop.f32.mrb[0].mxu0
        %v2145 = vpop.f32.mrb[0].mxu0
        %v2146 = vadd.f32 0.0, %v2145
        %v2147 = vpop.f32.mrb[0].mxu0
        %2148 = vdwg.mxu0
        %v2149 = vpack.c.bf16 %v1898, %v1895
        %v2150 = vpack.c.bf16 %v1906, %v1903
        %v2151 = vpack.c.bf16 %v1914, %v1911
        %v2152 = vpack.c.bf16 %v1922, %v1919
        %v2153 = vpack.c.bf16 %v1930, %v1927
        %v2154 = vpack.c.bf16 %v1938, %v1935
        %v2155 = vpack.c.bf16 %v1946, %v1943
        %v2156 = vpack.c.bf16 %v1954, %v1951
        %v2157 = vpack.c.bf16 %v1962, %v1959
        %v2158 = vpack.c.bf16 %v1970, %v1967
        %v2159 = vpack.c.bf16 %v1978, %v1975
        %v2160 = vpack.c.bf16 %v1986, %v1983
        %v2161 = vpack.c.bf16 %v1994, %v1991
        %v2162 = vpack.c.bf16 %v2002, %v1999
        %v2163 = vpack.c.bf16 %v2010, %v2007
        %v2164 = vpack.c.bf16 %v2018, %v2015
        %v2165 = vpack.c.bf16 %v2026, %v2023
        %v2166 = vpack.c.bf16 %v2034, %v2031
        %v2167 = vpack.c.bf16 %v2042, %v2039
        %v2168 = vpack.c.bf16 %v2050, %v2047
        %v2169 = vpack.c.bf16 %v2058, %v2055
        %v2170 = vpack.c.bf16 %v2066, %v2063
        %v2171 = vpack.c.bf16 %v2074, %v2071
        %v2172 = vpack.c.bf16 %v2082, %v2079
        %v2173 = vpack.c.bf16 %v2090, %v2087
        %v2174 = vpack.c.bf16 %v2098, %v2095
        %v2175 = vpack.c.bf16 %v2106, %v2103
        %v2176 = vpack.c.bf16 %v2114, %v2111
        %v2177 = vpack.c.bf16 %v2122, %v2119
        %v2178 = vpack.c.bf16 %v2130, %v2127
        %v2179 = vpack.c.bf16 %v2138, %v2135
        %v2180 = vpack.c.bf16 %v2146, %v2143
        %v2181 = vld [vmem:[%s289] sm:$0xf]
        %v2182 = vld [vmem:[%s289 + $0x4] sm:$0xf]
        %v2183 = vld [vmem:[%s289 + $0x8] sm:$0xf]
        %v2184 = vld [vmem:[%s289 + $0xc] sm:$0xf]
        %v2185 = vld [vmem:[%s289 + $0x10] sm:$0xf]
        %v2186 = vld [vmem:[%s289 + $0x14] sm:$0xf]
        %v2187 = vld [vmem:[%s289 + $0x18] sm:$0xf]
        %v2188 = vld [vmem:[%s289 + $0x1c] sm:$0xf]
        %v2189 = vld [vmem:[%s289 + $0x20] sm:$0xf]
        %v2190 = vld [vmem:[%s289 + $0x24] sm:$0xf]
        %v2191 = vld [vmem:[%s289 + $0x28] sm:$0xf]
        %v2192 = vld [vmem:[%s289 + $0x2c] sm:$0xf]
        %v2193 = vld [vmem:[%s289 + $0x30] sm:$0xf]
        %v2194 = vld [vmem:[%s289 + $0x34] sm:$0xf]
        %v2195 = vld [vmem:[%s289 + $0x38] sm:$0xf]
        %v2196 = vld [vmem:[%s289 + $0x3c] sm:$0xf]
        %v2197 = vld [vmem:[%s289 + $0x40] sm:$0xf]
        %v2198 = vld [vmem:[%s289 + $0x44] sm:$0xf]
        %v2199 = vld [vmem:[%s289 + $0x48] sm:$0xf]
        %v2200 = vld [vmem:[%s289 + $0x4c] sm:$0xf]
        %v2201 = vld [vmem:[%s289 + $0x50] sm:$0xf]
        %v2202 = vld [vmem:[%s289 + $0x54] sm:$0xf]
        %v2203 = vld [vmem:[%s289 + $0x58] sm:$0xf]
        %v2204 = vld [vmem:[%s289 + $0x5c] sm:$0xf]
        %v2205 = vld [vmem:[%s289 + $0x60] sm:$0xf]
        %v2206 = vld [vmem:[%s289 + $0x64] sm:$0xf]
        %v2207 = vld [vmem:[%s289 + $0x68] sm:$0xf]
        %v2208 = vld [vmem:[%s289 + $0x6c] sm:$0xf]
        %v2209 = vld [vmem:[%s289 + $0x70] sm:$0xf]
        %v2210 = vld [vmem:[%s289 + $0x74] sm:$0xf]
        %v2211 = vld [vmem:[%s289 + $0x78] sm:$0xf]
        %v2212 = vld [vmem:[%s289 + $0x7c] sm:$0xf]
        %v2213 = vld [vmem:[%s289 + $0x80] sm:$0xf]
        %v2214 = vld [vmem:[%s289 + $0x84] sm:$0xf]
        %v2215 = vld [vmem:[%s289 + $0x88] sm:$0xf]
        %v2216 = vld [vmem:[%s289 + $0x8c] sm:$0xf]
        %v2217 = vld [vmem:[%s289 + $0x90] sm:$0xf]
        %v2218 = vld [vmem:[%s289 + $0x94] sm:$0xf]
        %v2219 = vld [vmem:[%s289 + $0x98] sm:$0xf]
        %v2220 = vld [vmem:[%s289 + $0x9c] sm:$0xf]
        %v2221 = vld [vmem:[%s289 + $0xa0] sm:$0xf]
        %v2222 = vld [vmem:[%s289 + $0xa4] sm:$0xf]
        %v2223 = vld [vmem:[%s289 + $0xa8] sm:$0xf]
        %v2224 = vld [vmem:[%s289 + $0xac] sm:$0xf]
        %v2225 = vld [vmem:[%s289 + $0xb0] sm:$0xf]
        %v2226 = vld [vmem:[%s289 + $0xb4] sm:$0xf]
        %v2227 = vld [vmem:[%s289 + $0xb8] sm:$0xf]
        %v2228 = vld [vmem:[%s289 + $0xbc] sm:$0xf]
        %v2229 = vld [vmem:[%s289 + $0xc0] sm:$0xf]
        %v2230 = vld [vmem:[%s289 + $0xc4] sm:$0xf]
        %v2231 = vld [vmem:[%s289 + $0xc8] sm:$0xf]
        %v2232 = vld [vmem:[%s289 + $0xcc] sm:$0xf]
        %v2233 = vld [vmem:[%s289 + $0xd0] sm:$0xf]
        %v2234 = vld [vmem:[%s289 + $0xd4] sm:$0xf]
        %v2235 = vld [vmem:[%s289 + $0xd8] sm:$0xf]
        %v2236 = vld [vmem:[%s289 + $0xdc] sm:$0xf]
        %v2237 = vld [vmem:[%s289 + $0xe0] sm:$0xf]
        %v2238 = vld [vmem:[%s289 + $0xe4] sm:$0xf]
        %v2239 = vld [vmem:[%s289 + $0xe8] sm:$0xf]
        %v2240 = vld [vmem:[%s289 + $0xec] sm:$0xf]
        %v2241 = vld [vmem:[%s289 + $0xf0] sm:$0xf]
        %v2242 = vld [vmem:[%s289 + $0xf4] sm:$0xf]
        %v2243 = vld [vmem:[%s289 + $0xf8] sm:$0xf]
        %v2244 = vld [vmem:[%s289 + $0xfc] sm:$0xf]
        %v2261 = vunpack.c.l.b16 %v2181
        %v2262 = vunpack.c.l.b16 %v2182
        %v2263 = vunpack.c.l.b16 %v2183
        %v2264 = vunpack.c.l.b16 %v2184
        %v2265 = vunpack.c.l.b16 %v2185
        %v2266 = vunpack.c.l.b16 %v2186
        %v2267 = vunpack.c.l.b16 %v2187
        %v2268 = vunpack.c.l.b16 %v2188
        %v2269 = vunpack.c.l.b16 %v2189
        %v2270 = vunpack.c.l.b16 %v2190
        %v2271 = vunpack.c.l.b16 %v2191
        %v2272 = vunpack.c.l.b16 %v2192
        %v2273 = vunpack.c.l.b16 %v2193
        %v2274 = vunpack.c.l.b16 %v2194
        %v2275 = vunpack.c.l.b16 %v2195
        %v2276 = vunpack.c.l.b16 %v2196
        %v2277 = vpack.c.b16 %v2262, %v2261
        %v2278 = vpack.c.b16 %v2264, %v2263
        %v2279 = vpack.c.b16 %v2266, %v2265
        %v2280 = vpack.c.b16 %v2268, %v2267
        %v2281 = vpack.c.b16 %v2270, %v2269
        %v2282 = vpack.c.b16 %v2272, %v2271
        %v2283 = vpack.c.b16 %v2274, %v2273
        %v2284 = vpack.c.b16 %v2276, %v2275
        %2293 = vmatprep.subr.bf16.mxu0 0
        %2294 = vmatpush1.bf16.msra.mxu0 %v2149
        %2295 = vmatprep.subr.bf16.mxu0 0
        %2296 = vmatpush1.bf16.msra.mxu0 %v2150
        %2297 = vmatprep.subr.bf16.mxu0 0
        %2298 = vmatpush1.bf16.msra.mxu0 %v2151
        %2299 = vmatprep.subr.bf16.mxu0 0
        %2300 = vmatpush1.bf16.msra.mxu0 %v2152
        %2301 = vmatprep.subr.bf16.mxu0 0
        %2302 = vmatpush1.bf16.msra.mxu0 %v2153
        %2303 = vmatprep.subr.bf16.mxu0 0
        %2304 = vmatpush1.bf16.msra.mxu0 %v2154
        %2305 = vmatprep.subr.bf16.mxu0 0
        %2306 = vmatpush1.bf16.msra.mxu0 %v2155
        %2307 = vmatprep.subr.bf16.mxu0 0
        %2308 = vmatpush1.bf16.msra.mxu0 %v2156
        %2309 = vmatprep.subr.bf16.mxu0 0
        %2310 = vmatpush1.bf16.msra.mxu0 0
        %2311 = vmatprep.subr.bf16.mxu0 0
        %2312 = vmatpush1.bf16.msra.mxu0 0
        %2313 = vmatprep.subr.bf16.mxu0 0
        %2314 = vmatpush1.bf16.msra.mxu0 0
        %2315 = vmatprep.subr.bf16.mxu0 0
        %2316 = vmatpush1.bf16.msra.mxu0 0
        %2317 = vmatprep.subr.bf16.mxu0 0
        %2318 = vmatpush1.bf16.msra.mxu0 0
        %2319 = vmatprep.subr.bf16.mxu0 0
        %2320 = vmatpush1.bf16.msra.mxu0 0
        %2321 = vmatprep.subr.bf16.mxu0 0
        %2322 = vmatpush1.bf16.msra.mxu0 0
        %2323 = vmatprep.subr.bf16.mxu0 0
        %2324 = vmatpush1.bf16.msra.mxu0 0
        %2325 = vmatprep.mubr.bf16.mxu0 0
        %2326 = vmatmul.mubr.bf16.gmra.mrb[0].mxu0 %v2277
        %v2327 = vpop.f32.mrb[0].mxu0
        %v2328 = vadd.f32 0.0, %v2327
        %v2329 = vpop.f32.mrb[0].mxu0
        %v2330 = vpop.f32.mrb[0].mxu0
        %v2331 = vadd.f32 0.0, %v2330
        %v2332 = vpop.f32.mrb[0].mxu0
        %2333 = vmatprep.mubr.bf16.mxu0 0
        %2334 = vmatmul.mubr.bf16.gmra.mrb[0].mxu0 %v2278
        %v2335 = vpop.f32.mrb[0].mxu0
        %v2336 = vadd.f32 0.0, %v2335
        %v2337 = vpop.f32.mrb[0].mxu0
        %v2338 = vpop.f32.mrb[0].mxu0
        %v2339 = vadd.f32 0.0, %v2338
        %v2340 = vpop.f32.mrb[0].mxu0
        %2341 = vmatprep.mubr.bf16.mxu0 0
        %2342 = vmatmul.mubr.bf16.gmra.mrb[0].mxu0 %v2279
        %v2343 = vpop.f32.mrb[0].mxu0
        %v2344 = vadd.f32 0.0, %v2343
        %v2345 = vpop.f32.mrb[0].mxu0
        %v2346 = vpop.f32.mrb[0].mxu0
        %v2347 = vadd.f32 0.0, %v2346
        %v2348 = vpop.f32.mrb[0].mxu0
        %2349 = vmatprep.mubr.bf16.mxu0 0
        %2350 = vmatmul.mubr.bf16.gmra.mrb[0].mxu0 %v2280
        %v2351 = vpop.f32.mrb[0].mxu0
        %v2352 = vadd.f32 0.0, %v2351
        %v2353 = vpop.f32.mrb[0].mxu0
        %v2354 = vpop.f32.mrb[0].mxu0
        %v2355 = vadd.f32 0.0, %v2354
        %v2356 = vpop.f32.mrb[0].mxu0
        %2357 = vmatprep.mubr.bf16.mxu0 0
        %2358 = vmatmul.mubr.bf16.gmra.mrb[0].mxu0 %v2281
        %v2359 = vpop.f32.mrb[0].mxu0
        %v2360 = vadd.f32 0.0, %v2359
        %v2361 = vpop.f32.mrb[0].mxu0
        %v2362 = vpop.f32.mrb[0].mxu0
        %v2363 = vadd.f32 0.0, %v2362
        %v2364 = vpop.f32.mrb[0].mxu0
        %2365 = vmatprep.mubr.bf16.mxu0 0
        %2366 = vmatmul.mubr.bf16.gmra.mrb[0].mxu0 %v2282
        %v2367 = vpop.f32.mrb[0].mxu0
        %v2368 = vadd.f32 0.0, %v2367
        %v2369 = vpop.f32.mrb[0].mxu0
        %v2370 = vpop.f32.mrb[0].mxu0
        %v2371 = vadd.f32 0.0, %v2370
        %v2372 = vpop.f32.mrb[0].mxu0
        %2373 = vmatprep.mubr.bf16.mxu0 0
        %2374 = vmatmul.mubr.bf16.gmra.mrb[0].mxu0 %v2283
        %v2375 = vpop.f32.mrb[0].mxu0
        %v2376 = vadd.f32 0.0, %v2375
        %v2377 = vpop.f32.mrb[0].mxu0
        %v2378 = vpop.f32.mrb[0].mxu0
        %v2379 = vadd.f32 0.0, %v2378
        %v2380 = vpop.f32.mrb[0].mxu0
        %2381 = vmatprep.mubr.bf16.mxu0 0
        %2382 = vmatmul.mubr.bf16.gmra.mrb[0].mxu0 %v2284
        %v2383 = vpop.f32.mrb[0].mxu0
        %v2384 = vadd.f32 0.0, %v2383
        %v2385 = vpop.f32.mrb[0].mxu0
        %v2386 = vpop.f32.mrb[0].mxu0
        %v2387 = vadd.f32 0.0, %v2386
        %v2388 = vpop.f32.mrb[0].mxu0
        %2389 = vdwg.mxu0
        %v2406 = vunpack.c.l.b16 %v2197
        %v2407 = vunpack.c.l.b16 %v2198
        %v2408 = vunpack.c.l.b16 %v2199
        %v2409 = vunpack.c.l.b16 %v2200
        %v2410 = vunpack.c.l.b16 %v2201
        %v2411 = vunpack.c.l.b16 %v2202
        %v2412 = vunpack.c.l.b16 %v2203
        %v2413 = vunpack.c.l.b16 %v2204
        %v2414 = vunpack.c.l.b16 %v2205
        %v2415 = vunpack.c.l.b16 %v2206
        %v2416 = vunpack.c.l.b16 %v2207
        %v2417 = vunpack.c.l.b16 %v2208
        %v2418 = vunpack.c.l.b16 %v2209
        %v2419 = vunpack.c.l.b16 %v2210
        %v2420 = vunpack.c.l.b16 %v2211
        %v2421 = vunpack.c.l.b16 %v2212
        %v2422 = vpack.c.b16 %v2407, %v2406
        %v2423 = vpack.c.b16 %v2409, %v2408
        %v2424 = vpack.c.b16 %v2411, %v2410
        %v2425 = vpack.c.b16 %v2413, %v2412
        %v2426 = vpack.c.b16 %v2415, %v2414
        %v2427 = vpack.c.b16 %v2417, %v2416
        %v2428 = vpack.c.b16 %v2419, %v2418
        %v2429 = vpack.c.b16 %v2421, %v2420
        %2438 = vmatprep.subr.bf16.mxu0 0
        %2439 = vmatpush1.bf16.msra.mxu0 %v2157
        %2440 = vmatprep.subr.bf16.mxu0 0
        %2441 = vmatpush1.bf16.msra.mxu0 %v2158
        %2442 = vmatprep.subr.bf16.mxu0 0
        %2443 = vmatpush1.bf16.msra.mxu0 %v2159
        %2444 = vmatprep.subr.bf16.mxu0 0
        %2445 = vmatpush1.bf16.msra.mxu0 %v2160
        %2446 = vmatprep.subr.bf16.mxu0 0
        %2447 = vmatpush1.bf16.msra.mxu0 %v2161
        %2448 = vmatprep.subr.bf16.mxu0 0
        %2449 = vmatpush1.bf16.msra.mxu0 %v2162
        %2450 = vmatprep.subr.bf16.mxu0 0
        %2451 = vmatpush1.bf16.msra.mxu0 %v2163
        %2452 = vmatprep.subr.bf16.mxu0 0
        %2453 = vmatpush1.bf16.msra.mxu0 %v2164
        %2454 = vmatprep.subr.bf16.mxu0 0
        %2455 = vmatpush1.bf16.msra.mxu0 0
        %2456 = vmatprep.subr.bf16.mxu0 0
        %2457 = vmatpush1.bf16.msra.mxu0 0
        %2458 = vmatprep.subr.bf16.mxu0 0
        %2459 = vmatpush1.bf16.msra.mxu0 0
        %2460 = vmatprep.subr.bf16.mxu0 0
        %2461 = vmatpush1.bf16.msra.mxu0 0
        %2462 = vmatprep.subr.bf16.mxu0 0
        %2463 = vmatpush1.bf16.msra.mxu0 0
        %2464 = vmatprep.subr.bf16.mxu0 0
        %2465 = vmatpush1.bf16.msra.mxu0 0
        %2466 = vmatprep.subr.bf16.mxu0 0
        %2467 = vmatpush1.bf16.msra.mxu0 0
        %2468 = vmatprep.subr.bf16.mxu0 0
        %2469 = vmatpush1.bf16.msra.mxu0 0
        %2470 = vmatprep.mubr.bf16.mxu0 0
        %2471 = vmatmul.mubr.bf16.gmra.mrb[0].mxu0 %v2422
        %v2472 = vpop.f32.mrb[0].mxu0
        %v2473 = vadd.f32 0.0, %v2472
        %v2474 = vpop.f32.mrb[0].mxu0
        %v2475 = vpop.f32.mrb[0].mxu0
        %v2476 = vadd.f32 0.0, %v2475
        %v2477 = vpop.f32.mrb[0].mxu0
        %2478 = vmatprep.mubr.bf16.mxu0 0
        %2479 = vmatmul.mubr.bf16.gmra.mrb[0].mxu0 %v2423
        %v2480 = vpop.f32.mrb[0].mxu0
        %v2481 = vadd.f32 0.0, %v2480
        %v2482 = vpop.f32.mrb[0].mxu0
        %v2483 = vpop.f32.mrb[0].mxu0
        %v2484 = vadd.f32 0.0, %v2483
        %v2485 = vpop.f32.mrb[0].mxu0
        %2486 = vmatprep.mubr.bf16.mxu0 0
        %2487 = vmatmul.mubr.bf16.gmra.mrb[0].mxu0 %v2424
        %v2488 = vpop.f32.mrb[0].mxu0
        %v2489 = vadd.f32 0.0, %v2488
        %v2490 = vpop.f32.mrb[0].mxu0
        %v2491 = vpop.f32.mrb[0].mxu0
        %v2492 = vadd.f32 0.0, %v2491
        %v2493 = vpop.f32.mrb[0].mxu0
        %2494 = vmatprep.mubr.bf16.mxu0 0
        %2495 = vmatmul.mubr.bf16.gmra.mrb[0].mxu0 %v2425
        %v2496 = vpop.f32.mrb[0].mxu0
        %v2497 = vadd.f32 0.0, %v2496
        %v2498 = vpop.f32.mrb[0].mxu0
        %v2499 = vpop.f32.mrb[0].mxu0
        %v2500 = vadd.f32 0.0, %v2499
        %v2501 = vpop.f32.mrb[0].mxu0
        %2502 = vmatprep.mubr.bf16.mxu0 0
        %2503 = vmatmul.mubr.bf16.gmra.mrb[0].mxu0 %v2426
        %v2504 = vpop.f32.mrb[0].mxu0
        %v2505 = vadd.f32 0.0, %v2504
        %v2506 = vpop.f32.mrb[0].mxu0
        %v2507 = vpop.f32.mrb[0].mxu0
        %v2508 = vadd.f32 0.0, %v2507
        %v2509 = vpop.f32.mrb[0].mxu0
        %2510 = vmatprep.mubr.bf16.mxu0 0
        %2511 = vmatmul.mubr.bf16.gmra.mrb[0].mxu0 %v2427
        %v2512 = vpop.f32.mrb[0].mxu0
        %v2513 = vadd.f32 0.0, %v2512
        %v2514 = vpop.f32.mrb[0].mxu0
        %v2515 = vpop.f32.mrb[0].mxu0
        %v2516 = vadd.f32 0.0, %v2515
        %v2517 = vpop.f32.mrb[0].mxu0
        %2518 = vmatprep.mubr.bf16.mxu0 0
        %2519 = vmatmul.mubr.bf16.gmra.mrb[0].mxu0 %v2428
        %v2520 = vpop.f32.mrb[0].mxu0
        %v2521 = vadd.f32 0.0, %v2520
        %v2522 = vpop.f32.mrb[0].mxu0
        %v2523 = vpop.f32.mrb[0].mxu0
        %v2524 = vadd.f32 0.0, %v2523
        %v2525 = vpop.f32.mrb[0].mxu0
        %2526 = vmatprep.mubr.bf16.mxu0 0
        %2527 = vmatmul.mubr.bf16.gmra.mrb[0].mxu0 %v2429
        %v2528 = vpop.f32.mrb[0].mxu0
        %v2529 = vadd.f32 0.0, %v2528
        %v2530 = vpop.f32.mrb[0].mxu0
        %v2531 = vpop.f32.mrb[0].mxu0
        %v2532 = vadd.f32 0.0, %v2531
        %v2533 = vpop.f32.mrb[0].mxu0
        %2534 = vdwg.mxu0
        %v2551 = vunpack.c.l.b16 %v2213
        %v2552 = vunpack.c.l.b16 %v2214
        %v2553 = vunpack.c.l.b16 %v2215
        %v2554 = vunpack.c.l.b16 %v2216
        %v2555 = vunpack.c.l.b16 %v2217
        %v2556 = vunpack.c.l.b16 %v2218
        %v2557 = vunpack.c.l.b16 %v2219
        %v2558 = vunpack.c.l.b16 %v2220
        %v2559 = vunpack.c.l.b16 %v2221
        %v2560 = vunpack.c.l.b16 %v2222
        %v2561 = vunpack.c.l.b16 %v2223
        %v2562 = vunpack.c.l.b16 %v2224
        %v2563 = vunpack.c.l.b16 %v2225
        %v2564 = vunpack.c.l.b16 %v2226
        %v2565 = vunpack.c.l.b16 %v2227
        %v2566 = vunpack.c.l.b16 %v2228
        %v2567 = vpack.c.b16 %v2552, %v2551
        %v2568 = vpack.c.b16 %v2554, %v2553
        %v2569 = vpack.c.b16 %v2556, %v2555
        %v2570 = vpack.c.b16 %v2558, %v2557
        %v2571 = vpack.c.b16 %v2560, %v2559
        %v2572 = vpack.c.b16 %v2562, %v2561
        %v2573 = vpack.c.b16 %v2564, %v2563
        %v2574 = vpack.c.b16 %v2566, %v2565
        %2583 = vmatprep.subr.bf16.mxu0 0
        %2584 = vmatpush1.bf16.msra.mxu0 %v2165
        %2585 = vmatprep.subr.bf16.mxu0 0
        %2586 = vmatpush1.bf16.msra.mxu0 %v2166
        %2587 = vmatprep.subr.bf16.mxu0 0
        %2588 = vmatpush1.bf16.msra.mxu0 %v2167
        %2589 = vmatprep.subr.bf16.mxu0 0
        %2590 = vmatpush1.bf16.msra.mxu0 %v2168
        %2591 = vmatprep.subr.bf16.mxu0 0
        %2592 = vmatpush1.bf16.msra.mxu0 %v2169
        %2593 = vmatprep.subr.bf16.mxu0 0
        %2594 = vmatpush1.bf16.msra.mxu0 %v2170
        %2595 = vmatprep.subr.bf16.mxu0 0
        %2596 = vmatpush1.bf16.msra.mxu0 %v2171
        %2597 = vmatprep.subr.bf16.mxu0 0
        %2598 = vmatpush1.bf16.msra.mxu0 %v2172
        %2599 = vmatprep.subr.bf16.mxu0 0
        %2600 = vmatpush1.bf16.msra.mxu0 0
        %2601 = vmatprep.subr.bf16.mxu0 0
        %2602 = vmatpush1.bf16.msra.mxu0 0
        %2603 = vmatprep.subr.bf16.mxu0 0
        %2604 = vmatpush1.bf16.msra.mxu0 0
        %2605 = vmatprep.subr.bf16.mxu0 0
        %2606 = vmatpush1.bf16.msra.mxu0 0
        %2607 = vmatprep.subr.bf16.mxu0 0
        %2608 = vmatpush1.bf16.msra.mxu0 0
        %2609 = vmatprep.subr.bf16.mxu0 0
        %2610 = vmatpush1.bf16.msra.mxu0 0
        %2611 = vmatprep.subr.bf16.mxu0 0
        %2612 = vmatpush1.bf16.msra.mxu0 0
        %2613 = vmatprep.subr.bf16.mxu0 0
        %2614 = vmatpush1.bf16.msra.mxu0 0
        %2615 = vmatprep.mubr.bf16.mxu0 0
        %2616 = vmatmul.mubr.bf16.gmra.mrb[0].mxu0 %v2567
        %v2617 = vpop.f32.mrb[0].mxu0
        %v2618 = vadd.f32 0.0, %v2617
        %v2619 = vpop.f32.mrb[0].mxu0
        %v2620 = vpop.f32.mrb[0].mxu0
        %v2621 = vadd.f32 0.0, %v2620
        %v2622 = vpop.f32.mrb[0].mxu0
        %2623 = vmatprep.mubr.bf16.mxu0 0
        %2624 = vmatmul.mubr.bf16.gmra.mrb[0].mxu0 %v2568
        %v2625 = vpop.f32.mrb[0].mxu0
        %v2626 = vadd.f32 0.0, %v2625
        %v2627 = vpop.f32.mrb[0].mxu0
        %v2628 = vpop.f32.mrb[0].mxu0
        %v2629 = vadd.f32 0.0, %v2628
        %v2630 = vpop.f32.mrb[0].mxu0
        %2631 = vmatprep.mubr.bf16.mxu0 0
        %2632 = vmatmul.mubr.bf16.gmra.mrb[0].mxu0 %v2569
        %v2633 = vpop.f32.mrb[0].mxu0
        %v2634 = vadd.f32 0.0, %v2633
        %v2635 = vpop.f32.mrb[0].mxu0
        %v2636 = vpop.f32.mrb[0].mxu0
        %v2637 = vadd.f32 0.0, %v2636
        %v2638 = vpop.f32.mrb[0].mxu0
        %2639 = vmatprep.mubr.bf16.mxu0 0
        %2640 = vmatmul.mubr.bf16.gmra.mrb[0].mxu0 %v2570
        %v2641 = vpop.f32.mrb[0].mxu0
        %v2642 = vadd.f32 0.0, %v2641
        %v2643 = vpop.f32.mrb[0].mxu0
        %v2644 = vpop.f32.mrb[0].mxu0
        %v2645 = vadd.f32 0.0, %v2644
        %v2646 = vpop.f32.mrb[0].mxu0
        %2647 = vmatprep.mubr.bf16.mxu0 0
        %2648 = vmatmul.mubr.bf16.gmra.mrb[0].mxu0 %v2571
        %v2649 = vpop.f32.mrb[0].mxu0
        %v2650 = vadd.f32 0.0, %v2649
        %v2651 = vpop.f32.mrb[0].mxu0
        %v2652 = vpop.f32.mrb[0].mxu0
        %v2653 = vadd.f32 0.0, %v2652
        %v2654 = vpop.f32.mrb[0].mxu0
        %2655 = vmatprep.mubr.bf16.mxu0 0
        %2656 = vmatmul.mubr.bf16.gmra.mrb[0].mxu0 %v2572
        %v2657 = vpop.f32.mrb[0].mxu0
        %v2658 = vadd.f32 0.0, %v2657
        %v2659 = vpop.f32.mrb[0].mxu0
        %v2660 = vpop.f32.mrb[0].mxu0
        %v2661 = vadd.f32 0.0, %v2660
        %v2662 = vpop.f32.mrb[0].mxu0
        %2663 = vmatprep.mubr.bf16.mxu0 0
        %2664 = vmatmul.mubr.bf16.gmra.mrb[0].mxu0 %v2573
        %v2665 = vpop.f32.mrb[0].mxu0
        %v2666 = vadd.f32 0.0, %v2665
        %v2667 = vpop.f32.mrb[0].mxu0
        %v2668 = vpop.f32.mrb[0].mxu0
        %v2669 = vadd.f32 0.0, %v2668
        %v2670 = vpop.f32.mrb[0].mxu0
        %2671 = vmatprep.mubr.bf16.mxu0 0
        %2672 = vmatmul.mubr.bf16.gmra.mrb[0].mxu0 %v2574
        %v2673 = vpop.f32.mrb[0].mxu0
        %v2674 = vadd.f32 0.0, %v2673
        %v2675 = vpop.f32.mrb[0].mxu0
        %v2676 = vpop.f32.mrb[0].mxu0
        %v2677 = vadd.f32 0.0, %v2676
        %v2678 = vpop.f32.mrb[0].mxu0
        %2679 = vdwg.mxu0
        %v2696 = vunpack.c.l.b16 %v2229
        %v2697 = vunpack.c.l.b16 %v2230
        %v2698 = vunpack.c.l.b16 %v2231
        %v2699 = vunpack.c.l.b16 %v2232
        %v2700 = vunpack.c.l.b16 %v2233
        %v2701 = vunpack.c.l.b16 %v2234
        %v2702 = vunpack.c.l.b16 %v2235
        %v2703 = vunpack.c.l.b16 %v2236
        %v2704 = vunpack.c.l.b16 %v2237
        %v2705 = vunpack.c.l.b16 %v2238
        %v2706 = vunpack.c.l.b16 %v2239
        %v2707 = vunpack.c.l.b16 %v2240
        %v2708 = vunpack.c.l.b16 %v2241
        %v2709 = vunpack.c.l.b16 %v2242
        %v2710 = vunpack.c.l.b16 %v2243
        %v2711 = vunpack.c.l.b16 %v2244
        %v2712 = vpack.c.b16 %v2697, %v2696
        %v2713 = vpack.c.b16 %v2699, %v2698
        %v2714 = vpack.c.b16 %v2701, %v2700
        %v2715 = vpack.c.b16 %v2703, %v2702
        %v2716 = vpack.c.b16 %v2705, %v2704
        %v2717 = vpack.c.b16 %v2707, %v2706
        %v2718 = vpack.c.b16 %v2709, %v2708
        %v2719 = vpack.c.b16 %v2711, %v2710
        %2728 = vmatprep.subr.bf16.mxu0 0
        %2729 = vmatpush1.bf16.msra.mxu0 %v2173
        %2730 = vmatprep.subr.bf16.mxu0 0
        %2731 = vmatpush1.bf16.msra.mxu0 %v2174
        %2732 = vmatprep.subr.bf16.mxu0 0
        %2733 = vmatpush1.bf16.msra.mxu0 %v2175
        %2734 = vmatprep.subr.bf16.mxu0 0
        %2735 = vmatpush1.bf16.msra.mxu0 %v2176
        %2736 = vmatprep.subr.bf16.mxu0 0
        %2737 = vmatpush1.bf16.msra.mxu0 %v2177
        %2738 = vmatprep.subr.bf16.mxu0 0
        %2739 = vmatpush1.bf16.msra.mxu0 %v2178
        %2740 = vmatprep.subr.bf16.mxu0 0
        %2741 = vmatpush1.bf16.msra.mxu0 %v2179
        %2742 = vmatprep.subr.bf16.mxu0 0
        %2743 = vmatpush1.bf16.msra.mxu0 %v2180
        %2744 = vmatprep.subr.bf16.mxu0 0
        %2745 = vmatpush1.bf16.msra.mxu0 0
        %2746 = vmatprep.subr.bf16.mxu0 0
        %2747 = vmatpush1.bf16.msra.mxu0 0
        %2748 = vmatprep.subr.bf16.mxu0 0
        %2749 = vmatpush1.bf16.msra.mxu0 0
        %2750 = vmatprep.subr.bf16.mxu0 0
        %2751 = vmatpush1.bf16.msra.mxu0 0
        %2752 = vmatprep.subr.bf16.mxu0 0
        %2753 = vmatpush1.bf16.msra.mxu0 0
        %2754 = vmatprep.subr.bf16.mxu0 0
        %2755 = vmatpush1.bf16.msra.mxu0 0
        %2756 = vmatprep.subr.bf16.mxu0 0
        %2757 = vmatpush1.bf16.msra.mxu0 0
        %2758 = vmatprep.subr.bf16.mxu0 0
        %2759 = vmatpush1.bf16.msra.mxu0 0
        %2760 = vmatprep.mubr.bf16.mxu0 0
        %2761 = vmatmul.mubr.bf16.gmra.mrb[0].mxu0 %v2712
        %v2762 = vpop.f32.mrb[0].mxu0
        %v2763 = vadd.f32 0.0, %v2762
        %v2764 = vpop.f32.mrb[0].mxu0
        %v2765 = vpop.f32.mrb[0].mxu0
        %v2766 = vadd.f32 0.0, %v2765
        %v2767 = vpop.f32.mrb[0].mxu0
        %2768 = vmatprep.mubr.bf16.mxu0 0
        %2769 = vmatmul.mubr.bf16.gmra.mrb[0].mxu0 %v2713
        %v2770 = vpop.f32.mrb[0].mxu0
        %v2771 = vadd.f32 0.0, %v2770
        %v2772 = vpop.f32.mrb[0].mxu0
        %v2773 = vpop.f32.mrb[0].mxu0
        %v2774 = vadd.f32 0.0, %v2773
        %v2775 = vpop.f32.mrb[0].mxu0
        %2776 = vmatprep.mubr.bf16.mxu0 0
        %2777 = vmatmul.mubr.bf16.gmra.mrb[0].mxu0 %v2714
        %v2778 = vpop.f32.mrb[0].mxu0
        %v2779 = vadd.f32 0.0, %v2778
        %v2780 = vpop.f32.mrb[0].mxu0
        %v2781 = vpop.f32.mrb[0].mxu0
        %v2782 = vadd.f32 0.0, %v2781
        %v2783 = vpop.f32.mrb[0].mxu0
        %2784 = vmatprep.mubr.bf16.mxu0 0
        %2785 = vmatmul.mubr.bf16.gmra.mrb[0].mxu0 %v2715
        %v2786 = vpop.f32.mrb[0].mxu0
        %v2787 = vadd.f32 0.0, %v2786
        %v2788 = vpop.f32.mrb[0].mxu0
        %v2789 = vpop.f32.mrb[0].mxu0
        %v2790 = vadd.f32 0.0, %v2789
        %v2791 = vpop.f32.mrb[0].mxu0
        %2792 = vmatprep.mubr.bf16.mxu0 0
        %2793 = vmatmul.mubr.bf16.gmra.mrb[0].mxu0 %v2716
        %v2794 = vpop.f32.mrb[0].mxu0
        %v2795 = vadd.f32 0.0, %v2794
        %v2796 = vpop.f32.mrb[0].mxu0
        %v2797 = vpop.f32.mrb[0].mxu0
        %v2798 = vadd.f32 0.0, %v2797
        %v2799 = vpop.f32.mrb[0].mxu0
        %2800 = vmatprep.mubr.bf16.mxu0 0
        %2801 = vmatmul.mubr.bf16.gmra.mrb[0].mxu0 %v2717
        %v2802 = vpop.f32.mrb[0].mxu0
        %v2803 = vadd.f32 0.0, %v2802
        %v2804 = vpop.f32.mrb[0].mxu0
        %v2805 = vpop.f32.mrb[0].mxu0
        %v2806 = vadd.f32 0.0, %v2805
        %v2807 = vpop.f32.mrb[0].mxu0
        %2808 = vmatprep.mubr.bf16.mxu0 0
        %2809 = vmatmul.mubr.bf16.gmra.mrb[0].mxu0 %v2718
        %v2810 = vpop.f32.mrb[0].mxu0
        %v2811 = vadd.f32 0.0, %v2810
        %v2812 = vpop.f32.mrb[0].mxu0
        %v2813 = vpop.f32.mrb[0].mxu0
        %v2814 = vadd.f32 0.0, %v2813
        %v2815 = vpop.f32.mrb[0].mxu0
        %2816 = vmatprep.mubr.bf16.mxu0 0
        %2817 = vmatmul.mubr.bf16.gmra.mrb[0].mxu0 %v2719
        %v2818 = vpop.f32.mrb[0].mxu0
        %v2819 = vadd.f32 0.0, %v2818
        %v2820 = vpop.f32.mrb[0].mxu0
        %v2821 = vpop.f32.mrb[0].mxu0
        %v2822 = vadd.f32 0.0, %v2821
        %v2823 = vpop.f32.mrb[0].mxu0
        %2824 = vdwg.mxu0
        %v2825 = vld [vmem:[%s5] sm:$0x1]
        %v2827 = vlaneseq
        %v2828 = vshrl.u32 %v2827, 7
        %v2829 = vsub.s32 0, %v2828
        %v2830 = vrot.slane %v2825, %v2829
        %v2832 = vadd.f32 %v2328, %v2830
        %v2833 = vadd.f32 %v2331, %v2830
        %v2834 = vadd.f32 %v2336, %v2830
        %v2835 = vadd.f32 %v2339, %v2830
        %v2836 = vadd.f32 %v2344, %v2830
        %v2837 = vadd.f32 %v2347, %v2830
        %v2838 = vadd.f32 %v2352, %v2830
        %v2839 = vadd.f32 %v2355, %v2830
        %v2840 = vadd.f32 %v2360, %v2830
        %v2841 = vadd.f32 %v2363, %v2830
        %v2842 = vadd.f32 %v2368, %v2830
        %v2843 = vadd.f32 %v2371, %v2830
        %v2844 = vadd.f32 %v2376, %v2830
        %v2845 = vadd.f32 %v2379, %v2830
        %v2846 = vadd.f32 %v2384, %v2830
        %v2847 = vadd.f32 %v2387, %v2830
        %v2848 = vadd.f32 %v2473, %v2830
        %v2849 = vadd.f32 %v2476, %v2830
        %v2850 = vadd.f32 %v2481, %v2830
        %v2851 = vadd.f32 %v2484, %v2830
        %v2852 = vadd.f32 %v2489, %v2830
        %v2853 = vadd.f32 %v2492, %v2830
        %v2854 = vadd.f32 %v2497, %v2830
        %v2855 = vadd.f32 %v2500, %v2830
        %v2856 = vadd.f32 %v2505, %v2830
        %v2857 = vadd.f32 %v2508, %v2830
        %v2858 = vadd.f32 %v2513, %v2830
        %v2859 = vadd.f32 %v2516, %v2830
        %v2860 = vadd.f32 %v2521, %v2830
        %v2861 = vadd.f32 %v2524, %v2830
        %v2862 = vadd.f32 %v2529, %v2830
        %v2863 = vadd.f32 %v2532, %v2830
        %v2864 = vadd.f32 %v2618, %v2830
        %v2865 = vadd.f32 %v2621, %v2830
        %v2866 = vadd.f32 %v2626, %v2830
        %v2867 = vadd.f32 %v2629, %v2830
        %v2868 = vadd.f32 %v2634, %v2830
        %v2869 = vadd.f32 %v2637, %v2830
        %v2870 = vadd.f32 %v2642, %v2830
        %v2871 = vadd.f32 %v2645, %v2830
        %v2872 = vadd.f32 %v2650, %v2830
        %v2873 = vadd.f32 %v2653, %v2830
        %v2874 = vadd.f32 %v2658, %v2830
        %v2875 = vadd.f32 %v2661, %v2830
        %v2876 = vadd.f32 %v2666, %v2830
        %v2877 = vadd.f32 %v2669, %v2830
        %v2878 = vadd.f32 %v2674, %v2830
        %v2879 = vadd.f32 %v2677, %v2830
        %v2880 = vadd.f32 %v2763, %v2830
        %v2881 = vadd.f32 %v2766, %v2830
        %v2882 = vadd.f32 %v2771, %v2830
        %v2883 = vadd.f32 %v2774, %v2830
        %v2884 = vadd.f32 %v2779, %v2830
        %v2885 = vadd.f32 %v2782, %v2830
        %v2886 = vadd.f32 %v2787, %v2830
        %v2887 = vadd.f32 %v2790, %v2830
        %v2888 = vadd.f32 %v2795, %v2830
        %v2889 = vadd.f32 %v2798, %v2830
        %v2890 = vadd.f32 %v2803, %v2830
        %v2891 = vadd.f32 %v2806, %v2830
        %v2892 = vadd.f32 %v2811, %v2830
        %v2893 = vadd.f32 %v2814, %v2830
        %v2894 = vadd.f32 %v2819, %v2830
        %v2895 = vadd.f32 %v2822, %v2830
        %v2896 = vpack.c.bf16 %v2833, %v2832
        %v2897 = vpack.c.bf16 %v2835, %v2834
        %v2898 = vpack.c.bf16 %v2837, %v2836
        %v2899 = vpack.c.bf16 %v2839, %v2838
        %v2900 = vpack.c.bf16 %v2841, %v2840
        %v2901 = vpack.c.bf16 %v2843, %v2842
        %v2902 = vpack.c.bf16 %v2845, %v2844
        %v2903 = vpack.c.bf16 %v2847, %v2846
        %v2904 = vpack.c.bf16 %v2849, %v2848
        %v2905 = vpack.c.bf16 %v2851, %v2850
        %v2906 = vpack.c.bf16 %v2853, %v2852
        %v2907 = vpack.c.bf16 %v2855, %v2854
        %v2908 = vpack.c.bf16 %v2857, %v2856
        %v2909 = vpack.c.bf16 %v2859, %v2858
        %v2910 = vpack.c.bf16 %v2861, %v2860
        %v2911 = vpack.c.bf16 %v2863, %v2862
        %v2912 = vpack.c.bf16 %v2865, %v2864
        %v2913 = vpack.c.bf16 %v2867, %v2866
        %v2914 = vpack.c.bf16 %v2869, %v2868
        %v2915 = vpack.c.bf16 %v2871, %v2870
        %v2916 = vpack.c.bf16 %v2873, %v2872
        %v2917 = vpack.c.bf16 %v2875, %v2874
        %v2918 = vpack.c.bf16 %v2877, %v2876
        %v2919 = vpack.c.bf16 %v2879, %v2878
        %v2920 = vpack.c.bf16 %v2881, %v2880
        %v2921 = vpack.c.bf16 %v2883, %v2882
        %v2922 = vpack.c.bf16 %v2885, %v2884
        %v2923 = vpack.c.bf16 %v2887, %v2886
        %v2924 = vpack.c.bf16 %v2889, %v2888
        %v2925 = vpack.c.bf16 %v2891, %v2890
        %v2926 = vpack.c.bf16 %v2893, %v2892
        %v2927 = vpack.c.bf16 %v2895, %v2894
        %v2960 = vunpack.c.l.b16 %v2896
        %v2961 = vunpack.c.h.b16 %v2896
        %v2962 = vunpack.c.l.b16 %v2897
        %v2963 = vunpack.c.h.b16 %v2897
        %v2964 = vunpack.c.l.b16 %v2898
        %v2965 = vunpack.c.h.b16 %v2898
        %v2966 = vunpack.c.l.b16 %v2899
        %v2967 = vunpack.c.h.b16 %v2899
        %v2968 = vunpack.c.l.b16 %v2900
        %v2969 = vunpack.c.h.b16 %v2900
        %v2970 = vunpack.c.l.b16 %v2901
        %v2971 = vunpack.c.h.b16 %v2901
        %v2972 = vunpack.c.l.b16 %v2902
        %v2973 = vunpack.c.h.b16 %v2902
        %v2974 = vunpack.c.l.b16 %v2903
        %v2975 = vunpack.c.h.b16 %v2903
        %v2976 = vunpack.c.l.b16 %v2904
        %v2977 = vunpack.c.h.b16 %v2904
        %v2978 = vunpack.c.l.b16 %v2905
        %v2979 = vunpack.c.h.b16 %v2905
        %v2980 = vunpack.c.l.b16 %v2906
        %v2981 = vunpack.c.h.b16 %v2906
        %v2982 = vunpack.c.l.b16 %v2907
        %v2983 = vunpack.c.h.b16 %v2907
        %v2984 = vunpack.c.l.b16 %v2908
        %v2985 = vunpack.c.h.b16 %v2908
        %v2986 = vunpack.c.l.b16 %v2909
        %v2987 = vunpack.c.h.b16 %v2909
        %v2988 = vunpack.c.l.b16 %v2910
        %v2989 = vunpack.c.h.b16 %v2910
        %v2990 = vunpack.c.l.b16 %v2911
        %v2991 = vunpack.c.h.b16 %v2911
        %v2992 = vunpack.c.l.b16 %v2912
        %v2993 = vunpack.c.h.b16 %v2912
        %v2994 = vunpack.c.l.b16 %v2913
        %v2995 = vunpack.c.h.b16 %v2913
        %v2996 = vunpack.c.l.b16 %v2914
        %v2997 = vunpack.c.h.b16 %v2914
        %v2998 = vunpack.c.l.b16 %v2915
        %v2999 = vunpack.c.h.b16 %v2915
        %v3000 = vunpack.c.l.b16 %v2916
        %v3001 = vunpack.c.h.b16 %v2916
        %v3002 = vunpack.c.l.b16 %v2917
        %v3003 = vunpack.c.h.b16 %v2917
        %v3004 = vunpack.c.l.b16 %v2918
        %v3005 = vunpack.c.h.b16 %v2918
        %v3006 = vunpack.c.l.b16 %v2919
        %v3007 = vunpack.c.h.b16 %v2919
        %v3008 = vunpack.c.l.b16 %v2920
        %v3009 = vunpack.c.h.b16 %v2920
        %v3010 = vunpack.c.l.b16 %v2921
        %v3011 = vunpack.c.h.b16 %v2921
        %v3012 = vunpack.c.l.b16 %v2922
        %v3013 = vunpack.c.h.b16 %v2922
        %v3014 = vunpack.c.l.b16 %v2923
        %v3015 = vunpack.c.h.b16 %v2923
        %v3016 = vunpack.c.l.b16 %v2924
        %v3017 = vunpack.c.h.b16 %v2924
        %v3018 = vunpack.c.l.b16 %v2925
        %v3019 = vunpack.c.h.b16 %v2925
        %v3020 = vunpack.c.l.b16 %v2926
        %v3021 = vunpack.c.h.b16 %v2926
        %v3022 = vunpack.c.l.b16 %v2927
        %v3023 = vunpack.c.h.b16 %v2927
        %v3024 = vpack.c.b16 %v2960, %v2960
        %v3025 = vpack.c.b16 %v2961, %v2961
        %v3026 = vpack.c.b16 %v2962, %v2962
        %v3027 = vpack.c.b16 %v2963, %v2963
        %v3028 = vpack.c.b16 %v2964, %v2964
        %v3029 = vpack.c.b16 %v2965, %v2965
        %v3030 = vpack.c.b16 %v2966, %v2966
        %v3031 = vpack.c.b16 %v2967, %v2967
        %v3032 = vpack.c.b16 %v2968, %v2968
        %v3033 = vpack.c.b16 %v2969, %v2969
        %v3034 = vpack.c.b16 %v2970, %v2970
        %v3035 = vpack.c.b16 %v2971, %v2971
        %v3036 = vpack.c.b16 %v2972, %v2972
        %v3037 = vpack.c.b16 %v2973, %v2973
        %v3038 = vpack.c.b16 %v2974, %v2974
        %v3039 = vpack.c.b16 %v2975, %v2975
        %v3040 = vpack.c.b16 %v2976, %v2976
        %v3041 = vpack.c.b16 %v2977, %v2977
        %v3042 = vpack.c.b16 %v2978, %v2978
        %v3043 = vpack.c.b16 %v2979, %v2979
        %v3044 = vpack.c.b16 %v2980, %v2980
        %v3045 = vpack.c.b16 %v2981, %v2981
        %v3046 = vpack.c.b16 %v2982, %v2982
        %v3047 = vpack.c.b16 %v2983, %v2983
        %v3048 = vpack.c.b16 %v2984, %v2984
        %v3049 = vpack.c.b16 %v2985, %v2985
        %v3050 = vpack.c.b16 %v2986, %v2986
        %v3051 = vpack.c.b16 %v2987, %v2987
        %v3052 = vpack.c.b16 %v2988, %v2988
        %v3053 = vpack.c.b16 %v2989, %v2989
        %v3054 = vpack.c.b16 %v2990, %v2990
        %v3055 = vpack.c.b16 %v2991, %v2991
        %v3056 = vpack.c.b16 %v2992, %v2992
        %v3057 = vpack.c.b16 %v2993, %v2993
        %v3058 = vpack.c.b16 %v2994, %v2994
        %v3059 = vpack.c.b16 %v2995, %v2995
        %v3060 = vpack.c.b16 %v2996, %v2996
        %v3061 = vpack.c.b16 %v2997, %v2997
        %v3062 = vpack.c.b16 %v2998, %v2998
        %v3063 = vpack.c.b16 %v2999, %v2999
        %v3064 = vpack.c.b16 %v3000, %v3000
        %v3065 = vpack.c.b16 %v3001, %v3001
        %v3066 = vpack.c.b16 %v3002, %v3002
        %v3067 = vpack.c.b16 %v3003, %v3003
        %v3068 = vpack.c.b16 %v3004, %v3004
        %v3069 = vpack.c.b16 %v3005, %v3005
        %v3070 = vpack.c.b16 %v3006, %v3006
        %v3071 = vpack.c.b16 %v3007, %v3007
        %v3072 = vpack.c.b16 %v3008, %v3008
        %v3073 = vpack.c.b16 %v3009, %v3009
        %v3074 = vpack.c.b16 %v3010, %v3010
        %v3075 = vpack.c.b16 %v3011, %v3011
        %v3076 = vpack.c.b16 %v3012, %v3012
        %v3077 = vpack.c.b16 %v3013, %v3013
        %v3078 = vpack.c.b16 %v3014, %v3014
        %v3079 = vpack.c.b16 %v3015, %v3015
        %v3080 = vpack.c.b16 %v3016, %v3016
        %v3081 = vpack.c.b16 %v3017, %v3017
        %v3082 = vpack.c.b16 %v3018, %v3018
        %v3083 = vpack.c.b16 %v3019, %v3019
        %v3084 = vpack.c.b16 %v3020, %v3020
        %v3085 = vpack.c.b16 %v3021, %v3021
        %v3086 = vpack.c.b16 %v3022, %v3022
        %v3087 = vpack.c.b16 %v3023, %v3023
        %3152 = vst [vmem:[%s339] sm:$0xf] %v3024
        %3153 = vst [vmem:[%s339 + $0x4] sm:$0xf] %v3025
        %3154 = vst [vmem:[%s339 + $0x8] sm:$0xf] %v3026
        %3155 = vst [vmem:[%s339 + $0xc] sm:$0xf] %v3027
        %3156 = vst [vmem:[%s339 + $0x10] sm:$0xf] %v3028
        %3157 = vst [vmem:[%s339 + $0x14] sm:$0xf] %v3029
        %3158 = vst [vmem:[%s339 + $0x18] sm:$0xf] %v3030
        %3159 = vst [vmem:[%s339 + $0x1c] sm:$0xf] %v3031
        %3160 = vst [vmem:[%s339 + $0x20] sm:$0xf] %v3032
        %3161 = vst [vmem:[%s339 + $0x24] sm:$0xf] %v3033
        %3162 = vst [vmem:[%s339 + $0x28] sm:$0xf] %v3034
        %3163 = vst [vmem:[%s339 + $0x2c] sm:$0xf] %v3035
        %3164 = vst [vmem:[%s339 + $0x30] sm:$0xf] %v3036
        %3165 = vst [vmem:[%s339 + $0x34] sm:$0xf] %v3037
        %3166 = vst [vmem:[%s339 + $0x38] sm:$0xf] %v3038
        %3167 = vst [vmem:[%s339 + $0x3c] sm:$0xf] %v3039
        %3168 = vst [vmem:[%s339 + $0x40] sm:$0xf] %v3040
        %3169 = vst [vmem:[%s339 + $0x44] sm:$0xf] %v3041
        %3170 = vst [vmem:[%s339 + $0x48] sm:$0xf] %v3042
        %3171 = vst [vmem:[%s339 + $0x4c] sm:$0xf] %v3043
        %3172 = vst [vmem:[%s339 + $0x50] sm:$0xf] %v3044
        %3173 = vst [vmem:[%s339 + $0x54] sm:$0xf] %v3045
        %3174 = vst [vmem:[%s339 + $0x58] sm:$0xf] %v3046
        %3175 = vst [vmem:[%s339 + $0x5c] sm:$0xf] %v3047
        %3176 = vst [vmem:[%s339 + $0x60] sm:$0xf] %v3048
        %3177 = vst [vmem:[%s339 + $0x64] sm:$0xf] %v3049
        %3178 = vst [vmem:[%s339 + $0x68] sm:$0xf] %v3050
        %3179 = vst [vmem:[%s339 + $0x6c] sm:$0xf] %v3051
        %3180 = vst [vmem:[%s339 + $0x70] sm:$0xf] %v3052
        %3181 = vst [vmem:[%s339 + $0x74] sm:$0xf] %v3053
        %3182 = vst [vmem:[%s339 + $0x78] sm:$0xf] %v3054
        %3183 = vst [vmem:[%s339 + $0x7c] sm:$0xf] %v3055
        %3184 = vst [vmem:[%s339 + $0x80] sm:$0xf] %v3056
        %3185 = vst [vmem:[%s339 + $0x84] sm:$0xf] %v3057
        %3186 = vst [vmem:[%s339 + $0x88] sm:$0xf] %v3058
        %3187 = vst [vmem:[%s339 + $0x8c] sm:$0xf] %v3059
        %3188 = vst [vmem:[%s339 + $0x90] sm:$0xf] %v3060
        %3189 = vst [vmem:[%s339 + $0x94] sm:$0xf] %v3061
        %3190 = vst [vmem:[%s339 + $0x98] sm:$0xf] %v3062
        %3191 = vst [vmem:[%s339 + $0x9c] sm:$0xf] %v3063
        %3192 = vst [vmem:[%s339 + $0xa0] sm:$0xf] %v3064
        %3193 = vst [vmem:[%s339 + $0xa4] sm:$0xf] %v3065
        %3194 = vst [vmem:[%s339 + $0xa8] sm:$0xf] %v3066
        %3195 = vst [vmem:[%s339 + $0xac] sm:$0xf] %v3067
        %3196 = vst [vmem:[%s339 + $0xb0] sm:$0xf] %v3068
        %3197 = vst [vmem:[%s339 + $0xb4] sm:$0xf] %v3069
        %3198 = vst [vmem:[%s339 + $0xb8] sm:$0xf] %v3070
        %3199 = vst [vmem:[%s339 + $0xbc] sm:$0xf] %v3071
        %3200 = vst [vmem:[%s339 + $0xc0] sm:$0xf] %v3072
        %3201 = vst [vmem:[%s339 + $0xc4] sm:$0xf] %v3073
        %3202 = vst [vmem:[%s339 + $0xc8] sm:$0xf] %v3074
        %3203 = vst [vmem:[%s339 + $0xcc] sm:$0xf] %v3075
        %3204 = vst [vmem:[%s339 + $0xd0] sm:$0xf] %v3076
        %3205 = vst [vmem:[%s339 + $0xd4] sm:$0xf] %v3077
        %3206 = vst [vmem:[%s339 + $0xd8] sm:$0xf] %v3078
        %3207 = vst [vmem:[%s339 + $0xdc] sm:$0xf] %v3079
        %3208 = vst [vmem:[%s339 + $0xe0] sm:$0xf] %v3080
        %3209 = vst [vmem:[%s339 + $0xe4] sm:$0xf] %v3081
        %3210 = vst [vmem:[%s339 + $0xe8] sm:$0xf] %v3082
        %3211 = vst [vmem:[%s339 + $0xec] sm:$0xf] %v3083
        %3212 = vst [vmem:[%s339 + $0xf0] sm:$0xf] %v3084
        %3213 = vst [vmem:[%s339 + $0xf4] sm:$0xf] %v3085
        %3214 = vst [vmem:[%s339 + $0xf8] sm:$0xf] %v3086
        %3215 = vst [vmem:[%s339 + $0xfc] sm:$0xf] %v3087
        %s3216 = sand.u32 %s171, 1
        %s3217 = scalar_lea.sflag [#allocation4], %s3216
        %s3218 = sand.u32 %s171, 1
        %s3219 = smul.addr %s3218, 256
        %s3220 = scalar_lea.vmem [#allocation10], %s3219
        // Predicated region
        $region61: #{tpu_custom_call.1} parent=43 // pred_check
          %p3221 = pneg %p181
        $region62: #{tpu_custom_call.1} parent=43 // pred_check_branch
          %3223 = sbr.rel (%p3221) target = $region64
        $region63: #{tpu_custom_call.1} parent=43 // pred_region
          %s3224 = smul.u32 64, %s27
          %s3226 = ssub.s32 4096, 4096
          %3227 = vsyncadd %s3217, %s3226
          %s3228 = smul.addr %s3224, 64
          %s3229 = scalar_lea.hbm %s6, %s3228
          %s3230 = sshll.u32 %s3220, 4
          %s3231 = int_to_ptr.vmem [resolvable:$true] %s3230
          %3236 = dma.vmem_to_hbm [thread:$0]  %s3231, 4096, %s3229, %s3217, 64, 64, 4
        $region64: #{tpu_custom_call.1} parent=43 // pred_fallthru
          _
      $region44: #{tpu_custom_call.1} parent=5 // pred_fallthru
        _
      %p3237 = scmp.le.s32.totalorder 2, %s22
      // Predicated region
      $region65: #{tpu_custom_call.1} parent=5 // pred_check
        %p3238 = pneg %p3237
      $region66: #{tpu_custom_call.1} parent=5 // pred_check_branch
        %3240 = sbr.rel (%p3238) target = $region68
      $region67: #{tpu_custom_call.1} parent=5 // pred_region
        %s3241 = ssub.s32 %s22, 2
        // Predicated region
        $region69: #{tpu_custom_call.1} parent=67 // pred_check
          %p3242 = pneg %p187
        $region70: #{tpu_custom_call.1} parent=67 // pred_check_branch
          %3244 = sbr.rel (%p3242) target = $region72
        $region71: #{tpu_custom_call.1} parent=67 // pred_region
          %s3245 = sand.u32 %s172, 1
          %s3246 = scalar_lea.sflag [#allocation4], %s3245
          %s3247 = sand.u32 %s172, 1
          %s3248 = smul.addr %s3247, 256
          %s3249 = scalar_lea.vmem [#allocation10], %s3248
          %3250 = dma.done %s3246, 4096
        $region72: #{tpu_custom_call.1} parent=67 // pred_fallthru
          _
      $region68: #{tpu_custom_call.1} parent=5 // pred_fallthru
        _
    $region6: #{tpu_custom_call.1} parent=1 // loop_footer
      %s26 = sadd.s32 1, %s22
    $region7: #{tpu_custom_call.1} parent=1 // loop_footer_branch
      %21 = sbr.rel target = $region3
    $region8: #{tpu_custom_call.1} parent=1 // loop_exit
      _
    %3251 = vsyncpa [#allocation3], 1
    %s3252 = scalar_lea.sflag [#allocation3], 1
    %3253 = vsyncpa %s3252, 1
    %3254 = vsyncpa [#allocation6], 1
    %s3255 = scalar_lea.sflag [#allocation6], 1
    %3256 = vsyncpa %s3255, 1
    %3257 = vsyncpa [#allocation9], 1
    %3258 = vsyncpa [#allocation4], 1
    %s3259 = scalar_lea.sflag [#allocation4], 1
    %3260 = vsyncpa %s3259, 1

</llo_original>
